<compile_context>
chip_gen: v5e
topology: v5e:2x2
jax: 0.10.0
libtpu: 0.0.40
codegen_flags: <defaults>
</compile_context>

<pallas_src>
import math

import jax
import jax.numpy as jnp
from jax import lax
from jax.experimental import pallas as pl
from jax.experimental.pallas import tpu as pltpu

# ---- model hyper-params (from model_7.__init__) -----------------------------
IN_DIM = 6            # linear stack input
LIN_HIDDEN = 12 * 3   # 36
LIN_OUT = 8           # linear stack output == GRU input size
GRU_HIDDEN = 24       # H
NUM_LAYERS = 3
FC_OUT = 6            # fc: Linear(48, 6)


def _vmem_specs(n):
    return [pl.BlockSpec(memory_space=pltpu.MemorySpace.VMEM) for _ in range(n)]


# ---------------------------------------------------------------------------
# parameter assembly: fuse gates + directions once at init time (not in-kernel)
#   column layout of the 6H=144-wide fused projections:
#     [ r_fwd(0:24) r_rev(24:48) z_fwd(48:72) z_rev(72:96) n_fwd(96:120) n_rev(120:144) ]
#   Wh is block-diagonal over directions: rows 0:24 = h_fwd weights, rows 24:48 = h_rev.
# ---------------------------------------------------------------------------
def _assemble_bidir(fwd, rev):
    H = GRU_HIDDEN

    def interleave(a_f, a_r):          # (..., 3H) x2 -> (..., 6H), per-gate [fwd | rev]
        parts = []
        for g in range(3):
            parts.append(a_f[..., g * H:(g + 1) * H])
            parts.append(a_r[..., g * H:(g + 1) * H])
        return jnp.concatenate(parts, axis=-1)

    wi = interleave(fwd["w_ih"], rev["w_ih"])          # (I, 6H)
    bi = interleave(fwd["b_ih"], rev["b_ih"])          # (1, 6H)
    bh = interleave(fwd["b_hh"], rev["b_hh"])          # (1, 6H)
    wh = jnp.zeros((2 * H, 6 * H), jnp.float32)        # block-diag over directions
    for g in range(3):
        wh = wh.at[0:H, (2 * g) * H:(2 * g + 1) * H].set(fwd["w_hh"][:, g * H:(g + 1) * H])
        wh = wh.at[H:2 * H, (2 * g + 1) * H:(2 * g + 2) * H].set(rev["w_hh"][:, g * H:(g + 1) * H])
    return {"wi": wi, "bi": bi, "wh": wh, "bh": bh}


def _uniform(key, shape, scale):
    return jax.random.uniform(key, shape, jnp.float32, -scale, scale)


def init_params(key):
    ki = iter(jax.random.split(key, 64))
    s_in, s_hid = 1.0 / math.sqrt(IN_DIM), 1.0 / math.sqrt(LIN_HIDDEN)
    lin = {
        "w1": _uniform(next(ki), (IN_DIM, LIN_HIDDEN), s_in),
        "b1": _uniform(next(ki), (1, LIN_HIDDEN), s_in),
        "w2": _uniform(next(ki), (LIN_HIDDEN, LIN_HIDDEN), s_hid),
        "b2": _uniform(next(ki), (1, LIN_HIDDEN), s_hid),
        "w3": _uniform(next(ki), (LIN_HIDDEN, LIN_OUT), s_hid),
        "b3": _uniform(next(ki), (1, LIN_OUT), s_hid),
    }
    gru = []
    sc = 1.0 / math.sqrt(GRU_HIDDEN)
    for l in range(NUM_LAYERS):
        in_dim = LIN_OUT if l == 0 else 2 * GRU_HIDDEN
        dirs = []
        for _ in range(2):             # forward / reverse
            dirs.append({
                "w_ih": _uniform(next(ki), (in_dim, 3 * GRU_HIDDEN), sc),
                "w_hh": _uniform(next(ki), (GRU_HIDDEN, 3 * GRU_HIDDEN), sc),
                "b_ih": _uniform(next(ki), (1, 3 * GRU_HIDDEN), sc),
                "b_hh": _uniform(next(ki), (1, 3 * GRU_HIDDEN), sc),
            })
        gru.append(_assemble_bidir(dirs[0], dirs[1]))
    s_fc = 1.0 / math.sqrt(2 * GRU_HIDDEN)
    fc = {"w": _uniform(next(ki), (2 * GRU_HIDDEN, FC_OUT), s_fc),
          "b": _uniform(next(ki), (1, FC_OUT), s_fc)}
    return {"lin": lin, "gru": gru, "fc": fc}


# ---------------------------------------------------------------------------
# forward pass: ONE fused Pallas kernel (mirrors model_7.forward)
# ---------------------------------------------------------------------------
def model7_forward(x, target, weight, params):
    B, T, _ = x.shape
    H = GRU_HIDDEN
    f32 = jnp.float32

    # TODO(synk): torch casts giw_vel to float64; TPU kernel keeps float32.
    x6 = jnp.transpose(x[:, :, :6], (1, 0, 2)).reshape(T * B, IN_DIM)
    vel = jnp.transpose(x[:, :, 6:9], (1, 0, 2)).reshape(T * B, 3).astype(f32)
    tgt = jnp.transpose(target, (2, 0, 1)).reshape(T * B, 3)
    wt = jnp.transpose(weight, (1, 0)).reshape(T * B, 1)

    lin, gru, fc = params["lin"], params["gru"], params["fc"]

    def kernel(x_ref, tgt_ref, vel_ref, wt_ref,
               lw1, lb1, lw2, lb2, lw3, lb3,
               wi0, bi0, wh0, bh0,
               wi1, bi1, wh1, bh1,
               wi2, bi2, wh2, bh2,
               fcw, fcb,
               pred_ref, loss_ref, loss1_ref, loss2_ref):
        # ---- linear stack prologue (one batched matmul chain over all T*B rows) ----
        h = jnp.maximum(jnp.dot(x_ref[...], lw1[...], preferred_element_type=f32) + lb1[...], 0.0)
        h = jnp.maximum(jnp.dot(h, lw2[...], preferred_element_type=f32) + lb2[...], 0.0)
        feat = jnp.dot(h, lw3[...], preferred_element_type=f32) + lb3[...]      # (T*B, 8)
        # TODO(synk): self.dp Dropout(p=0.1) applied as identity (inference mode).

        # forward-direction column mask for the fused [gate x direction] layout
        fwd_mask = (lax.broadcasted_iota(jnp.int32, (B, 6 * H), 1) % (2 * H)) < H

        def gru_layer(inp, wi_ref, bi_ref, wh_ref, bh_ref):
            # hoisted input projection for all gates / both directions (one big matmul)
            xp = jnp.dot(inp, wi_ref[...], preferred_element_type=f32) + bi_ref[...]  # (T*B, 6H)
            wh = wh_ref[...]                                        # (2H, 6H) block-diag
            bh = jnp.broadcast_to(bh_ref[...], (B, 6 * H))          # hoisted bias broadcast
            hstate = jnp.zeros((B, 2 * H), f32)                     # [h_fwd | h_rev]
            fwd_outs = [None] * T
            rev_outs = [None] * T
            for t in range(T):                                      # fully unrolled recurrence
                xf = xp[t * B:(t + 1) * B, :]                       # forward stream @ t
                xr = xp[(T - 1 - t) * B:(T - t) * B, :]             # reverse stream @ T-1-t
                xstep = jnp.where(fwd_mask, xf, xr)                 # (B, 6H)
                # single hidden matmul per step for both directions / all gates
                hp = jnp.dot(hstate, wh, preferred_element_type=f32) + bh
                r = jax.nn.sigmoid(xstep[:, 0:2 * H] + hp[:, 0:2 * H])
                z = jax.nn.sigmoid(xstep[:, 2 * H:4 * H] + hp[:, 2 * H:4 * H])
                n = jnp.tanh(xstep[:, 4 * H:6 * H] + r * hp[:, 4 * H:6 * H])
                hstate = (1.0 - z) * n + z * hstate                 # (B, 2H)
                fwd_outs[t] = hstate[:, 0:H]
                rev_outs[T - 1 - t] = hstate[:, H:2 * H]
            # reassemble time-major (T*B, 2H) output [fwd | rev] per original timestep
            return jnp.concatenate(
                [jnp.concatenate([fwd_outs[i], rev_outs[i]], axis=1) for i in range(T)],
                axis=0)

        rnn = gru_layer(feat, wi0, bi0, wh0, bh0)
        # TODO(synk): GRU inter-layer dropout(0.1) applied as identity (inference mode).
        rnn = gru_layer(rnn, wi1, bi1, wh1, bh1)
        rnn = gru_layer(rnn, wi2, bi2, wh2, bh2)                    # (T*B, 48)

        # ---- fc + dual weighted loss epilogue ----
        pred = jnp.dot(rnn, fcw[...], preferred_element_type=f32) + fcb[...] + 1e-05
        pred_ref[...] = pred
        wtv = wt_ref[...]                                           # (T*B, 1)
        d1 = pred[:, 0:3] - tgt_ref[...]
        d2 = pred[:, 3:6] - vel_ref[...]
        denom = float(d1.shape[0] * d1.shape[1])
        l1 = jnp.sum(jnp.sum(wtv * d1 * d1, axis=1, keepdims=True), axis=0, keepdims=True) / denom
        l2 = jnp.sum(jnp.sum(wtv * d2 * d2, axis=1, keepdims=True), axis=0, keepdims=True) / denom
        loss1_ref[...] = l1
        loss2_ref[...] = l2
        loss_ref[...] = l1 + l2

    args = (x6, tgt, vel, wt,
            lin["w1"], lin["b1"], lin["w2"], lin["b2"], lin["w3"], lin["b3"],
            gru[0]["wi"], gru[0]["bi"], gru[0]["wh"], gru[0]["bh"],
            gru[1]["wi"], gru[1]["bi"], gru[1]["wh"], gru[1]["bh"],
            gru[2]["wi"], gru[2]["bi"], gru[2]["wh"], gru[2]["bh"],
            fc["w"], fc["b"])

    pred, loss, loss1, loss2 = pl.pallas_call(
        kernel,
        out_shape=(
            jax.ShapeDtypeStruct((T * B, FC_OUT), f32),
            jax.ShapeDtypeStruct((1, 1), f32),
            jax.ShapeDtypeStruct((1, 1), f32),
            jax.ShapeDtypeStruct((1, 1), f32),
        ),
        in_specs=_vmem_specs(len(args)),
        out_specs=tuple(_vmem_specs(4)),
    )(*args)

    pred = jnp.transpose(pred.reshape(T, B, FC_OUT), (1, 0, 2))     # back to (B, T, 6)
    # TODO(synk): loss_giw_dual definition not provided; implemented as a
    # weighted-MSE dual loss proxy (pos part vs target, remaining part vs giw_vel).
    return pred[:, :, :3], loss[0, 0], loss1[0, 0], loss2[0, 0]


if __name__ == "__main__":
    key = jax.random.PRNGKey(0)
    kx, kt, kw, kp = jax.random.split(key, 4)
    B, T = 2, 8
    x = jax.random.normal(kx, (B, T, 9), jnp.float32)        # [:, :, :6] features, [:, :, 6:] giw_vel
    target = jax.random.normal(kt, (B, 3, T), jnp.float32)    # channel-major like x.permute(0,2,1)
    weight = jax.random.uniform(kw, (B, T), jnp.float32, minval=0.5, maxval=1.5)

    # mirrors the torch NaN/Inf asserts (eager, pre-kernel)
    for name, a in (("x", x), ("target", target), ("weight", weight)):
        assert not bool(jnp.isnan(a).any() | jnp.isinf(a).any()), f"NaN or Inf found in {name}"

    params = init_params(kp)
    out3, loss, loss1, loss2 = jax.jit(model7_forward)(x, target, weight, params)
    jax.block_until_ready((out3, loss, loss1, loss2))
    print("KERNEL_OK")
</pallas_src>

<mosaic_0001>
module attributes {stable_mosaic.version = 11 : i64} {
  func.func @kernel(%arg0: memref<16x6xf32, #tpu.memory_space<vmem>>, %arg1: memref<16x3xf32, #tpu.memory_space<vmem>>, %arg2: memref<16x3xf32, #tpu.memory_space<vmem>>, %arg3: memref<16x1xf32, #tpu.memory_space<vmem>>, %arg4: memref<6x36xf32, #tpu.memory_space<vmem>>, %arg5: memref<1x36xf32, #tpu.memory_space<vmem>>, %arg6: memref<36x36xf32, #tpu.memory_space<vmem>>, %arg7: memref<1x36xf32, #tpu.memory_space<vmem>>, %arg8: memref<36x8xf32, #tpu.memory_space<vmem>>, %arg9: memref<1x8xf32, #tpu.memory_space<vmem>>, %arg10: memref<8x144xf32, #tpu.memory_space<vmem>>, %arg11: memref<1x144xf32, #tpu.memory_space<vmem>>, %arg12: memref<48x144xf32, #tpu.memory_space<vmem>>, %arg13: memref<1x144xf32, #tpu.memory_space<vmem>>, %arg14: memref<48x144xf32, #tpu.memory_space<vmem>>, %arg15: memref<1x144xf32, #tpu.memory_space<vmem>>, %arg16: memref<48x144xf32, #tpu.memory_space<vmem>>, %arg17: memref<1x144xf32, #tpu.memory_space<vmem>>, %arg18: memref<48x144xf32, #tpu.memory_space<vmem>>, %arg19: memref<1x144xf32, #tpu.memory_space<vmem>>, %arg20: memref<48x144xf32, #tpu.memory_space<vmem>>, %arg21: memref<1x144xf32, #tpu.memory_space<vmem>>, %arg22: memref<48x6xf32, #tpu.memory_space<vmem>>, %arg23: memref<1x6xf32, #tpu.memory_space<vmem>>, %arg24: memref<16x6xf32, #tpu.memory_space<vmem>>, %arg25: memref<1x1xf32, #tpu.memory_space<vmem>>, %arg26: memref<1x1xf32, #tpu.memory_space<vmem>>, %arg27: memref<1x1xf32, #tpu.memory_space<vmem>>) attributes {dimension_semantics = [], scalar_prefetch = 0 : i64, scratch_operands = 0 : i64, tpu.core_type = #tpu.core_type<tc>} {
    %c0 = arith.constant 0 : index
    %c0_0 = arith.constant 0 : index
    %0 = vector.load %arg0[%c0, %c0_0] : memref<16x6xf32, #tpu.memory_space<vmem>>, vector<16x6xf32>
    %c0_1 = arith.constant 0 : index
    %c0_2 = arith.constant 0 : index
    %1 = vector.load %arg4[%c0_1, %c0_2] : memref<6x36xf32, #tpu.memory_space<vmem>>, vector<6x36xf32>
    %cst = arith.constant dense<0.000000e+00> : vector<16x36xf32>
    %2 = tpu.matmul %0, %1, %cst {dimension_numbers = #tpu.dot_dimension_numbers<[1], [0], [0], [1], [0, 0, 1, 1], [], []>} : vector<16x6xf32>, vector<6x36xf32>, vector<16x36xf32> -> vector<16x36xf32>
    %c0_3 = arith.constant 0 : index
    %c0_4 = arith.constant 0 : index
    %3 = vector.load %arg5[%c0_3, %c0_4] : memref<1x36xf32, #tpu.memory_space<vmem>>, vector<1x36xf32>
    %4 = vector.broadcast %3 : vector<1x36xf32> to vector<16x36xf32>
    %5 = arith.addf %2, %4 : vector<16x36xf32>
    %cst_5 = arith.constant 0.000000e+00 : f32
    %6 = vector.broadcast %cst_5 : f32 to vector<16x36xf32>
    %7 = arith.maximumf %5, %6 : vector<16x36xf32>
    %c0_6 = arith.constant 0 : index
    %c0_7 = arith.constant 0 : index
    %8 = vector.load %arg6[%c0_6, %c0_7] : memref<36x36xf32, #tpu.memory_space<vmem>>, vector<36x36xf32>
    %cst_8 = arith.constant dense<0.000000e+00> : vector<16x36xf32>
    %9 = tpu.matmul %7, %8, %cst_8 {dimension_numbers = #tpu.dot_dimension_numbers<[1], [0], [0], [1], [0, 0, 1, 1], [], []>} : vector<16x36xf32>, vector<36x36xf32>, vector<16x36xf32> -> vector<16x36xf32>
    %c0_9 = arith.constant 0 : index
    %c0_10 = arith.constant 0 : index
    %10 = vector.load %arg7[%c0_9, %c0_10] : memref<1x36xf32, #tpu.memory_space<vmem>>, vector<1x36xf32>
    %11 = vector.broadcast %10 : vector<1x36xf32> to vector<16x36xf32>
    %12 = arith.addf %9, %11 : vector<16x36xf32>
    %cst_11 = arith.constant 0.000000e+00 : f32
    %13 = vector.broadcast %cst_11 : f32 to vector<16x36xf32>
    %14 = arith.maximumf %12, %13 : vector<16x36xf32>
    %c0_12 = arith.constant 0 : index
    %c0_13 = arith.constant 0 : index
    %15 = vector.load %arg8[%c0_12, %c0_13] : memref<36x8xf32, #tpu.memory_space<vmem>>, vector<36x8xf32>
    %cst_14 = arith.constant dense<0.000000e+00> : vector<16x8xf32>
    %16 = tpu.matmul %14, %15, %cst_14 {dimension_numbers = #tpu.dot_dimension_numbers<[1], [0], [0], [1], [0, 0, 1, 1], [], []>} : vector<16x36xf32>, vector<36x8xf32>, vector<16x8xf32> -> vector<16x8xf32>
    %c0_15 = arith.constant 0 : index
    %c0_16 = arith.constant 0 : index
    %17 = vector.load %arg9[%c0_15, %c0_16] : memref<1x8xf32, #tpu.memory_space<vmem>>, vector<1x8xf32>
    %18 = vector.broadcast %17 : vector<1x8xf32> to vector<16x8xf32>
    %19 = arith.addf %16, %18 : vector<16x8xf32>
    %20 = tpu.iota {dimensions = array<i32: 1>} : vector<2x144xi32>
    %c48_i32 = arith.constant 48 : i32
    %c0_i32 = arith.constant 0 : i32
    %21 = arith.cmpi eq, %c48_i32, %c0_i32 : i32
    %c1_i32 = arith.constant 1 : i32
    %22 = arith.select %21, %c1_i32, %c48_i32 : i32
    %23 = vector.broadcast %22 : i32 to vector<2x144xi32>
    %24 = arith.remsi %20, %23 : vector<2x144xi32>
    %c0_i32_17 = arith.constant 0 : i32
    %25 = vector.broadcast %c0_i32_17 : i32 to vector<2x144xi32>
    %26 = arith.cmpi ne, %24, %25 : vector<2x144xi32>
    %c0_i32_18 = arith.constant 0 : i32
    %27 = vector.broadcast %c0_i32_18 : i32 to vector<2x144xi32>
    %28 = arith.cmpi slt, %24, %27 : vector<2x144xi32>
    %c0_i32_19 = arith.constant 0 : i32
    %29 = arith.cmpi slt, %22, %c0_i32_19 : i32
    %30 = vector.broadcast %29 : i1 to vector<2x144xi1>
    %31 = vector.broadcast %30 : vector<2x144xi1> to vector<2x144xi1>
    %32 = arith.xori %28, %31 : vector<2x144xi1>
    %33 = arith.andi %32, %26 : vector<2x144xi1>
    %34 = vector.broadcast %22 : i32 to vector<2x144xi32>
    %35 = arith.addi %24, %34 : vector<2x144xi32>
    %36 = arith.select %33, %35, %24 : vector<2x144xi1>, vector<2x144xi32>
    %c24_i32 = arith.constant 24 : i32
    %37 = vector.broadcast %c24_i32 : i32 to vector<2x144xi32>
    %38 = arith.cmpi slt, %36, %37 : vector<2x144xi32>
    %c0_20 = arith.constant 0 : index
    %c0_21 = arith.constant 0 : index
    %39 = vector.load %arg10[%c0_20, %c0_21] : memref<8x144xf32, #tpu.memory_space<vmem>>, vector<8x144xf32>
    %cst_22 = arith.constant dense<0.000000e+00> : vector<16x144xf32>
    %40 = tpu.matmul %19, %39, %cst_22 {dimension_numbers = #tpu.dot_dimension_numbers<[1], [0], [0], [1], [0, 0, 1, 1], [], []>} : vector<16x8xf32>, vector<8x144xf32>, vector<16x144xf32> -> vector<16x144xf32>
    %c0_23 = arith.constant 0 : index
    %c0_24 = arith.constant 0 : index
    %41 = vector.load %arg11[%c0_23, %c0_24] : memref<1x144xf32, #tpu.memory_space<vmem>>, vector<1x144xf32>
    %42 = vector.broadcast %41 : vector<1x144xf32> to vector<16x144xf32>
    %43 = arith.addf %40, %42 : vector<16x144xf32>
    %c0_25 = arith.constant 0 : index
    %c0_26 = arith.constant 0 : index
    %44 = vector.load %arg12[%c0_25, %c0_26] : memref<48x144xf32, #tpu.memory_space<vmem>>, vector<48x144xf32>
    %c0_27 = arith.constant 0 : index
    %c0_28 = arith.constant 0 : index
    %45 = vector.load %arg13[%c0_27, %c0_28] : memref<1x144xf32, #tpu.memory_space<vmem>>, vector<1x144xf32>
    %46 = vector.shape_cast %45 : vector<1x144xf32> to vector<1x144xf32>
    %47 = vector.broadcast %46 : vector<1x144xf32> to vector<2x144xf32>
    %cst_29 = arith.constant 0.000000e+00 : f32
    %48 = vector.broadcast %cst_29 : f32 to vector<2x48xf32>
    %49 = vector.extract_strided_slice %43 {offsets = [0, 0], sizes = [2, 144], strides = [1, 1]} : vector<16x144xf32> to vector<2x144xf32>
    %50 = vector.extract_strided_slice %43 {offsets = [14, 0], sizes = [2, 144], strides = [1, 1]} : vector<16x144xf32> to vector<2x144xf32>
    %51 = arith.select %38, %49, %50 : vector<2x144xi1>, vector<2x144xf32>
    %cst_30 = arith.constant dense<0.000000e+00> : vector<2x144xf32>
    %52 = tpu.matmul %48, %44, %cst_30 {dimension_numbers = #tpu.dot_dimension_numbers<[1], [0], [0], [1], [0, 0, 1, 1], [], []>} : vector<2x48xf32>, vector<48x144xf32>, vector<2x144xf32> -> vector<2x144xf32>
    %53 = arith.addf %52, %47 : vector<2x144xf32>
    %54 = vector.extract_strided_slice %51 {offsets = [0, 0], sizes = [2, 48], strides = [1, 1]} : vector<2x144xf32> to vector<2x48xf32>
    %55 = vector.extract_strided_slice %53 {offsets = [0, 0], sizes = [2, 48], strides = [1, 1]} : vector<2x144xf32> to vector<2x48xf32>
    %56 = arith.addf %54, %55 : vector<2x48xf32>
    %57 = arith.negf %56 : vector<2x48xf32>
    %58 = math.exp %57 : vector<2x48xf32>
    %cst_31 = arith.constant 1.000000e+00 : f32
    %59 = vector.broadcast %cst_31 : f32 to vector<2x48xf32>
    %60 = arith.addf %59, %58 : vector<2x48xf32>
    %61 = arith.divf %59, %60 : vector<2x48xf32>
    %62 = vector.extract_strided_slice %51 {offsets = [0, 48], sizes = [2, 48], strides = [1, 1]} : vector<2x144xf32> to vector<2x48xf32>
    %63 = vector.extract_strided_slice %53 {offsets = [0, 48], sizes = [2, 48], strides = [1, 1]} : vector<2x144xf32> to vector<2x48xf32>
    %64 = arith.addf %62, %63 : vector<2x48xf32>
    %65 = arith.negf %64 : vector<2x48xf32>
    %66 = math.exp %65 : vector<2x48xf32>
    %cst_32 = arith.constant 1.000000e+00 : f32
    %67 = vector.broadcast %cst_32 : f32 to vector<2x48xf32>
    %68 = arith.addf %67, %66 : vector<2x48xf32>
    %69 = arith.divf %67, %68 : vector<2x48xf32>
    %70 = vector.extract_strided_slice %51 {offsets = [0, 96], sizes = [2, 48], strides = [1, 1]} : vector<2x144xf32> to vector<2x48xf32>
    %71 = vector.extract_strided_slice %53 {offsets = [0, 96], sizes = [2, 48], strides = [1, 1]} : vector<2x144xf32> to vector<2x48xf32>
    %72 = arith.mulf %61, %71 : vector<2x48xf32>
    %73 = arith.addf %70, %72 : vector<2x48xf32>
    %74 = math.tanh %73 : vector<2x48xf32>
    %cst_33 = arith.constant 1.000000e+00 : f32
    %75 = vector.broadcast %cst_33 : f32 to vector<2x48xf32>
    %76 = arith.subf %75, %69 : vector<2x48xf32>
    %77 = arith.mulf %76, %74 : vector<2x48xf32>
    %78 = arith.mulf %69, %48 : vector<2x48xf32>
    %79 = arith.addf %77, %78 : vector<2x48xf32>
    %80 = vector.extract_strided_slice %79 {offsets = [0, 0], sizes = [2, 24], strides = [1, 1]} : vector<2x48xf32> to vector<2x24xf32>
    %81 = vector.extract_strided_slice %79 {offsets = [0, 24], sizes = [2, 24], strides = [1, 1]} : vector<2x48xf32> to vector<2x24xf32>
    %82 = vector.extract_strided_slice %43 {offsets = [2, 0], sizes = [2, 144], strides = [1, 1]} : vector<16x144xf32> to vector<2x144xf32>
    %83 = vector.extract_strided_slice %43 {offsets = [12, 0], sizes = [2, 144], strides = [1, 1]} : vector<16x144xf32> to vector<2x144xf32>
    %84 = arith.select %38, %82, %83 : vector<2x144xi1>, vector<2x144xf32>
    %cst_34 = arith.constant dense<0.000000e+00> : vector<2x144xf32>
    %85 = tpu.matmul %79, %44, %cst_34 {dimension_numbers = #tpu.dot_dimension_numbers<[1], [0], [0], [1], [0, 0, 1, 1], [], []>} : vector<2x48xf32>, vector<48x144xf32>, vector<2x144xf32> -> vector<2x144xf32>
    %86 = arith.addf %85, %47 : vector<2x144xf32>
    %87 = vector.extract_strided_slice %84 {offsets = [0, 0], sizes = [2, 48], strides = [1, 1]} : vector<2x144xf32> to vector<2x48xf32>
    %88 = vector.extract_strided_slice %86 {offsets = [0, 0], sizes = [2, 48], strides = [1, 1]} : vector<2x144xf32> to vector<2x48xf32>
    %89 = arith.addf %87, %88 : vector<2x48xf32>
    %90 = arith.negf %89 : vector<2x48xf32>
    %91 = math.exp %90 : vector<2x48xf32>
    %cst_35 = arith.constant 1.000000e+00 : f32
    %92 = vector.broadcast %cst_35 : f32 to vector<2x48xf32>
    %93 = arith.addf %92, %91 : vector<2x48xf32>
    %94 = arith.divf %92, %93 : vector<2x48xf32>
    %95 = vector.extract_strided_slice %84 {offsets = [0, 48], sizes = [2, 48], strides = [1, 1]} : vector<2x144xf32> to vector<2x48xf32>
    %96 = vector.extract_strided_slice %86 {offsets = [0, 48], sizes = [2, 48], strides = [1, 1]} : vector<2x144xf32> to vector<2x48xf32>
    %97 = arith.addf %95, %96 : vector<2x48xf32>
    %98 = arith.negf %97 : vector<2x48xf32>
    %99 = math.exp %98 : vector<2x48xf32>
    %cst_36 = arith.constant 1.000000e+00 : f32
    %100 = vector.broadcast %cst_36 : f32 to vector<2x48xf32>
    %101 = arith.addf %100, %99 : vector<2x48xf32>
    %102 = arith.divf %100, %101 : vector<2x48xf32>
    %103 = vector.extract_strided_slice %84 {offsets = [0, 96], sizes = [2, 48], strides = [1, 1]} : vector<2x144xf32> to vector<2x48xf32>
    %104 = vector.extract_strided_slice %86 {offsets = [0, 96], sizes = [2, 48], strides = [1, 1]} : vector<2x144xf32> to vector<2x48xf32>
    %105 = arith.mulf %94, %104 : vector<2x48xf32>
    %106 = arith.addf %103, %105 : vector<2x48xf32>
    %107 = math.tanh %106 : vector<2x48xf32>
    %cst_37 = arith.constant 1.000000e+00 : f32
    %108 = vector.broadcast %cst_37 : f32 to vector<2x48xf32>
    %109 = arith.subf %108, %102 : vector<2x48xf32>
    %110 = arith.mulf %109, %107 : vector<2x48xf32>
    %111 = arith.mulf %102, %79 : vector<2x48xf32>
    %112 = arith.addf %110, %111 : vector<2x48xf32>
    %113 = vector.extract_strided_slice %112 {offsets = [0, 0], sizes = [2, 24], strides = [1, 1]} : vector<2x48xf32> to vector<2x24xf32>
    %114 = vector.extract_strided_slice %112 {offsets = [0, 24], sizes = [2, 24], strides = [1, 1]} : vector<2x48xf32> to vector<2x24xf32>
    %115 = vector.extract_strided_slice %43 {offsets = [4, 0], sizes = [2, 144], strides = [1, 1]} : vector<16x144xf32> to vector<2x144xf32>
    %116 = vector.extract_strided_slice %43 {offsets = [10, 0], sizes = [2, 144], strides = [1, 1]} : vector<16x144xf32> to vector<2x144xf32>
    %117 = arith.select %38, %115, %116 : vector<2x144xi1>, vector<2x144xf32>
    %cst_38 = arith.constant dense<0.000000e+00> : vector<2x144xf32>
    %118 = tpu.matmul %112, %44, %cst_38 {dimension_numbers = #tpu.dot_dimension_numbers<[1], [0], [0], [1], [0, 0, 1, 1], [], []>} : vector<2x48xf32>, vector<48x144xf32>, vector<2x144xf32> -> vector<2x144xf32>
    %119 = arith.addf %118, %47 : vector<2x144xf32>
    %120 = vector.extract_strided_slice %117 {offsets = [0, 0], sizes = [2, 48], strides = [1, 1]} : vector<2x144xf32> to vector<2x48xf32>
    %121 = vector.extract_strided_slice %119 {offsets = [0, 0], sizes = [2, 48], strides = [1, 1]} : vector<2x144xf32> to vector<2x48xf32>
    %122 = arith.addf %120, %121 : vector<2x48xf32>
    %123 = arith.negf %122 : vector<2x48xf32>
    %124 = math.exp %123 : vector<2x48xf32>
    %cst_39 = arith.constant 1.000000e+00 : f32
    %125 = vector.broadcast %cst_39 : f32 to vector<2x48xf32>
    %126 = arith.addf %125, %124 : vector<2x48xf32>
    %127 = arith.divf %125, %126 : vector<2x48xf32>
    %128 = vector.extract_strided_slice %117 {offsets = [0, 48], sizes = [2, 48], strides = [1, 1]} : vector<2x144xf32> to vector<2x48xf32>
    %129 = vector.extract_strided_slice %119 {offsets = [0, 48], sizes = [2, 48], strides = [1, 1]} : vector<2x144xf32> to vector<2x48xf32>
    %130 = arith.addf %128, %129 : vector<2x48xf32>
    %131 = arith.negf %130 : vector<2x48xf32>
    %132 = math.exp %131 : vector<2x48xf32>
    %cst_40 = arith.constant 1.000000e+00 : f32
    %133 = vector.broadcast %cst_40 : f32 to vector<2x48xf32>
    %134 = arith.addf %133, %132 : vector<2x48xf32>
    %135 = arith.divf %133, %134 : vector<2x48xf32>
    %136 = vector.extract_strided_slice %117 {offsets = [0, 96], sizes = [2, 48], strides = [1, 1]} : vector<2x144xf32> to vector<2x48xf32>
    %137 = vector.extract_strided_slice %119 {offsets = [0, 96], sizes = [2, 48], strides = [1, 1]} : vector<2x144xf32> to vector<2x48xf32>
    %138 = arith.mulf %127, %137 : vector<2x48xf32>
    %139 = arith.addf %136, %138 : vector<2x48xf32>
    %140 = math.tanh %139 : vector<2x48xf32>
    %cst_41 = arith.constant 1.000000e+00 : f32
    %141 = vector.broadcast %cst_41 : f32 to vector<2x48xf32>
    %142 = arith.subf %141, %135 : vector<2x48xf32>
    %143 = arith.mulf %142, %140 : vector<2x48xf32>
    %144 = arith.mulf %135, %112 : vector<2x48xf32>
    %145 = arith.addf %143, %144 : vector<2x48xf32>
    %146 = vector.extract_strided_slice %145 {offsets = [0, 0], sizes = [2, 24], strides = [1, 1]} : vector<2x48xf32> to vector<2x24xf32>
    %147 = vector.extract_strided_slice %145 {offsets = [0, 24], sizes = [2, 24], strides = [1, 1]} : vector<2x48xf32> to vector<2x24xf32>
    %148 = vector.extract_strided_slice %43 {offsets = [6, 0], sizes = [2, 144], strides = [1, 1]} : vector<16x144xf32> to vector<2x144xf32>
    %149 = vector.extract_strided_slice %43 {offsets = [8, 0], sizes = [2, 144], strides = [1, 1]} : vector<16x144xf32> to vector<2x144xf32>
    %150 = arith.select %38, %148, %149 : vector<2x144xi1>, vector<2x144xf32>
    %cst_42 = arith.constant dense<0.000000e+00> : vector<2x144xf32>
    %151 = tpu.matmul %145, %44, %cst_42 {dimension_numbers = #tpu.dot_dimension_numbers<[1], [0], [0], [1], [0, 0, 1, 1], [], []>} : vector<2x48xf32>, vector<48x144xf32>, vector<2x144xf32> -> vector<2x144xf32>
    %152 = arith.addf %151, %47 : vector<2x144xf32>
    %153 = vector.extract_strided_slice %150 {offsets = [0, 0], sizes = [2, 48], strides = [1, 1]} : vector<2x144xf32> to vector<2x48xf32>
    %154 = vector.extract_strided_slice %152 {offsets = [0, 0], sizes = [2, 48], strides = [1, 1]} : vector<2x144xf32> to vector<2x48xf32>
    %155 = arith.addf %153, %154 : vector<2x48xf32>
    %156 = arith.negf %155 : vector<2x48xf32>
    %157 = math.exp %156 : vector<2x48xf32>
    %cst_43 = arith.constant 1.000000e+00 : f32
    %158 = vector.broadcast %cst_43 : f32 to vector<2x48xf32>
    %159 = arith.addf %158, %157 : vector<2x48xf32>
    %160 = arith.divf %158, %159 : vector<2x48xf32>
    %161 = vector.extract_strided_slice %150 {offsets = [0, 48], sizes = [2, 48], strides = [1, 1]} : vector<2x144xf32> to vector<2x48xf32>
    %162 = vector.extract_strided_slice %152 {offsets = [0, 48], sizes = [2, 48], strides = [1, 1]} : vector<2x144xf32> to vector<2x48xf32>
    %163 = arith.addf %161, %162 : vector<2x48xf32>
    %164 = arith.negf %163 : vector<2x48xf32>
    %165 = math.exp %164 : vector<2x48xf32>
    %cst_44 = arith.constant 1.000000e+00 : f32
    %166 = vector.broadcast %cst_44 : f32 to vector<2x48xf32>
    %167 = arith.addf %166, %165 : vector<2x48xf32>
    %168 = arith.divf %166, %167 : vector<2x48xf32>
    %169 = vector.extract_strided_slice %150 {offsets = [0, 96], sizes = [2, 48], strides = [1, 1]} : vector<2x144xf32> to vector<2x48xf32>
    %170 = vector.extract_strided_slice %152 {offsets = [0, 96], sizes = [2, 48], strides = [1, 1]} : vector<2x144xf32> to vector<2x48xf32>
    %171 = arith.mulf %160, %170 : vector<2x48xf32>
    %172 = arith.addf %169, %171 : vector<2x48xf32>
    %173 = math.tanh %172 : vector<2x48xf32>
    %cst_45 = arith.constant 1.000000e+00 : f32
    %174 = vector.broadcast %cst_45 : f32 to vector<2x48xf32>
    %175 = arith.subf %174, %168 : vector<2x48xf32>
    %176 = arith.mulf %175, %173 : vector<2x48xf32>
    %177 = arith.mulf %168, %145 : vector<2x48xf32>
    %178 = arith.addf %176, %177 : vector<2x48xf32>
    %179 = vector.extract_strided_slice %178 {offsets = [0, 0], sizes = [2, 24], strides = [1, 1]} : vector<2x48xf32> to vector<2x24xf32>
    %180 = vector.extract_strided_slice %178 {offsets = [0, 24], sizes = [2, 24], strides = [1, 1]} : vector<2x48xf32> to vector<2x24xf32>
    %181 = vector.extract_strided_slice %43 {offsets = [8, 0], sizes = [2, 144], strides = [1, 1]} : vector<16x144xf32> to vector<2x144xf32>
    %182 = vector.extract_strided_slice %43 {offsets = [6, 0], sizes = [2, 144], strides = [1, 1]} : vector<16x144xf32> to vector<2x144xf32>
    %183 = arith.select %38, %181, %182 : vector<2x144xi1>, vector<2x144xf32>
    %cst_46 = arith.constant dense<0.000000e+00> : vector<2x144xf32>
    %184 = tpu.matmul %178, %44, %cst_46 {dimension_numbers = #tpu.dot_dimension_numbers<[1], [0], [0], [1], [0, 0, 1, 1], [], []>} : vector<2x48xf32>, vector<48x144xf32>, vector<2x144xf32> -> vector<2x144xf32>
    %185 = arith.addf %184, %47 : vector<2x144xf32>
    %186 = vector.extract_strided_slice %183 {offsets = [0, 0], sizes = [2, 48], strides = [1, 1]} : vector<2x144xf32> to vector<2x48xf32>
    %187 = vector.extract_strided_slice %185 {offsets = [0, 0], sizes = [2, 48], strides = [1, 1]} : vector<2x144xf32> to vector<2x48xf32>
    %188 = arith.addf %186, %187 : vector<2x48xf32>
    %189 = arith.negf %188 : vector<2x48xf32>
    %190 = math.exp %189 : vector<2x48xf32>
    %cst_47 = arith.constant 1.000000e+00 : f32
    %191 = vector.broadcast %cst_47 : f32 to vector<2x48xf32>
    %192 = arith.addf %191, %190 : vector<2x48xf32>
    %193 = arith.divf %191, %192 : vector<2x48xf32>
    %194 = vector.extract_strided_slice %183 {offsets = [0, 48], sizes = [2, 48], strides = [1, 1]} : vector<2x144xf32> to vector<2x48xf32>
    %195 = vector.extract_strided_slice %185 {offsets = [0, 48], sizes = [2, 48], strides = [1, 1]} : vector<2x144xf32> to vector<2x48xf32>
    %196 = arith.addf %194, %195 : vector<2x48xf32>
    %197 = arith.negf %196 : vector<2x48xf32>
    %198 = math.exp %197 : vector<2x48xf32>
    %cst_48 = arith.constant 1.000000e+00 : f32
    %199 = vector.broadcast %cst_48 : f32 to vector<2x48xf32>
    %200 = arith.addf %199, %198 : vector<2x48xf32>
    %201 = arith.divf %199, %200 : vector<2x48xf32>
    %202 = vector.extract_strided_slice %183 {offsets = [0, 96], sizes = [2, 48], strides = [1, 1]} : vector<2x144xf32> to vector<2x48xf32>
    %203 = vector.extract_strided_slice %185 {offsets = [0, 96], sizes = [2, 48], strides = [1, 1]} : vector<2x144xf32> to vector<2x48xf32>
    %204 = arith.mulf %193, %203 : vector<2x48xf32>
    %205 = arith.addf %202, %204 : vector<2x48xf32>
    %206 = math.tanh %205 : vector<2x48xf32>
    %cst_49 = arith.constant 1.000000e+00 : f32
    %207 = vector.broadcast %cst_49 : f32 to vector<2x48xf32>
    %208 = arith.subf %207, %201 : vector<2x48xf32>
    %209 = arith.mulf %208, %206 : vector<2x48xf32>
    %210 = arith.mulf %201, %178 : vector<2x48xf32>
    %211 = arith.addf %209, %210 : vector<2x48xf32>
    %212 = vector.extract_strided_slice %211 {offsets = [0, 0], sizes = [2, 24], strides = [1, 1]} : vector<2x48xf32> to vector<2x24xf32>
    %213 = vector.extract_strided_slice %211 {offsets = [0, 24], sizes = [2, 24], strides = [1, 1]} : vector<2x48xf32> to vector<2x24xf32>
    %214 = vector.extract_strided_slice %43 {offsets = [10, 0], sizes = [2, 144], strides = [1, 1]} : vector<16x144xf32> to vector<2x144xf32>
    %215 = vector.extract_strided_slice %43 {offsets = [4, 0], sizes = [2, 144], strides = [1, 1]} : vector<16x144xf32> to vector<2x144xf32>
    %216 = arith.select %38, %214, %215 : vector<2x144xi1>, vector<2x144xf32>
    %cst_50 = arith.constant dense<0.000000e+00> : vector<2x144xf32>
    %217 = tpu.matmul %211, %44, %cst_50 {dimension_numbers = #tpu.dot_dimension_numbers<[1], [0], [0], [1], [0, 0, 1, 1], [], []>} : vector<2x48xf32>, vector<48x144xf32>, vector<2x144xf32> -> vector<2x144xf32>
    %218 = arith.addf %217, %47 : vector<2x144xf32>
    %219 = vector.extract_strided_slice %216 {offsets = [0, 0], sizes = [2, 48], strides = [1, 1]} : vector<2x144xf32> to vector<2x48xf32>
    %220 = vector.extract_strided_slice %218 {offsets = [0, 0], sizes = [2, 48], strides = [1, 1]} : vector<2x144xf32> to vector<2x48xf32>
    %221 = arith.addf %219, %220 : vector<2x48xf32>
    %222 = arith.negf %221 : vector<2x48xf32>
    %223 = math.exp %222 : vector<2x48xf32>
    %cst_51 = arith.constant 1.000000e+00 : f32
    %224 = vector.broadcast %cst_51 : f32 to vector<2x48xf32>
    %225 = arith.addf %224, %223 : vector<2x48xf32>
    %226 = arith.divf %224, %225 : vector<2x48xf32>
    %227 = vector.extract_strided_slice %216 {offsets = [0, 48], sizes = [2, 48], strides = [1, 1]} : vector<2x144xf32> to vector<2x48xf32>
    %228 = vector.extract_strided_slice %218 {offsets = [0, 48], sizes = [2, 48], strides = [1, 1]} : vector<2x144xf32> to vector<2x48xf32>
    %229 = arith.addf %227, %228 : vector<2x48xf32>
    %230 = arith.negf %229 : vector<2x48xf32>
    %231 = math.exp %230 : vector<2x48xf32>
    %cst_52 = arith.constant 1.000000e+00 : f32
    %232 = vector.broadcast %cst_52 : f32 to vector<2x48xf32>
    %233 = arith.addf %232, %231 : vector<2x48xf32>
    %234 = arith.divf %232, %233 : vector<2x48xf32>
    %235 = vector.extract_strided_slice %216 {offsets = [0, 96], sizes = [2, 48], strides = [1, 1]} : vector<2x144xf32> to vector<2x48xf32>
    %236 = vector.extract_strided_slice %218 {offsets = [0, 96], sizes = [2, 48], strides = [1, 1]} : vector<2x144xf32> to vector<2x48xf32>
    %237 = arith.mulf %226, %236 : vector<2x48xf32>
    %238 = arith.addf %235, %237 : vector<2x48xf32>
    %239 = math.tanh %238 : vector<2x48xf32>
    %cst_53 = arith.constant 1.000000e+00 : f32
    %240 = vector.broadcast %cst_53 : f32 to vector<2x48xf32>
    %241 = arith.subf %240, %234 : vector<2x48xf32>
    %242 = arith.mulf %241, %239 : vector<2x48xf32>
    %243 = arith.mulf %234, %211 : vector<2x48xf32>
    %244 = arith.addf %242, %243 : vector<2x48xf32>
    %245 = vector.extract_strided_slice %244 {offsets = [0, 0], sizes = [2, 24], strides = [1, 1]} : vector<2x48xf32> to vector<2x24xf32>
    %246 = vector.extract_strided_slice %244 {offsets = [0, 24], sizes = [2, 24], strides = [1, 1]} : vector<2x48xf32> to vector<2x24xf32>
    %247 = vector.extract_strided_slice %43 {offsets = [12, 0], sizes = [2, 144], strides = [1, 1]} : vector<16x144xf32> to vector<2x144xf32>
    %248 = vector.extract_strided_slice %43 {offsets = [2, 0], sizes = [2, 144], strides = [1, 1]} : vector<16x144xf32> to vector<2x144xf32>
    %249 = arith.select %38, %247, %248 : vector<2x144xi1>, vector<2x144xf32>
    %cst_54 = arith.constant dense<0.000000e+00> : vector<2x144xf32>
    %250 = tpu.matmul %244, %44, %cst_54 {dimension_numbers = #tpu.dot_dimension_numbers<[1], [0], [0], [1], [0, 0, 1, 1], [], []>} : vector<2x48xf32>, vector<48x144xf32>, vector<2x144xf32> -> vector<2x144xf32>
    %251 = arith.addf %250, %47 : vector<2x144xf32>
    %252 = vector.extract_strided_slice %249 {offsets = [0, 0], sizes = [2, 48], strides = [1, 1]} : vector<2x144xf32> to vector<2x48xf32>
    %253 = vector.extract_strided_slice %251 {offsets = [0, 0], sizes = [2, 48], strides = [1, 1]} : vector<2x144xf32> to vector<2x48xf32>
    %254 = arith.addf %252, %253 : vector<2x48xf32>
    %255 = arith.negf %254 : vector<2x48xf32>
    %256 = math.exp %255 : vector<2x48xf32>
    %cst_55 = arith.constant 1.000000e+00 : f32
    %257 = vector.broadcast %cst_55 : f32 to vector<2x48xf32>
    %258 = arith.addf %257, %256 : vector<2x48xf32>
    %259 = arith.divf %257, %258 : vector<2x48xf32>
    %260 = vector.extract_strided_slice %249 {offsets = [0, 48], sizes = [2, 48], strides = [1, 1]} : vector<2x144xf32> to vector<2x48xf32>
    %261 = vector.extract_strided_slice %251 {offsets = [0, 48], sizes = [2, 48], strides = [1, 1]} : vector<2x144xf32> to vector<2x48xf32>
    %262 = arith.addf %260, %261 : vector<2x48xf32>
    %263 = arith.negf %262 : vector<2x48xf32>
    %264 = math.exp %263 : vector<2x48xf32>
    %cst_56 = arith.constant 1.000000e+00 : f32
    %265 = vector.broadcast %cst_56 : f32 to vector<2x48xf32>
    %266 = arith.addf %265, %264 : vector<2x48xf32>
    %267 = arith.divf %265, %266 : vector<2x48xf32>
    %268 = vector.extract_strided_slice %249 {offsets = [0, 96], sizes = [2, 48], strides = [1, 1]} : vector<2x144xf32> to vector<2x48xf32>
    %269 = vector.extract_strided_slice %251 {offsets = [0, 96], sizes = [2, 48], strides = [1, 1]} : vector<2x144xf32> to vector<2x48xf32>
    %270 = arith.mulf %259, %269 : vector<2x48xf32>
    %271 = arith.addf %268, %270 : vector<2x48xf32>
    %272 = math.tanh %271 : vector<2x48xf32>
    %cst_57 = arith.constant 1.000000e+00 : f32
    %273 = vector.broadcast %cst_57 : f32 to vector<2x48xf32>
    %274 = arith.subf %273, %267 : vector<2x48xf32>
    %275 = arith.mulf %274, %272 : vector<2x48xf32>
    %276 = arith.mulf %267, %244 : vector<2x48xf32>
    %277 = arith.addf %275, %276 : vector<2x48xf32>
    %278 = vector.extract_strided_slice %277 {offsets = [0, 0], sizes = [2, 24], strides = [1, 1]} : vector<2x48xf32> to vector<2x24xf32>
    %279 = vector.extract_strided_slice %277 {offsets = [0, 24], sizes = [2, 24], strides = [1, 1]} : vector<2x48xf32> to vector<2x24xf32>
    %280 = vector.extract_strided_slice %43 {offsets = [14, 0], sizes = [2, 144], strides = [1, 1]} : vector<16x144xf32> to vector<2x144xf32>
    %281 = vector.extract_strided_slice %43 {offsets = [0, 0], sizes = [2, 144], strides = [1, 1]} : vector<16x144xf32> to vector<2x144xf32>
    %282 = arith.select %38, %280, %281 : vector<2x144xi1>, vector<2x144xf32>
    %cst_58 = arith.constant dense<0.000000e+00> : vector<2x144xf32>
    %283 = tpu.matmul %277, %44, %cst_58 {dimension_numbers = #tpu.dot_dimension_numbers<[1], [0], [0], [1], [0, 0, 1, 1], [], []>} : vector<2x48xf32>, vector<48x144xf32>, vector<2x144xf32> -> vector<2x144xf32>
    %284 = arith.addf %283, %47 : vector<2x144xf32>
    %285 = vector.extract_strided_slice %282 {offsets = [0, 0], sizes = [2, 48], strides = [1, 1]} : vector<2x144xf32> to vector<2x48xf32>
    %286 = vector.extract_strided_slice %284 {offsets = [0, 0], sizes = [2, 48], strides = [1, 1]} : vector<2x144xf32> to vector<2x48xf32>
    %287 = arith.addf %285, %286 : vector<2x48xf32>
    %288 = arith.negf %287 : vector<2x48xf32>
    %289 = math.exp %288 : vector<2x48xf32>
    %cst_59 = arith.constant 1.000000e+00 : f32
    %290 = vector.broadcast %cst_59 : f32 to vector<2x48xf32>
    %291 = arith.addf %290, %289 : vector<2x48xf32>
    %292 = arith.divf %290, %291 : vector<2x48xf32>
    %293 = vector.extract_strided_slice %282 {offsets = [0, 48], sizes = [2, 48], strides = [1, 1]} : vector<2x144xf32> to vector<2x48xf32>
    %294 = vector.extract_strided_slice %284 {offsets = [0, 48], sizes = [2, 48], strides = [1, 1]} : vector<2x144xf32> to vector<2x48xf32>
    %295 = arith.addf %293, %294 : vector<2x48xf32>
    %296 = arith.negf %295 : vector<2x48xf32>
    %297 = math.exp %296 : vector<2x48xf32>
    %cst_60 = arith.constant 1.000000e+00 : f32
    %298 = vector.broadcast %cst_60 : f32 to vector<2x48xf32>
    %299 = arith.addf %298, %297 : vector<2x48xf32>
    %300 = arith.divf %298, %299 : vector<2x48xf32>
    %301 = vector.extract_strided_slice %282 {offsets = [0, 96], sizes = [2, 48], strides = [1, 1]} : vector<2x144xf32> to vector<2x48xf32>
    %302 = vector.extract_strided_slice %284 {offsets = [0, 96], sizes = [2, 48], strides = [1, 1]} : vector<2x144xf32> to vector<2x48xf32>
    %303 = arith.mulf %292, %302 : vector<2x48xf32>
    %304 = arith.addf %301, %303 : vector<2x48xf32>
    %305 = math.tanh %304 : vector<2x48xf32>
    %cst_61 = arith.constant 1.000000e+00 : f32
    %306 = vector.broadcast %cst_61 : f32 to vector<2x48xf32>
    %307 = arith.subf %306, %300 : vector<2x48xf32>
    %308 = arith.mulf %307, %305 : vector<2x48xf32>
    %309 = arith.mulf %300, %277 : vector<2x48xf32>
    %310 = arith.addf %308, %309 : vector<2x48xf32>
    %311 = vector.extract_strided_slice %310 {offsets = [0, 0], sizes = [2, 24], strides = [1, 1]} : vector<2x48xf32> to vector<2x24xf32>
    %312 = vector.extract_strided_slice %310 {offsets = [0, 24], sizes = [2, 24], strides = [1, 1]} : vector<2x48xf32> to vector<2x24xf32>
    %313 = tpu.concatenate %80, %312 in 1 : vector<2x24xf32>, vector<2x24xf32> -> vector<2x48xf32>
    %314 = tpu.concatenate %113, %279 in 1 : vector<2x24xf32>, vector<2x24xf32> -> vector<2x48xf32>
    %315 = tpu.concatenate %146, %246 in 1 : vector<2x24xf32>, vector<2x24xf32> -> vector<2x48xf32>
    %316 = tpu.concatenate %179, %213 in 1 : vector<2x24xf32>, vector<2x24xf32> -> vector<2x48xf32>
    %317 = tpu.concatenate %212, %180 in 1 : vector<2x24xf32>, vector<2x24xf32> -> vector<2x48xf32>
    %318 = tpu.concatenate %245, %147 in 1 : vector<2x24xf32>, vector<2x24xf32> -> vector<2x48xf32>
    %319 = tpu.concatenate %278, %114 in 1 : vector<2x24xf32>, vector<2x24xf32> -> vector<2x48xf32>
    %320 = tpu.concatenate %311, %81 in 1 : vector<2x24xf32>, vector<2x24xf32> -> vector<2x48xf32>
    %321 = tpu.concatenate %313, %314, %315, %316, %317, %318, %319, %320 in 0 : vector<2x48xf32>, vector<2x48xf32>, vector<2x48xf32>, vector<2x48xf32>, vector<2x48xf32>, vector<2x48xf32>, vector<2x48xf32>, vector<2x48xf32> -> vector<16x48xf32>
    %c0_62 = arith.constant 0 : index
    %c0_63 = arith.constant 0 : index
    %322 = vector.load %arg14[%c0_62, %c0_63] : memref<48x144xf32, #tpu.memory_space<vmem>>, vector<48x144xf32>
    %cst_64 = arith.constant dense<0.000000e+00> : vector<16x144xf32>
    %323 = tpu.matmul %321, %322, %cst_64 {dimension_numbers = #tpu.dot_dimension_numbers<[1], [0], [0], [1], [0, 0, 1, 1], [], []>} : vector<16x48xf32>, vector<48x144xf32>, vector<16x144xf32> -> vector<16x144xf32>
    %c0_65 = arith.constant 0 : index
    %c0_66 = arith.constant 0 : index
    %324 = vector.load %arg15[%c0_65, %c0_66] : memref<1x144xf32, #tpu.memory_space<vmem>>, vector<1x144xf32>
    %325 = vector.broadcast %324 : vector<1x144xf32> to vector<16x144xf32>
    %326 = arith.addf %323, %325 : vector<16x144xf32>
    %c0_67 = arith.constant 0 : index
    %c0_68 = arith.constant 0 : index
    %327 = vector.load %arg16[%c0_67, %c0_68] : memref<48x144xf32, #tpu.memory_space<vmem>>, vector<48x144xf32>
    %c0_69 = arith.constant 0 : index
    %c0_70 = arith.constant 0 : index
    %328 = vector.load %arg17[%c0_69, %c0_70] : memref<1x144xf32, #tpu.memory_space<vmem>>, vector<1x144xf32>
    %329 = vector.shape_cast %328 : vector<1x144xf32> to vector<1x144xf32>
    %330 = vector.broadcast %329 : vector<1x144xf32> to vector<2x144xf32>
    %cst_71 = arith.constant 0.000000e+00 : f32
    %331 = vector.broadcast %cst_71 : f32 to vector<2x48xf32>
    %332 = vector.extract_strided_slice %326 {offsets = [0, 0], sizes = [2, 144], strides = [1, 1]} : vector<16x144xf32> to vector<2x144xf32>
    %333 = vector.extract_strided_slice %326 {offsets = [14, 0], sizes = [2, 144], strides = [1, 1]} : vector<16x144xf32> to vector<2x144xf32>
    %334 = arith.select %38, %332, %333 : vector<2x144xi1>, vector<2x144xf32>
    %cst_72 = arith.constant dense<0.000000e+00> : vector<2x144xf32>
    %335 = tpu.matmul %331, %327, %cst_72 {dimension_numbers = #tpu.dot_dimension_numbers<[1], [0], [0], [1], [0, 0, 1, 1], [], []>} : vector<2x48xf32>, vector<48x144xf32>, vector<2x144xf32> -> vector<2x144xf32>
    %336 = arith.addf %335, %330 : vector<2x144xf32>
    %337 = vector.extract_strided_slice %334 {offsets = [0, 0], sizes = [2, 48], strides = [1, 1]} : vector<2x144xf32> to vector<2x48xf32>
    %338 = vector.extract_strided_slice %336 {offsets = [0, 0], sizes = [2, 48], strides = [1, 1]} : vector<2x144xf32> to vector<2x48xf32>
    %339 = arith.addf %337, %338 : vector<2x48xf32>
    %340 = arith.negf %339 : vector<2x48xf32>
    %341 = math.exp %340 : vector<2x48xf32>
    %cst_73 = arith.constant 1.000000e+00 : f32
    %342 = vector.broadcast %cst_73 : f32 to vector<2x48xf32>
    %343 = arith.addf %342, %341 : vector<2x48xf32>
    %344 = arith.divf %342, %343 : vector<2x48xf32>
    %345 = vector.extract_strided_slice %334 {offsets = [0, 48], sizes = [2, 48], strides = [1, 1]} : vector<2x144xf32> to vector<2x48xf32>
    %346 = vector.extract_strided_slice %336 {offsets = [0, 48], sizes = [2, 48], strides = [1, 1]} : vector<2x144xf32> to vector<2x48xf32>
    %347 = arith.addf %345, %346 : vector<2x48xf32>
    %348 = arith.negf %347 : vector<2x48xf32>
    %349 = math.exp %348 : vector<2x48xf32>
    %cst_74 = arith.constant 1.000000e+00 : f32
    %350 = vector.broadcast %cst_74 : f32 to vector<2x48xf32>
    %351 = arith.addf %350, %349 : vector<2x48xf32>
    %352 = arith.divf %350, %351 : vector<2x48xf32>
    %353 = vector.extract_strided_slice %334 {offsets = [0, 96], sizes = [2, 48], strides = [1, 1]} : vector<2x144xf32> to vector<2x48xf32>
    %354 = vector.extract_strided_slice %336 {offsets = [0, 96], sizes = [2, 48], strides = [1, 1]} : vector<2x144xf32> to vector<2x48xf32>
    %355 = arith.mulf %344, %354 : vector<2x48xf32>
    %356 = arith.addf %353, %355 : vector<2x48xf32>
    %357 = math.tanh %356 : vector<2x48xf32>
    %cst_75 = arith.constant 1.000000e+00 : f32
    %358 = vector.broadcast %cst_75 : f32 to vector<2x48xf32>
    %359 = arith.subf %358, %352 : vector<2x48xf32>
    %360 = arith.mulf %359, %357 : vector<2x48xf32>
    %361 = arith.mulf %352, %331 : vector<2x48xf32>
    %362 = arith.addf %360, %361 : vector<2x48xf32>
    %363 = vector.extract_strided_slice %362 {offsets = [0, 0], sizes = [2, 24], strides = [1, 1]} : vector<2x48xf32> to vector<2x24xf32>
    %364 = vector.extract_strided_slice %362 {offsets = [0, 24], sizes = [2, 24], strides = [1, 1]} : vector<2x48xf32> to vector<2x24xf32>
    %365 = vector.extract_strided_slice %326 {offsets = [2, 0], sizes = [2, 144], strides = [1, 1]} : vector<16x144xf32> to vector<2x144xf32>
    %366 = vector.extract_strided_slice %326 {offsets = [12, 0], sizes = [2, 144], strides = [1, 1]} : vector<16x144xf32> to vector<2x144xf32>
    %367 = arith.select %38, %365, %366 : vector<2x144xi1>, vector<2x144xf32>
    %cst_76 = arith.constant dense<0.000000e+00> : vector<2x144xf32>
    %368 = tpu.matmul %362, %327, %cst_76 {dimension_numbers = #tpu.dot_dimension_numbers<[1], [0], [0], [1], [0, 0, 1, 1], [], []>} : vector<2x48xf32>, vector<48x144xf32>, vector<2x144xf32> -> vector<2x144xf32>
    %369 = arith.addf %368, %330 : vector<2x144xf32>
    %370 = vector.extract_strided_slice %367 {offsets = [0, 0], sizes = [2, 48], strides = [1, 1]} : vector<2x144xf32> to vector<2x48xf32>
    %371 = vector.extract_strided_slice %369 {offsets = [0, 0], sizes = [2, 48], strides = [1, 1]} : vector<2x144xf32> to vector<2x48xf32>
    %372 = arith.addf %370, %371 : vector<2x48xf32>
    %373 = arith.negf %372 : vector<2x48xf32>
    %374 = math.exp %373 : vector<2x48xf32>
    %cst_77 = arith.constant 1.000000e+00 : f32
    %375 = vector.broadcast %cst_77 : f32 to vector<2x48xf32>
    %376 = arith.addf %375, %374 : vector<2x48xf32>
    %377 = arith.divf %375, %376 : vector<2x48xf32>
    %378 = vector.extract_strided_slice %367 {offsets = [0, 48], sizes = [2, 48], strides = [1, 1]} : vector<2x144xf32> to vector<2x48xf32>
    %379 = vector.extract_strided_slice %369 {offsets = [0, 48], sizes = [2, 48], strides = [1, 1]} : vector<2x144xf32> to vector<2x48xf32>
    %380 = arith.addf %378, %379 : vector<2x48xf32>
    %381 = arith.negf %380 : vector<2x48xf32>
    %382 = math.exp %381 : vector<2x48xf32>
    %cst_78 = arith.constant 1.000000e+00 : f32
    %383 = vector.broadcast %cst_78 : f32 to vector<2x48xf32>
    %384 = arith.addf %383, %382 : vector<2x48xf32>
    %385 = arith.divf %383, %384 : vector<2x48xf32>
    %386 = vector.extract_strided_slice %367 {offsets = [0, 96], sizes = [2, 48], strides = [1, 1]} : vector<2x144xf32> to vector<2x48xf32>
    %387 = vector.extract_strided_slice %369 {offsets = [0, 96], sizes = [2, 48], strides = [1, 1]} : vector<2x144xf32> to vector<2x48xf32>
    %388 = arith.mulf %377, %387 : vector<2x48xf32>
    %389 = arith.addf %386, %388 : vector<2x48xf32>
    %390 = math.tanh %389 : vector<2x48xf32>
    %cst_79 = arith.constant 1.000000e+00 : f32
    %391 = vector.broadcast %cst_79 : f32 to vector<2x48xf32>
    %392 = arith.subf %391, %385 : vector<2x48xf32>
    %393 = arith.mulf %392, %390 : vector<2x48xf32>
    %394 = arith.mulf %385, %362 : vector<2x48xf32>
    %395 = arith.addf %393, %394 : vector<2x48xf32>
    %396 = vector.extract_strided_slice %395 {offsets = [0, 0], sizes = [2, 24], strides = [1, 1]} : vector<2x48xf32> to vector<2x24xf32>
    %397 = vector.extract_strided_slice %395 {offsets = [0, 24], sizes = [2, 24], strides = [1, 1]} : vector<2x48xf32> to vector<2x24xf32>
    %398 = vector.extract_strided_slice %326 {offsets = [4, 0], sizes = [2, 144], strides = [1, 1]} : vector<16x144xf32> to vector<2x144xf32>
    %399 = vector.extract_strided_slice %326 {offsets = [10, 0], sizes = [2, 144], strides = [1, 1]} : vector<16x144xf32> to vector<2x144xf32>
    %400 = arith.select %38, %398, %399 : vector<2x144xi1>, vector<2x144xf32>
    %cst_80 = arith.constant dense<0.000000e+00> : vector<2x144xf32>
    %401 = tpu.matmul %395, %327, %cst_80 {dimension_numbers = #tpu.dot_dimension_numbers<[1], [0], [0], [1], [0, 0, 1, 1], [], []>} : vector<2x48xf32>, vector<48x144xf32>, vector<2x144xf32> -> vector<2x144xf32>
    %402 = arith.addf %401, %330 : vector<2x144xf32>
    %403 = vector.extract_strided_slice %400 {offsets = [0, 0], sizes = [2, 48], strides = [1, 1]} : vector<2x144xf32> to vector<2x48xf32>
    %404 = vector.extract_strided_slice %402 {offsets = [0, 0], sizes = [2, 48], strides = [1, 1]} : vector<2x144xf32> to vector<2x48xf32>
    %405 = arith.addf %403, %404 : vector<2x48xf32>
    %406 = arith.negf %405 : vector<2x48xf32>
    %407 = math.exp %406 : vector<2x48xf32>
    %cst_81 = arith.constant 1.000000e+00 : f32
    %408 = vector.broadcast %cst_81 : f32 to vector<2x48xf32>
    %409 = arith.addf %408, %407 : vector<2x48xf32>
    %410 = arith.divf %408, %409 : vector<2x48xf32>
    %411 = vector.extract_strided_slice %400 {offsets = [0, 48], sizes = [2, 48], strides = [1, 1]} : vector<2x144xf32> to vector<2x48xf32>
    %412 = vector.extract_strided_slice %402 {offsets = [0, 48], sizes = [2, 48], strides = [1, 1]} : vector<2x144xf32> to vector<2x48xf32>
    %413 = arith.addf %411, %412 : vector<2x48xf32>
    %414 = arith.negf %413 : vector<2x48xf32>
    %415 = math.exp %414 : vector<2x48xf32>
    %cst_82 = arith.constant 1.000000e+00 : f32
    %416 = vector.broadcast %cst_82 : f32 to vector<2x48xf32>
    %417 = arith.addf %416, %415 : vector<2x48xf32>
    %418 = arith.divf %416, %417 : vector<2x48xf32>
    %419 = vector.extract_strided_slice %400 {offsets = [0, 96], sizes = [2, 48], strides = [1, 1]} : vector<2x144xf32> to vector<2x48xf32>
    %420 = vector.extract_strided_slice %402 {offsets = [0, 96], sizes = [2, 48], strides = [1, 1]} : vector<2x144xf32> to vector<2x48xf32>
    %421 = arith.mulf %410, %420 : vector<2x48xf32>
    %422 = arith.addf %419, %421 : vector<2x48xf32>
    %423 = math.tanh %422 : vector<2x48xf32>
    %cst_83 = arith.constant 1.000000e+00 : f32
    %424 = vector.broadcast %cst_83 : f32 to vector<2x48xf32>
    %425 = arith.subf %424, %418 : vector<2x48xf32>
    %426 = arith.mulf %425, %423 : vector<2x48xf32>
    %427 = arith.mulf %418, %395 : vector<2x48xf32>
    %428 = arith.addf %426, %427 : vector<2x48xf32>
    %429 = vector.extract_strided_slice %428 {offsets = [0, 0], sizes = [2, 24], strides = [1, 1]} : vector<2x48xf32> to vector<2x24xf32>
    %430 = vector.extract_strided_slice %428 {offsets = [0, 24], sizes = [2, 24], strides = [1, 1]} : vector<2x48xf32> to vector<2x24xf32>
    %431 = vector.extract_strided_slice %326 {offsets = [6, 0], sizes = [2, 144], strides = [1, 1]} : vector<16x144xf32> to vector<2x144xf32>
    %432 = vector.extract_strided_slice %326 {offsets = [8, 0], sizes = [2, 144], strides = [1, 1]} : vector<16x144xf32> to vector<2x144xf32>
    %433 = arith.select %38, %431, %432 : vector<2x144xi1>, vector<2x144xf32>
    %cst_84 = arith.constant dense<0.000000e+00> : vector<2x144xf32>
    %434 = tpu.matmul %428, %327, %cst_84 {dimension_numbers = #tpu.dot_dimension_numbers<[1], [0], [0], [1], [0, 0, 1, 1], [], []>} : vector<2x48xf32>, vector<48x144xf32>, vector<2x144xf32> -> vector<2x144xf32>
    %435 = arith.addf %434, %330 : vector<2x144xf32>
    %436 = vector.extract_strided_slice %433 {offsets = [0, 0], sizes = [2, 48], strides = [1, 1]} : vector<2x144xf32> to vector<2x48xf32>
    %437 = vector.extract_strided_slice %435 {offsets = [0, 0], sizes = [2, 48], strides = [1, 1]} : vector<2x144xf32> to vector<2x48xf32>
    %438 = arith.addf %436, %437 : vector<2x48xf32>
    %439 = arith.negf %438 : vector<2x48xf32>
    %440 = math.exp %439 : vector<2x48xf32>
    %cst_85 = arith.constant 1.000000e+00 : f32
    %441 = vector.broadcast %cst_85 : f32 to vector<2x48xf32>
    %442 = arith.addf %441, %440 : vector<2x48xf32>
    %443 = arith.divf %441, %442 : vector<2x48xf32>
    %444 = vector.extract_strided_slice %433 {offsets = [0, 48], sizes = [2, 48], strides = [1, 1]} : vector<2x144xf32> to vector<2x48xf32>
    %445 = vector.extract_strided_slice %435 {offsets = [0, 48], sizes = [2, 48], strides = [1, 1]} : vector<2x144xf32> to vector<2x48xf32>
    %446 = arith.addf %444, %445 : vector<2x48xf32>
    %447 = arith.negf %446 : vector<2x48xf32>
    %448 = math.exp %447 : vector<2x48xf32>
    %cst_86 = arith.constant 1.000000e+00 : f32
    %449 = vector.broadcast %cst_86 : f32 to vector<2x48xf32>
    %450 = arith.addf %449, %448 : vector<2x48xf32>
    %451 = arith.divf %449, %450 : vector<2x48xf32>
    %452 = vector.extract_strided_slice %433 {offsets = [0, 96], sizes = [2, 48], strides = [1, 1]} : vector<2x144xf32> to vector<2x48xf32>
    %453 = vector.extract_strided_slice %435 {offsets = [0, 96], sizes = [2, 48], strides = [1, 1]} : vector<2x144xf32> to vector<2x48xf32>
    %454 = arith.mulf %443, %453 : vector<2x48xf32>
    %455 = arith.addf %452, %454 : vector<2x48xf32>
    %456 = math.tanh %455 : vector<2x48xf32>
    %cst_87 = arith.constant 1.000000e+00 : f32
    %457 = vector.broadcast %cst_87 : f32 to vector<2x48xf32>
    %458 = arith.subf %457, %451 : vector<2x48xf32>
    %459 = arith.mulf %458, %456 : vector<2x48xf32>
    %460 = arith.mulf %451, %428 : vector<2x48xf32>
    %461 = arith.addf %459, %460 : vector<2x48xf32>
    %462 = vector.extract_strided_slice %461 {offsets = [0, 0], sizes = [2, 24], strides = [1, 1]} : vector<2x48xf32> to vector<2x24xf32>
    %463 = vector.extract_strided_slice %461 {offsets = [0, 24], sizes = [2, 24], strides = [1, 1]} : vector<2x48xf32> to vector<2x24xf32>
    %464 = vector.extract_strided_slice %326 {offsets = [8, 0], sizes = [2, 144], strides = [1, 1]} : vector<16x144xf32> to vector<2x144xf32>
    %465 = vector.extract_strided_slice %326 {offsets = [6, 0], sizes = [2, 144], strides = [1, 1]} : vector<16x144xf32> to vector<2x144xf32>
    %466 = arith.select %38, %464, %465 : vector<2x144xi1>, vector<2x144xf32>
    %cst_88 = arith.constant dense<0.000000e+00> : vector<2x144xf32>
    %467 = tpu.matmul %461, %327, %cst_88 {dimension_numbers = #tpu.dot_dimension_numbers<[1], [0], [0], [1], [0, 0, 1, 1], [], []>} : vector<2x48xf32>, vector<48x144xf32>, vector<2x144xf32> -> vector<2x144xf32>
    %468 = arith.addf %467, %330 : vector<2x144xf32>
    %469 = vector.extract_strided_slice %466 {offsets = [0, 0], sizes = [2, 48], strides = [1, 1]} : vector<2x144xf32> to vector<2x48xf32>
    %470 = vector.extract_strided_slice %468 {offsets = [0, 0], sizes = [2, 48], strides = [1, 1]} : vector<2x144xf32> to vector<2x48xf32>
    %471 = arith.addf %469, %470 : vector<2x48xf32>
    %472 = arith.negf %471 : vector<2x48xf32>
    %473 = math.exp %472 : vector<2x48xf32>
    %cst_89 = arith.constant 1.000000e+00 : f32
    %474 = vector.broadcast %cst_89 : f32 to vector<2x48xf32>
    %475 = arith.addf %474, %473 : vector<2x48xf32>
    %476 = arith.divf %474, %475 : vector<2x48xf32>
    %477 = vector.extract_strided_slice %466 {offsets = [0, 48], sizes = [2, 48], strides = [1, 1]} : vector<2x144xf32> to vector<2x48xf32>
    %478 = vector.extract_strided_slice %468 {offsets = [0, 48], sizes = [2, 48], strides = [1, 1]} : vector<2x144xf32> to vector<2x48xf32>
    %479 = arith.addf %477, %478 : vector<2x48xf32>
    %480 = arith.negf %479 : vector<2x48xf32>
    %481 = math.exp %480 : vector<2x48xf32>
    %cst_90 = arith.constant 1.000000e+00 : f32
    %482 = vector.broadcast %cst_90 : f32 to vector<2x48xf32>
    %483 = arith.addf %482, %481 : vector<2x48xf32>
    %484 = arith.divf %482, %483 : vector<2x48xf32>
    %485 = vector.extract_strided_slice %466 {offsets = [0, 96], sizes = [2, 48], strides = [1, 1]} : vector<2x144xf32> to vector<2x48xf32>
    %486 = vector.extract_strided_slice %468 {offsets = [0, 96], sizes = [2, 48], strides = [1, 1]} : vector<2x144xf32> to vector<2x48xf32>
    %487 = arith.mulf %476, %486 : vector<2x48xf32>
    %488 = arith.addf %485, %487 : vector<2x48xf32>
    %489 = math.tanh %488 : vector<2x48xf32>
    %cst_91 = arith.constant 1.000000e+00 : f32
    %490 = vector.broadcast %cst_91 : f32 to vector<2x48xf32>
    %491 = arith.subf %490, %484 : vector<2x48xf32>
    %492 = arith.mulf %491, %489 : vector<2x48xf32>
    %493 = arith.mulf %484, %461 : vector<2x48xf32>
    %494 = arith.addf %492, %493 : vector<2x48xf32>
    %495 = vector.extract_strided_slice %494 {offsets = [0, 0], sizes = [2, 24], strides = [1, 1]} : vector<2x48xf32> to vector<2x24xf32>
    %496 = vector.extract_strided_slice %494 {offsets = [0, 24], sizes = [2, 24], strides = [1, 1]} : vector<2x48xf32> to vector<2x24xf32>
    %497 = vector.extract_strided_slice %326 {offsets = [10, 0], sizes = [2, 144], strides = [1, 1]} : vector<16x144xf32> to vector<2x144xf32>
    %498 = vector.extract_strided_slice %326 {offsets = [4, 0], sizes = [2, 144], strides = [1, 1]} : vector<16x144xf32> to vector<2x144xf32>
    %499 = arith.select %38, %497, %498 : vector<2x144xi1>, vector<2x144xf32>
    %cst_92 = arith.constant dense<0.000000e+00> : vector<2x144xf32>
    %500 = tpu.matmul %494, %327, %cst_92 {dimension_numbers = #tpu.dot_dimension_numbers<[1], [0], [0], [1], [0, 0, 1, 1], [], []>} : vector<2x48xf32>, vector<48x144xf32>, vector<2x144xf32> -> vector<2x144xf32>
    %501 = arith.addf %500, %330 : vector<2x144xf32>
    %502 = vector.extract_strided_slice %499 {offsets = [0, 0], sizes = [2, 48], strides = [1, 1]} : vector<2x144xf32> to vector<2x48xf32>
    %503 = vector.extract_strided_slice %501 {offsets = [0, 0], sizes = [2, 48], strides = [1, 1]} : vector<2x144xf32> to vector<2x48xf32>
    %504 = arith.addf %502, %503 : vector<2x48xf32>
    %505 = arith.negf %504 : vector<2x48xf32>
    %506 = math.exp %505 : vector<2x48xf32>
    %cst_93 = arith.constant 1.000000e+00 : f32
    %507 = vector.broadcast %cst_93 : f32 to vector<2x48xf32>
    %508 = arith.addf %507, %506 : vector<2x48xf32>
    %509 = arith.divf %507, %508 : vector<2x48xf32>
    %510 = vector.extract_strided_slice %499 {offsets = [0, 48], sizes = [2, 48], strides = [1, 1]} : vector<2x144xf32> to vector<2x48xf32>
    %511 = vector.extract_strided_slice %501 {offsets = [0, 48], sizes = [2, 48], strides = [1, 1]} : vector<2x144xf32> to vector<2x48xf32>
    %512 = arith.addf %510, %511 : vector<2x48xf32>
    %513 = arith.negf %512 : vector<2x48xf32>
    %514 = math.exp %513 : vector<2x48xf32>
    %cst_94 = arith.constant 1.000000e+00 : f32
    %515 = vector.broadcast %cst_94 : f32 to vector<2x48xf32>
    %516 = arith.addf %515, %514 : vector<2x48xf32>
    %517 = arith.divf %515, %516 : vector<2x48xf32>
    %518 = vector.extract_strided_slice %499 {offsets = [0, 96], sizes = [2, 48], strides = [1, 1]} : vector<2x144xf32> to vector<2x48xf32>
    %519 = vector.extract_strided_slice %501 {offsets = [0, 96], sizes = [2, 48], strides = [1, 1]} : vector<2x144xf32> to vector<2x48xf32>
    %520 = arith.mulf %509, %519 : vector<2x48xf32>
    %521 = arith.addf %518, %520 : vector<2x48xf32>
    %522 = math.tanh %521 : vector<2x48xf32>
    %cst_95 = arith.constant 1.000000e+00 : f32
    %523 = vector.broadcast %cst_95 : f32 to vector<2x48xf32>
    %524 = arith.subf %523, %517 : vector<2x48xf32>
    %525 = arith.mulf %524, %522 : vector<2x48xf32>
    %526 = arith.mulf %517, %494 : vector<2x48xf32>
    %527 = arith.addf %525, %526 : vector<2x48xf32>
    %528 = vector.extract_strided_slice %527 {offsets = [0, 0], sizes = [2, 24], strides = [1, 1]} : vector<2x48xf32> to vector<2x24xf32>
    %529 = vector.extract_strided_slice %527 {offsets = [0, 24], sizes = [2, 24], strides = [1, 1]} : vector<2x48xf32> to vector<2x24xf32>
    %530 = vector.extract_strided_slice %326 {offsets = [12, 0], sizes = [2, 144], strides = [1, 1]} : vector<16x144xf32> to vector<2x144xf32>
    %531 = vector.extract_strided_slice %326 {offsets = [2, 0], sizes = [2, 144], strides = [1, 1]} : vector<16x144xf32> to vector<2x144xf32>
    %532 = arith.select %38, %530, %531 : vector<2x144xi1>, vector<2x144xf32>
    %cst_96 = arith.constant dense<0.000000e+00> : vector<2x144xf32>
    %533 = tpu.matmul %527, %327, %cst_96 {dimension_numbers = #tpu.dot_dimension_numbers<[1], [0], [0], [1], [0, 0, 1, 1], [], []>} : vector<2x48xf32>, vector<48x144xf32>, vector<2x144xf32> -> vector<2x144xf32>
    %534 = arith.addf %533, %330 : vector<2x144xf32>
    %535 = vector.extract_strided_slice %532 {offsets = [0, 0], sizes = [2, 48], strides = [1, 1]} : vector<2x144xf32> to vector<2x48xf32>
    %536 = vector.extract_strided_slice %534 {offsets = [0, 0], sizes = [2, 48], strides = [1, 1]} : vector<2x144xf32> to vector<2x48xf32>
    %537 = arith.addf %535, %536 : vector<2x48xf32>
    %538 = arith.negf %537 : vector<2x48xf32>
    %539 = math.exp %538 : vector<2x48xf32>
    %cst_97 = arith.constant 1.000000e+00 : f32
    %540 = vector.broadcast %cst_97 : f32 to vector<2x48xf32>
    %541 = arith.addf %540, %539 : vector<2x48xf32>
    %542 = arith.divf %540, %541 : vector<2x48xf32>
    %543 = vector.extract_strided_slice %532 {offsets = [0, 48], sizes = [2, 48], strides = [1, 1]} : vector<2x144xf32> to vector<2x48xf32>
    %544 = vector.extract_strided_slice %534 {offsets = [0, 48], sizes = [2, 48], strides = [1, 1]} : vector<2x144xf32> to vector<2x48xf32>
    %545 = arith.addf %543, %544 : vector<2x48xf32>
    %546 = arith.negf %545 : vector<2x48xf32>
    %547 = math.exp %546 : vector<2x48xf32>
    %cst_98 = arith.constant 1.000000e+00 : f32
    %548 = vector.broadcast %cst_98 : f32 to vector<2x48xf32>
    %549 = arith.addf %548, %547 : vector<2x48xf32>
    %550 = arith.divf %548, %549 : vector<2x48xf32>
    %551 = vector.extract_strided_slice %532 {offsets = [0, 96], sizes = [2, 48], strides = [1, 1]} : vector<2x144xf32> to vector<2x48xf32>
    %552 = vector.extract_strided_slice %534 {offsets = [0, 96], sizes = [2, 48], strides = [1, 1]} : vector<2x144xf32> to vector<2x48xf32>
    %553 = arith.mulf %542, %552 : vector<2x48xf32>
    %554 = arith.addf %551, %553 : vector<2x48xf32>
    %555 = math.tanh %554 : vector<2x48xf32>
    %cst_99 = arith.constant 1.000000e+00 : f32
    %556 = vector.broadcast %cst_99 : f32 to vector<2x48xf32>
    %557 = arith.subf %556, %550 : vector<2x48xf32>
    %558 = arith.mulf %557, %555 : vector<2x48xf32>
    %559 = arith.mulf %550, %527 : vector<2x48xf32>
    %560 = arith.addf %558, %559 : vector<2x48xf32>
    %561 = vector.extract_strided_slice %560 {offsets = [0, 0], sizes = [2, 24], strides = [1, 1]} : vector<2x48xf32> to vector<2x24xf32>
    %562 = vector.extract_strided_slice %560 {offsets = [0, 24], sizes = [2, 24], strides = [1, 1]} : vector<2x48xf32> to vector<2x24xf32>
    %563 = vector.extract_strided_slice %326 {offsets = [14, 0], sizes = [2, 144], strides = [1, 1]} : vector<16x144xf32> to vector<2x144xf32>
    %564 = vector.extract_strided_slice %326 {offsets = [0, 0], sizes = [2, 144], strides = [1, 1]} : vector<16x144xf32> to vector<2x144xf32>
    %565 = arith.select %38, %563, %564 : vector<2x144xi1>, vector<2x144xf32>
    %cst_100 = arith.constant dense<0.000000e+00> : vector<2x144xf32>
    %566 = tpu.matmul %560, %327, %cst_100 {dimension_numbers = #tpu.dot_dimension_numbers<[1], [0], [0], [1], [0, 0, 1, 1], [], []>} : vector<2x48xf32>, vector<48x144xf32>, vector<2x144xf32> -> vector<2x144xf32>
    %567 = arith.addf %566, %330 : vector<2x144xf32>
    %568 = vector.extract_strided_slice %565 {offsets = [0, 0], sizes = [2, 48], strides = [1, 1]} : vector<2x144xf32> to vector<2x48xf32>
    %569 = vector.extract_strided_slice %567 {offsets = [0, 0], sizes = [2, 48], strides = [1, 1]} : vector<2x144xf32> to vector<2x48xf32>
    %570 = arith.addf %568, %569 : vector<2x48xf32>
    %571 = arith.negf %570 : vector<2x48xf32>
    %572 = math.exp %571 : vector<2x48xf32>
    %cst_101 = arith.constant 1.000000e+00 : f32
    %573 = vector.broadcast %cst_101 : f32 to vector<2x48xf32>
    %574 = arith.addf %573, %572 : vector<2x48xf32>
    %575 = arith.divf %573, %574 : vector<2x48xf32>
    %576 = vector.extract_strided_slice %565 {offsets = [0, 48], sizes = [2, 48], strides = [1, 1]} : vector<2x144xf32> to vector<2x48xf32>
    %577 = vector.extract_strided_slice %567 {offsets = [0, 48], sizes = [2, 48], strides = [1, 1]} : vector<2x144xf32> to vector<2x48xf32>
    %578 = arith.addf %576, %577 : vector<2x48xf32>
    %579 = arith.negf %578 : vector<2x48xf32>
    %580 = math.exp %579 : vector<2x48xf32>
    %cst_102 = arith.constant 1.000000e+00 : f32
    %581 = vector.broadcast %cst_102 : f32 to vector<2x48xf32>
    %582 = arith.addf %581, %580 : vector<2x48xf32>
    %583 = arith.divf %581, %582 : vector<2x48xf32>
    %584 = vector.extract_strided_slice %565 {offsets = [0, 96], sizes = [2, 48], strides = [1, 1]} : vector<2x144xf32> to vector<2x48xf32>
    %585 = vector.extract_strided_slice %567 {offsets = [0, 96], sizes = [2, 48], strides = [1, 1]} : vector<2x144xf32> to vector<2x48xf32>
    %586 = arith.mulf %575, %585 : vector<2x48xf32>
    %587 = arith.addf %584, %586 : vector<2x48xf32>
    %588 = math.tanh %587 : vector<2x48xf32>
    %cst_103 = arith.constant 1.000000e+00 : f32
    %589 = vector.broadcast %cst_103 : f32 to vector<2x48xf32>
    %590 = arith.subf %589, %583 : vector<2x48xf32>
    %591 = arith.mulf %590, %588 : vector<2x48xf32>
    %592 = arith.mulf %583, %560 : vector<2x48xf32>
    %593 = arith.addf %591, %592 : vector<2x48xf32>
    %594 = vector.extract_strided_slice %593 {offsets = [0, 0], sizes = [2, 24], strides = [1, 1]} : vector<2x48xf32> to vector<2x24xf32>
    %595 = vector.extract_strided_slice %593 {offsets = [0, 24], sizes = [2, 24], strides = [1, 1]} : vector<2x48xf32> to vector<2x24xf32>
    %596 = tpu.concatenate %363, %595 in 1 : vector<2x24xf32>, vector<2x24xf32> -> vector<2x48xf32>
    %597 = tpu.concatenate %396, %562 in 1 : vector<2x24xf32>, vector<2x24xf32> -> vector<2x48xf32>
    %598 = tpu.concatenate %429, %529 in 1 : vector<2x24xf32>, vector<2x24xf32> -> vector<2x48xf32>
    %599 = tpu.concatenate %462, %496 in 1 : vector<2x24xf32>, vector<2x24xf32> -> vector<2x48xf32>
    %600 = tpu.concatenate %495, %463 in 1 : vector<2x24xf32>, vector<2x24xf32> -> vector<2x48xf32>
    %601 = tpu.concatenate %528, %430 in 1 : vector<2x24xf32>, vector<2x24xf32> -> vector<2x48xf32>
    %602 = tpu.concatenate %561, %397 in 1 : vector<2x24xf32>, vector<2x24xf32> -> vector<2x48xf32>
    %603 = tpu.concatenate %594, %364 in 1 : vector<2x24xf32>, vector<2x24xf32> -> vector<2x48xf32>
    %604 = tpu.concatenate %596, %597, %598, %599, %600, %601, %602, %603 in 0 : vector<2x48xf32>, vector<2x48xf32>, vector<2x48xf32>, vector<2x48xf32>, vector<2x48xf32>, vector<2x48xf32>, vector<2x48xf32>, vector<2x48xf32> -> vector<16x48xf32>
    %c0_104 = arith.constant 0 : index
    %c0_105 = arith.constant 0 : index
    %605 = vector.load %arg18[%c0_104, %c0_105] : memref<48x144xf32, #tpu.memory_space<vmem>>, vector<48x144xf32>
    %cst_106 = arith.constant dense<0.000000e+00> : vector<16x144xf32>
    %606 = tpu.matmul %604, %605, %cst_106 {dimension_numbers = #tpu.dot_dimension_numbers<[1], [0], [0], [1], [0, 0, 1, 1], [], []>} : vector<16x48xf32>, vector<48x144xf32>, vector<16x144xf32> -> vector<16x144xf32>
    %c0_107 = arith.constant 0 : index
    %c0_108 = arith.constant 0 : index
    %607 = vector.load %arg19[%c0_107, %c0_108] : memref<1x144xf32, #tpu.memory_space<vmem>>, vector<1x144xf32>
    %608 = vector.broadcast %607 : vector<1x144xf32> to vector<16x144xf32>
    %609 = arith.addf %606, %608 : vector<16x144xf32>
    %c0_109 = arith.constant 0 : index
    %c0_110 = arith.constant 0 : index
    %610 = vector.load %arg20[%c0_109, %c0_110] : memref<48x144xf32, #tpu.memory_space<vmem>>, vector<48x144xf32>
    %c0_111 = arith.constant 0 : index
    %c0_112 = arith.constant 0 : index
    %611 = vector.load %arg21[%c0_111, %c0_112] : memref<1x144xf32, #tpu.memory_space<vmem>>, vector<1x144xf32>
    %612 = vector.shape_cast %611 : vector<1x144xf32> to vector<1x144xf32>
    %613 = vector.broadcast %612 : vector<1x144xf32> to vector<2x144xf32>
    %cst_113 = arith.constant 0.000000e+00 : f32
    %614 = vector.broadcast %cst_113 : f32 to vector<2x48xf32>
    %615 = vector.extract_strided_slice %609 {offsets = [0, 0], sizes = [2, 144], strides = [1, 1]} : vector<16x144xf32> to vector<2x144xf32>
    %616 = vector.extract_strided_slice %609 {offsets = [14, 0], sizes = [2, 144], strides = [1, 1]} : vector<16x144xf32> to vector<2x144xf32>
    %617 = arith.select %38, %615, %616 : vector<2x144xi1>, vector<2x144xf32>
    %cst_114 = arith.constant dense<0.000000e+00> : vector<2x144xf32>
    %618 = tpu.matmul %614, %610, %cst_114 {dimension_numbers = #tpu.dot_dimension_numbers<[1], [0], [0], [1], [0, 0, 1, 1], [], []>} : vector<2x48xf32>, vector<48x144xf32>, vector<2x144xf32> -> vector<2x144xf32>
    %619 = arith.addf %618, %613 : vector<2x144xf32>
    %620 = vector.extract_strided_slice %617 {offsets = [0, 0], sizes = [2, 48], strides = [1, 1]} : vector<2x144xf32> to vector<2x48xf32>
    %621 = vector.extract_strided_slice %619 {offsets = [0, 0], sizes = [2, 48], strides = [1, 1]} : vector<2x144xf32> to vector<2x48xf32>
    %622 = arith.addf %620, %621 : vector<2x48xf32>
    %623 = arith.negf %622 : vector<2x48xf32>
    %624 = math.exp %623 : vector<2x48xf32>
    %cst_115 = arith.constant 1.000000e+00 : f32
    %625 = vector.broadcast %cst_115 : f32 to vector<2x48xf32>
    %626 = arith.addf %625, %624 : vector<2x48xf32>
    %627 = arith.divf %625, %626 : vector<2x48xf32>
    %628 = vector.extract_strided_slice %617 {offsets = [0, 48], sizes = [2, 48], strides = [1, 1]} : vector<2x144xf32> to vector<2x48xf32>
    %629 = vector.extract_strided_slice %619 {offsets = [0, 48], sizes = [2, 48], strides = [1, 1]} : vector<2x144xf32> to vector<2x48xf32>
    %630 = arith.addf %628, %629 : vector<2x48xf32>
    %631 = arith.negf %630 : vector<2x48xf32>
    %632 = math.exp %631 : vector<2x48xf32>
    %cst_116 = arith.constant 1.000000e+00 : f32
    %633 = vector.broadcast %cst_116 : f32 to vector<2x48xf32>
    %634 = arith.addf %633, %632 : vector<2x48xf32>
    %635 = arith.divf %633, %634 : vector<2x48xf32>
    %636 = vector.extract_strided_slice %617 {offsets = [0, 96], sizes = [2, 48], strides = [1, 1]} : vector<2x144xf32> to vector<2x48xf32>
    %637 = vector.extract_strided_slice %619 {offsets = [0, 96], sizes = [2, 48], strides = [1, 1]} : vector<2x144xf32> to vector<2x48xf32>
    %638 = arith.mulf %627, %637 : vector<2x48xf32>
    %639 = arith.addf %636, %638 : vector<2x48xf32>
    %640 = math.tanh %639 : vector<2x48xf32>
    %cst_117 = arith.constant 1.000000e+00 : f32
    %641 = vector.broadcast %cst_117 : f32 to vector<2x48xf32>
    %642 = arith.subf %641, %635 : vector<2x48xf32>
    %643 = arith.mulf %642, %640 : vector<2x48xf32>
    %644 = arith.mulf %635, %614 : vector<2x48xf32>
    %645 = arith.addf %643, %644 : vector<2x48xf32>
    %646 = vector.extract_strided_slice %645 {offsets = [0, 0], sizes = [2, 24], strides = [1, 1]} : vector<2x48xf32> to vector<2x24xf32>
    %647 = vector.extract_strided_slice %645 {offsets = [0, 24], sizes = [2, 24], strides = [1, 1]} : vector<2x48xf32> to vector<2x24xf32>
    %648 = vector.extract_strided_slice %609 {offsets = [2, 0], sizes = [2, 144], strides = [1, 1]} : vector<16x144xf32> to vector<2x144xf32>
    %649 = vector.extract_strided_slice %609 {offsets = [12, 0], sizes = [2, 144], strides = [1, 1]} : vector<16x144xf32> to vector<2x144xf32>
    %650 = arith.select %38, %648, %649 : vector<2x144xi1>, vector<2x144xf32>
    %cst_118 = arith.constant dense<0.000000e+00> : vector<2x144xf32>
    %651 = tpu.matmul %645, %610, %cst_118 {dimension_numbers = #tpu.dot_dimension_numbers<[1], [0], [0], [1], [0, 0, 1, 1], [], []>} : vector<2x48xf32>, vector<48x144xf32>, vector<2x144xf32> -> vector<2x144xf32>
    %652 = arith.addf %651, %613 : vector<2x144xf32>
    %653 = vector.extract_strided_slice %650 {offsets = [0, 0], sizes = [2, 48], strides = [1, 1]} : vector<2x144xf32> to vector<2x48xf32>
    %654 = vector.extract_strided_slice %652 {offsets = [0, 0], sizes = [2, 48], strides = [1, 1]} : vector<2x144xf32> to vector<2x48xf32>
    %655 = arith.addf %653, %654 : vector<2x48xf32>
    %656 = arith.negf %655 : vector<2x48xf32>
    %657 = math.exp %656 : vector<2x48xf32>
    %cst_119 = arith.constant 1.000000e+00 : f32
    %658 = vector.broadcast %cst_119 : f32 to vector<2x48xf32>
    %659 = arith.addf %658, %657 : vector<2x48xf32>
    %660 = arith.divf %658, %659 : vector<2x48xf32>
    %661 = vector.extract_strided_slice %650 {offsets = [0, 48], sizes = [2, 48], strides = [1, 1]} : vector<2x144xf32> to vector<2x48xf32>
    %662 = vector.extract_strided_slice %652 {offsets = [0, 48], sizes = [2, 48], strides = [1, 1]} : vector<2x144xf32> to vector<2x48xf32>
    %663 = arith.addf %661, %662 : vector<2x48xf32>
    %664 = arith.negf %663 : vector<2x48xf32>
    %665 = math.exp %664 : vector<2x48xf32>
    %cst_120 = arith.constant 1.000000e+00 : f32
    %666 = vector.broadcast %cst_120 : f32 to vector<2x48xf32>
    %667 = arith.addf %666, %665 : vector<2x48xf32>
    %668 = arith.divf %666, %667 : vector<2x48xf32>
    %669 = vector.extract_strided_slice %650 {offsets = [0, 96], sizes = [2, 48], strides = [1, 1]} : vector<2x144xf32> to vector<2x48xf32>
    %670 = vector.extract_strided_slice %652 {offsets = [0, 96], sizes = [2, 48], strides = [1, 1]} : vector<2x144xf32> to vector<2x48xf32>
    %671 = arith.mulf %660, %670 : vector<2x48xf32>
    %672 = arith.addf %669, %671 : vector<2x48xf32>
    %673 = math.tanh %672 : vector<2x48xf32>
    %cst_121 = arith.constant 1.000000e+00 : f32
    %674 = vector.broadcast %cst_121 : f32 to vector<2x48xf32>
    %675 = arith.subf %674, %668 : vector<2x48xf32>
    %676 = arith.mulf %675, %673 : vector<2x48xf32>
    %677 = arith.mulf %668, %645 : vector<2x48xf32>
    %678 = arith.addf %676, %677 : vector<2x48xf32>
    %679 = vector.extract_strided_slice %678 {offsets = [0, 0], sizes = [2, 24], strides = [1, 1]} : vector<2x48xf32> to vector<2x24xf32>
    %680 = vector.extract_strided_slice %678 {offsets = [0, 24], sizes = [2, 24], strides = [1, 1]} : vector<2x48xf32> to vector<2x24xf32>
    %681 = vector.extract_strided_slice %609 {offsets = [4, 0], sizes = [2, 144], strides = [1, 1]} : vector<16x144xf32> to vector<2x144xf32>
    %682 = vector.extract_strided_slice %609 {offsets = [10, 0], sizes = [2, 144], strides = [1, 1]} : vector<16x144xf32> to vector<2x144xf32>
    %683 = arith.select %38, %681, %682 : vector<2x144xi1>, vector<2x144xf32>
    %cst_122 = arith.constant dense<0.000000e+00> : vector<2x144xf32>
    %684 = tpu.matmul %678, %610, %cst_122 {dimension_numbers = #tpu.dot_dimension_numbers<[1], [0], [0], [1], [0, 0, 1, 1], [], []>} : vector<2x48xf32>, vector<48x144xf32>, vector<2x144xf32> -> vector<2x144xf32>
    %685 = arith.addf %684, %613 : vector<2x144xf32>
    %686 = vector.extract_strided_slice %683 {offsets = [0, 0], sizes = [2, 48], strides = [1, 1]} : vector<2x144xf32> to vector<2x48xf32>
    %687 = vector.extract_strided_slice %685 {offsets = [0, 0], sizes = [2, 48], strides = [1, 1]} : vector<2x144xf32> to vector<2x48xf32>
    %688 = arith.addf %686, %687 : vector<2x48xf32>
    %689 = arith.negf %688 : vector<2x48xf32>
    %690 = math.exp %689 : vector<2x48xf32>
    %cst_123 = arith.constant 1.000000e+00 : f32
    %691 = vector.broadcast %cst_123 : f32 to vector<2x48xf32>
    %692 = arith.addf %691, %690 : vector<2x48xf32>
    %693 = arith.divf %691, %692 : vector<2x48xf32>
    %694 = vector.extract_strided_slice %683 {offsets = [0, 48], sizes = [2, 48], strides = [1, 1]} : vector<2x144xf32> to vector<2x48xf32>
    %695 = vector.extract_strided_slice %685 {offsets = [0, 48], sizes = [2, 48], strides = [1, 1]} : vector<2x144xf32> to vector<2x48xf32>
    %696 = arith.addf %694, %695 : vector<2x48xf32>
    %697 = arith.negf %696 : vector<2x48xf32>
    %698 = math.exp %697 : vector<2x48xf32>
    %cst_124 = arith.constant 1.000000e+00 : f32
    %699 = vector.broadcast %cst_124 : f32 to vector<2x48xf32>
    %700 = arith.addf %699, %698 : vector<2x48xf32>
    %701 = arith.divf %699, %700 : vector<2x48xf32>
    %702 = vector.extract_strided_slice %683 {offsets = [0, 96], sizes = [2, 48], strides = [1, 1]} : vector<2x144xf32> to vector<2x48xf32>
    %703 = vector.extract_strided_slice %685 {offsets = [0, 96], sizes = [2, 48], strides = [1, 1]} : vector<2x144xf32> to vector<2x48xf32>
    %704 = arith.mulf %693, %703 : vector<2x48xf32>
    %705 = arith.addf %702, %704 : vector<2x48xf32>
    %706 = math.tanh %705 : vector<2x48xf32>
    %cst_125 = arith.constant 1.000000e+00 : f32
    %707 = vector.broadcast %cst_125 : f32 to vector<2x48xf32>
    %708 = arith.subf %707, %701 : vector<2x48xf32>
    %709 = arith.mulf %708, %706 : vector<2x48xf32>
    %710 = arith.mulf %701, %678 : vector<2x48xf32>
    %711 = arith.addf %709, %710 : vector<2x48xf32>
    %712 = vector.extract_strided_slice %711 {offsets = [0, 0], sizes = [2, 24], strides = [1, 1]} : vector<2x48xf32> to vector<2x24xf32>
    %713 = vector.extract_strided_slice %711 {offsets = [0, 24], sizes = [2, 24], strides = [1, 1]} : vector<2x48xf32> to vector<2x24xf32>
    %714 = vector.extract_strided_slice %609 {offsets = [6, 0], sizes = [2, 144], strides = [1, 1]} : vector<16x144xf32> to vector<2x144xf32>
    %715 = vector.extract_strided_slice %609 {offsets = [8, 0], sizes = [2, 144], strides = [1, 1]} : vector<16x144xf32> to vector<2x144xf32>
    %716 = arith.select %38, %714, %715 : vector<2x144xi1>, vector<2x144xf32>
    %cst_126 = arith.constant dense<0.000000e+00> : vector<2x144xf32>
    %717 = tpu.matmul %711, %610, %cst_126 {dimension_numbers = #tpu.dot_dimension_numbers<[1], [0], [0], [1], [0, 0, 1, 1], [], []>} : vector<2x48xf32>, vector<48x144xf32>, vector<2x144xf32> -> vector<2x144xf32>
    %718 = arith.addf %717, %613 : vector<2x144xf32>
    %719 = vector.extract_strided_slice %716 {offsets = [0, 0], sizes = [2, 48], strides = [1, 1]} : vector<2x144xf32> to vector<2x48xf32>
    %720 = vector.extract_strided_slice %718 {offsets = [0, 0], sizes = [2, 48], strides = [1, 1]} : vector<2x144xf32> to vector<2x48xf32>
    %721 = arith.addf %719, %720 : vector<2x48xf32>
    %722 = arith.negf %721 : vector<2x48xf32>
    %723 = math.exp %722 : vector<2x48xf32>
    %cst_127 = arith.constant 1.000000e+00 : f32
    %724 = vector.broadcast %cst_127 : f32 to vector<2x48xf32>
    %725 = arith.addf %724, %723 : vector<2x48xf32>
    %726 = arith.divf %724, %725 : vector<2x48xf32>
    %727 = vector.extract_strided_slice %716 {offsets = [0, 48], sizes = [2, 48], strides = [1, 1]} : vector<2x144xf32> to vector<2x48xf32>
    %728 = vector.extract_strided_slice %718 {offsets = [0, 48], sizes = [2, 48], strides = [1, 1]} : vector<2x144xf32> to vector<2x48xf32>
    %729 = arith.addf %727, %728 : vector<2x48xf32>
    %730 = arith.negf %729 : vector<2x48xf32>
    %731 = math.exp %730 : vector<2x48xf32>
    %cst_128 = arith.constant 1.000000e+00 : f32
    %732 = vector.broadcast %cst_128 : f32 to vector<2x48xf32>
    %733 = arith.addf %732, %731 : vector<2x48xf32>
    %734 = arith.divf %732, %733 : vector<2x48xf32>
    %735 = vector.extract_strided_slice %716 {offsets = [0, 96], sizes = [2, 48], strides = [1, 1]} : vector<2x144xf32> to vector<2x48xf32>
    %736 = vector.extract_strided_slice %718 {offsets = [0, 96], sizes = [2, 48], strides = [1, 1]} : vector<2x144xf32> to vector<2x48xf32>
    %737 = arith.mulf %726, %736 : vector<2x48xf32>
    %738 = arith.addf %735, %737 : vector<2x48xf32>
    %739 = math.tanh %738 : vector<2x48xf32>
    %cst_129 = arith.constant 1.000000e+00 : f32
    %740 = vector.broadcast %cst_129 : f32 to vector<2x48xf32>
    %741 = arith.subf %740, %734 : vector<2x48xf32>
    %742 = arith.mulf %741, %739 : vector<2x48xf32>
    %743 = arith.mulf %734, %711 : vector<2x48xf32>
    %744 = arith.addf %742, %743 : vector<2x48xf32>
    %745 = vector.extract_strided_slice %744 {offsets = [0, 0], sizes = [2, 24], strides = [1, 1]} : vector<2x48xf32> to vector<2x24xf32>
    %746 = vector.extract_strided_slice %744 {offsets = [0, 24], sizes = [2, 24], strides = [1, 1]} : vector<2x48xf32> to vector<2x24xf32>
    %747 = vector.extract_strided_slice %609 {offsets = [8, 0], sizes = [2, 144], strides = [1, 1]} : vector<16x144xf32> to vector<2x144xf32>
    %748 = vector.extract_strided_slice %609 {offsets = [6, 0], sizes = [2, 144], strides = [1, 1]} : vector<16x144xf32> to vector<2x144xf32>
    %749 = arith.select %38, %747, %748 : vector<2x144xi1>, vector<2x144xf32>
    %cst_130 = arith.constant dense<0.000000e+00> : vector<2x144xf32>
    %750 = tpu.matmul %744, %610, %cst_130 {dimension_numbers = #tpu.dot_dimension_numbers<[1], [0], [0], [1], [0, 0, 1, 1], [], []>} : vector<2x48xf32>, vector<48x144xf32>, vector<2x144xf32> -> vector<2x144xf32>
    %751 = arith.addf %750, %613 : vector<2x144xf32>
    %752 = vector.extract_strided_slice %749 {offsets = [0, 0], sizes = [2, 48], strides = [1, 1]} : vector<2x144xf32> to vector<2x48xf32>
    %753 = vector.extract_strided_slice %751 {offsets = [0, 0], sizes = [2, 48], strides = [1, 1]} : vector<2x144xf32> to vector<2x48xf32>
    %754 = arith.addf %752, %753 : vector<2x48xf32>
    %755 = arith.negf %754 : vector<2x48xf32>
    %756 = math.exp %755 : vector<2x48xf32>
    %cst_131 = arith.constant 1.000000e+00 : f32
    %757 = vector.broadcast %cst_131 : f32 to vector<2x48xf32>
    %758 = arith.addf %757, %756 : vector<2x48xf32>
    %759 = arith.divf %757, %758 : vector<2x48xf32>
    %760 = vector.extract_strided_slice %749 {offsets = [0, 48], sizes = [2, 48], strides = [1, 1]} : vector<2x144xf32> to vector<2x48xf32>
    %761 = vector.extract_strided_slice %751 {offsets = [0, 48], sizes = [2, 48], strides = [1, 1]} : vector<2x144xf32> to vector<2x48xf32>
    %762 = arith.addf %760, %761 : vector<2x48xf32>
    %763 = arith.negf %762 : vector<2x48xf32>
    %764 = math.exp %763 : vector<2x48xf32>
    %cst_132 = arith.constant 1.000000e+00 : f32
    %765 = vector.broadcast %cst_132 : f32 to vector<2x48xf32>
    %766 = arith.addf %765, %764 : vector<2x48xf32>
    %767 = arith.divf %765, %766 : vector<2x48xf32>
    %768 = vector.extract_strided_slice %749 {offsets = [0, 96], sizes = [2, 48], strides = [1, 1]} : vector<2x144xf32> to vector<2x48xf32>
    %769 = vector.extract_strided_slice %751 {offsets = [0, 96], sizes = [2, 48], strides = [1, 1]} : vector<2x144xf32> to vector<2x48xf32>
    %770 = arith.mulf %759, %769 : vector<2x48xf32>
    %771 = arith.addf %768, %770 : vector<2x48xf32>
    %772 = math.tanh %771 : vector<2x48xf32>
    %cst_133 = arith.constant 1.000000e+00 : f32
    %773 = vector.broadcast %cst_133 : f32 to vector<2x48xf32>
    %774 = arith.subf %773, %767 : vector<2x48xf32>
    %775 = arith.mulf %774, %772 : vector<2x48xf32>
    %776 = arith.mulf %767, %744 : vector<2x48xf32>
    %777 = arith.addf %775, %776 : vector<2x48xf32>
    %778 = vector.extract_strided_slice %777 {offsets = [0, 0], sizes = [2, 24], strides = [1, 1]} : vector<2x48xf32> to vector<2x24xf32>
    %779 = vector.extract_strided_slice %777 {offsets = [0, 24], sizes = [2, 24], strides = [1, 1]} : vector<2x48xf32> to vector<2x24xf32>
    %780 = vector.extract_strided_slice %609 {offsets = [10, 0], sizes = [2, 144], strides = [1, 1]} : vector<16x144xf32> to vector<2x144xf32>
    %781 = vector.extract_strided_slice %609 {offsets = [4, 0], sizes = [2, 144], strides = [1, 1]} : vector<16x144xf32> to vector<2x144xf32>
    %782 = arith.select %38, %780, %781 : vector<2x144xi1>, vector<2x144xf32>
    %cst_134 = arith.constant dense<0.000000e+00> : vector<2x144xf32>
    %783 = tpu.matmul %777, %610, %cst_134 {dimension_numbers = #tpu.dot_dimension_numbers<[1], [0], [0], [1], [0, 0, 1, 1], [], []>} : vector<2x48xf32>, vector<48x144xf32>, vector<2x144xf32> -> vector<2x144xf32>
    %784 = arith.addf %783, %613 : vector<2x144xf32>
    %785 = vector.extract_strided_slice %782 {offsets = [0, 0], sizes = [2, 48], strides = [1, 1]} : vector<2x144xf32> to vector<2x48xf32>
    %786 = vector.extract_strided_slice %784 {offsets = [0, 0], sizes = [2, 48], strides = [1, 1]} : vector<2x144xf32> to vector<2x48xf32>
    %787 = arith.addf %785, %786 : vector<2x48xf32>
    %788 = arith.negf %787 : vector<2x48xf32>
    %789 = math.exp %788 : vector<2x48xf32>
    %cst_135 = arith.constant 1.000000e+00 : f32
    %790 = vector.broadcast %cst_135 : f32 to vector<2x48xf32>
    %791 = arith.addf %790, %789 : vector<2x48xf32>
    %792 = arith.divf %790, %791 : vector<2x48xf32>
    %793 = vector.extract_strided_slice %782 {offsets = [0, 48], sizes = [2, 48], strides = [1, 1]} : vector<2x144xf32> to vector<2x48xf32>
    %794 = vector.extract_strided_slice %784 {offsets = [0, 48], sizes = [2, 48], strides = [1, 1]} : vector<2x144xf32> to vector<2x48xf32>
    %795 = arith.addf %793, %794 : vector<2x48xf32>
    %796 = arith.negf %795 : vector<2x48xf32>
    %797 = math.exp %796 : vector<2x48xf32>
    %cst_136 = arith.constant 1.000000e+00 : f32
    %798 = vector.broadcast %cst_136 : f32 to vector<2x48xf32>
    %799 = arith.addf %798, %797 : vector<2x48xf32>
    %800 = arith.divf %798, %799 : vector<2x48xf32>
    %801 = vector.extract_strided_slice %782 {offsets = [0, 96], sizes = [2, 48], strides = [1, 1]} : vector<2x144xf32> to vector<2x48xf32>
    %802 = vector.extract_strided_slice %784 {offsets = [0, 96], sizes = [2, 48], strides = [1, 1]} : vector<2x144xf32> to vector<2x48xf32>
    %803 = arith.mulf %792, %802 : vector<2x48xf32>
    %804 = arith.addf %801, %803 : vector<2x48xf32>
    %805 = math.tanh %804 : vector<2x48xf32>
    %cst_137 = arith.constant 1.000000e+00 : f32
    %806 = vector.broadcast %cst_137 : f32 to vector<2x48xf32>
    %807 = arith.subf %806, %800 : vector<2x48xf32>
    %808 = arith.mulf %807, %805 : vector<2x48xf32>
    %809 = arith.mulf %800, %777 : vector<2x48xf32>
    %810 = arith.addf %808, %809 : vector<2x48xf32>
    %811 = vector.extract_strided_slice %810 {offsets = [0, 0], sizes = [2, 24], strides = [1, 1]} : vector<2x48xf32> to vector<2x24xf32>
    %812 = vector.extract_strided_slice %810 {offsets = [0, 24], sizes = [2, 24], strides = [1, 1]} : vector<2x48xf32> to vector<2x24xf32>
    %813 = vector.extract_strided_slice %609 {offsets = [12, 0], sizes = [2, 144], strides = [1, 1]} : vector<16x144xf32> to vector<2x144xf32>
    %814 = vector.extract_strided_slice %609 {offsets = [2, 0], sizes = [2, 144], strides = [1, 1]} : vector<16x144xf32> to vector<2x144xf32>
    %815 = arith.select %38, %813, %814 : vector<2x144xi1>, vector<2x144xf32>
    %cst_138 = arith.constant dense<0.000000e+00> : vector<2x144xf32>
    %816 = tpu.matmul %810, %610, %cst_138 {dimension_numbers = #tpu.dot_dimension_numbers<[1], [0], [0], [1], [0, 0, 1, 1], [], []>} : vector<2x48xf32>, vector<48x144xf32>, vector<2x144xf32> -> vector<2x144xf32>
    %817 = arith.addf %816, %613 : vector<2x144xf32>
    %818 = vector.extract_strided_slice %815 {offsets = [0, 0], sizes = [2, 48], strides = [1, 1]} : vector<2x144xf32> to vector<2x48xf32>
    %819 = vector.extract_strided_slice %817 {offsets = [0, 0], sizes = [2, 48], strides = [1, 1]} : vector<2x144xf32> to vector<2x48xf32>
    %820 = arith.addf %818, %819 : vector<2x48xf32>
    %821 = arith.negf %820 : vector<2x48xf32>
    %822 = math.exp %821 : vector<2x48xf32>
    %cst_139 = arith.constant 1.000000e+00 : f32
    %823 = vector.broadcast %cst_139 : f32 to vector<2x48xf32>
    %824 = arith.addf %823, %822 : vector<2x48xf32>
    %825 = arith.divf %823, %824 : vector<2x48xf32>
    %826 = vector.extract_strided_slice %815 {offsets = [0, 48], sizes = [2, 48], strides = [1, 1]} : vector<2x144xf32> to vector<2x48xf32>
    %827 = vector.extract_strided_slice %817 {offsets = [0, 48], sizes = [2, 48], strides = [1, 1]} : vector<2x144xf32> to vector<2x48xf32>
    %828 = arith.addf %826, %827 : vector<2x48xf32>
    %829 = arith.negf %828 : vector<2x48xf32>
    %830 = math.exp %829 : vector<2x48xf32>
    %cst_140 = arith.constant 1.000000e+00 : f32
    %831 = vector.broadcast %cst_140 : f32 to vector<2x48xf32>
    %832 = arith.addf %831, %830 : vector<2x48xf32>
    %833 = arith.divf %831, %832 : vector<2x48xf32>
    %834 = vector.extract_strided_slice %815 {offsets = [0, 96], sizes = [2, 48], strides = [1, 1]} : vector<2x144xf32> to vector<2x48xf32>
    %835 = vector.extract_strided_slice %817 {offsets = [0, 96], sizes = [2, 48], strides = [1, 1]} : vector<2x144xf32> to vector<2x48xf32>
    %836 = arith.mulf %825, %835 : vector<2x48xf32>
    %837 = arith.addf %834, %836 : vector<2x48xf32>
    %838 = math.tanh %837 : vector<2x48xf32>
    %cst_141 = arith.constant 1.000000e+00 : f32
    %839 = vector.broadcast %cst_141 : f32 to vector<2x48xf32>
    %840 = arith.subf %839, %833 : vector<2x48xf32>
    %841 = arith.mulf %840, %838 : vector<2x48xf32>
    %842 = arith.mulf %833, %810 : vector<2x48xf32>
    %843 = arith.addf %841, %842 : vector<2x48xf32>
    %844 = vector.extract_strided_slice %843 {offsets = [0, 0], sizes = [2, 24], strides = [1, 1]} : vector<2x48xf32> to vector<2x24xf32>
    %845 = vector.extract_strided_slice %843 {offsets = [0, 24], sizes = [2, 24], strides = [1, 1]} : vector<2x48xf32> to vector<2x24xf32>
    %846 = vector.extract_strided_slice %609 {offsets = [14, 0], sizes = [2, 144], strides = [1, 1]} : vector<16x144xf32> to vector<2x144xf32>
    %847 = vector.extract_strided_slice %609 {offsets = [0, 0], sizes = [2, 144], strides = [1, 1]} : vector<16x144xf32> to vector<2x144xf32>
    %848 = arith.select %38, %846, %847 : vector<2x144xi1>, vector<2x144xf32>
    %cst_142 = arith.constant dense<0.000000e+00> : vector<2x144xf32>
    %849 = tpu.matmul %843, %610, %cst_142 {dimension_numbers = #tpu.dot_dimension_numbers<[1], [0], [0], [1], [0, 0, 1, 1], [], []>} : vector<2x48xf32>, vector<48x144xf32>, vector<2x144xf32> -> vector<2x144xf32>
    %850 = arith.addf %849, %613 : vector<2x144xf32>
    %851 = vector.extract_strided_slice %848 {offsets = [0, 0], sizes = [2, 48], strides = [1, 1]} : vector<2x144xf32> to vector<2x48xf32>
    %852 = vector.extract_strided_slice %850 {offsets = [0, 0], sizes = [2, 48], strides = [1, 1]} : vector<2x144xf32> to vector<2x48xf32>
    %853 = arith.addf %851, %852 : vector<2x48xf32>
    %854 = arith.negf %853 : vector<2x48xf32>
    %855 = math.exp %854 : vector<2x48xf32>
    %cst_143 = arith.constant 1.000000e+00 : f32
    %856 = vector.broadcast %cst_143 : f32 to vector<2x48xf32>
    %857 = arith.addf %856, %855 : vector<2x48xf32>
    %858 = arith.divf %856, %857 : vector<2x48xf32>
    %859 = vector.extract_strided_slice %848 {offsets = [0, 48], sizes = [2, 48], strides = [1, 1]} : vector<2x144xf32> to vector<2x48xf32>
    %860 = vector.extract_strided_slice %850 {offsets = [0, 48], sizes = [2, 48], strides = [1, 1]} : vector<2x144xf32> to vector<2x48xf32>
    %861 = arith.addf %859, %860 : vector<2x48xf32>
    %862 = arith.negf %861 : vector<2x48xf32>
    %863 = math.exp %862 : vector<2x48xf32>
    %cst_144 = arith.constant 1.000000e+00 : f32
    %864 = vector.broadcast %cst_144 : f32 to vector<2x48xf32>
    %865 = arith.addf %864, %863 : vector<2x48xf32>
    %866 = arith.divf %864, %865 : vector<2x48xf32>
    %867 = vector.extract_strided_slice %848 {offsets = [0, 96], sizes = [2, 48], strides = [1, 1]} : vector<2x144xf32> to vector<2x48xf32>
    %868 = vector.extract_strided_slice %850 {offsets = [0, 96], sizes = [2, 48], strides = [1, 1]} : vector<2x144xf32> to vector<2x48xf32>
    %869 = arith.mulf %858, %868 : vector<2x48xf32>
    %870 = arith.addf %867, %869 : vector<2x48xf32>
    %871 = math.tanh %870 : vector<2x48xf32>
    %cst_145 = arith.constant 1.000000e+00 : f32
    %872 = vector.broadcast %cst_145 : f32 to vector<2x48xf32>
    %873 = arith.subf %872, %866 : vector<2x48xf32>
    %874 = arith.mulf %873, %871 : vector<2x48xf32>
    %875 = arith.mulf %866, %843 : vector<2x48xf32>
    %876 = arith.addf %874, %875 : vector<2x48xf32>
    %877 = vector.extract_strided_slice %876 {offsets = [0, 0], sizes = [2, 24], strides = [1, 1]} : vector<2x48xf32> to vector<2x24xf32>
    %878 = vector.extract_strided_slice %876 {offsets = [0, 24], sizes = [2, 24], strides = [1, 1]} : vector<2x48xf32> to vector<2x24xf32>
    %879 = tpu.concatenate %646, %878 in 1 : vector<2x24xf32>, vector<2x24xf32> -> vector<2x48xf32>
    %880 = tpu.concatenate %679, %845 in 1 : vector<2x24xf32>, vector<2x24xf32> -> vector<2x48xf32>
    %881 = tpu.concatenate %712, %812 in 1 : vector<2x24xf32>, vector<2x24xf32> -> vector<2x48xf32>
    %882 = tpu.concatenate %745, %779 in 1 : vector<2x24xf32>, vector<2x24xf32> -> vector<2x48xf32>
    %883 = tpu.concatenate %778, %746 in 1 : vector<2x24xf32>, vector<2x24xf32> -> vector<2x48xf32>
    %884 = tpu.concatenate %811, %713 in 1 : vector<2x24xf32>, vector<2x24xf32> -> vector<2x48xf32>
    %885 = tpu.concatenate %844, %680 in 1 : vector<2x24xf32>, vector<2x24xf32> -> vector<2x48xf32>
    %886 = tpu.concatenate %877, %647 in 1 : vector<2x24xf32>, vector<2x24xf32> -> vector<2x48xf32>
    %887 = tpu.concatenate %879, %880, %881, %882, %883, %884, %885, %886 in 0 : vector<2x48xf32>, vector<2x48xf32>, vector<2x48xf32>, vector<2x48xf32>, vector<2x48xf32>, vector<2x48xf32>, vector<2x48xf32>, vector<2x48xf32> -> vector<16x48xf32>
    %c0_146 = arith.constant 0 : index
    %c0_147 = arith.constant 0 : index
    %888 = vector.load %arg22[%c0_146, %c0_147] : memref<48x6xf32, #tpu.memory_space<vmem>>, vector<48x6xf32>
    %cst_148 = arith.constant dense<0.000000e+00> : vector<16x6xf32>
    %889 = tpu.matmul %887, %888, %cst_148 {dimension_numbers = #tpu.dot_dimension_numbers<[1], [0], [0], [1], [0, 0, 1, 1], [], []>} : vector<16x48xf32>, vector<48x6xf32>, vector<16x6xf32> -> vector<16x6xf32>
    %c0_149 = arith.constant 0 : index
    %c0_150 = arith.constant 0 : index
    %890 = vector.load %arg23[%c0_149, %c0_150] : memref<1x6xf32, #tpu.memory_space<vmem>>, vector<1x6xf32>
    %891 = vector.broadcast %890 : vector<1x6xf32> to vector<16x6xf32>
    %892 = arith.addf %889, %891 : vector<16x6xf32>
    %cst_151 = arith.constant 9.99999974E-6 : f32
    %893 = vector.broadcast %cst_151 : f32 to vector<16x6xf32>
    %894 = arith.addf %892, %893 : vector<16x6xf32>
    %c0_152 = arith.constant 0 : index
    %c0_153 = arith.constant 0 : index
    %895 = vector.load %arg24[%c0_152, %c0_153] : memref<16x6xf32, #tpu.memory_space<vmem>>, vector<16x6xf32>
    tpu.vector_store %arg24[%c0_152, %c0_153], %894 {strides = array<i32>} : memref<16x6xf32, #tpu.memory_space<vmem>>, vector<16x6xf32>,
    %c0_154 = arith.constant 0 : index
    %c0_155 = arith.constant 0 : index
    %896 = vector.load %arg3[%c0_154, %c0_155] : memref<16x1xf32, #tpu.memory_space<vmem>>, vector<16x1xf32>
    %897 = vector.extract_strided_slice %894 {offsets = [0, 0], sizes = [16, 3], strides = [1, 1]} : vector<16x6xf32> to vector<16x3xf32>
    %c0_156 = arith.constant 0 : index
    %c0_157 = arith.constant 0 : index
    %898 = vector.load %arg1[%c0_156, %c0_157] : memref<16x3xf32, #tpu.memory_space<vmem>>, vector<16x3xf32>
    %899 = arith.subf %897, %898 : vector<16x3xf32>
    %900 = vector.extract_strided_slice %894 {offsets = [0, 3], sizes = [16, 3], strides = [1, 1]} : vector<16x6xf32> to vector<16x3xf32>
    %c0_158 = arith.constant 0 : index
    %c0_159 = arith.constant 0 : index
    %901 = vector.load %arg2[%c0_158, %c0_159] : memref<16x3xf32, #tpu.memory_space<vmem>>, vector<16x3xf32>
    %902 = arith.subf %900, %901 : vector<16x3xf32>
    %903 = vector.broadcast %896 : vector<16x1xf32> to vector<16x3xf32>
    %904 = arith.mulf %903, %899 : vector<16x3xf32>
    %905 = arith.mulf %904, %899 : vector<16x3xf32>
    %cst_160 = arith.constant dense<0.000000e+00> : vector<16xf32>
    %906 = vector.multi_reduction <add>, %905, %cst_160 [1] : vector<16x3xf32> to vector<16xf32>
    %907 = vector.shape_cast %906 : vector<16xf32> to vector<16x1xf32>
    %cst_161 = arith.constant dense<0.000000e+00> : vector<1xf32>
    %908 = vector.multi_reduction <add>, %907, %cst_161 [0] : vector<16x1xf32> to vector<1xf32>
    %909 = vector.shape_cast %908 : vector<1xf32> to vector<1x1xf32>
    %cst_162 = arith.constant 4.800000e+01 : f32
    %910 = vector.broadcast %cst_162 : f32 to vector<1x1xf32>
    %911 = arith.divf %909, %910 : vector<1x1xf32>
    %912 = vector.broadcast %896 : vector<16x1xf32> to vector<16x3xf32>
    %913 = arith.mulf %912, %902 : vector<16x3xf32>
    %914 = arith.mulf %913, %902 : vector<16x3xf32>
    %cst_163 = arith.constant dense<0.000000e+00> : vector<16xf32>
    %915 = vector.multi_reduction <add>, %914, %cst_163 [1] : vector<16x3xf32> to vector<16xf32>
    %916 = vector.shape_cast %915 : vector<16xf32> to vector<16x1xf32>
    %cst_164 = arith.constant dense<0.000000e+00> : vector<1xf32>
    %917 = vector.multi_reduction <add>, %916, %cst_164 [0] : vector<16x1xf32> to vector<1xf32>
    %918 = vector.shape_cast %917 : vector<1xf32> to vector<1x1xf32>
    %cst_165 = arith.constant 4.800000e+01 : f32
    %919 = vector.broadcast %cst_165 : f32 to vector<1x1xf32>
    %920 = arith.divf %918, %919 : vector<1x1xf32>
    %c0_166 = arith.constant 0 : index
    %c0_167 = arith.constant 0 : index
    %921 = vector.load %arg26[%c0_166, %c0_167] : memref<1x1xf32, #tpu.memory_space<vmem>>, vector<1x1xf32>
    tpu.vector_store %arg26[%c0_166, %c0_167], %911 {strides = array<i32>} : memref<1x1xf32, #tpu.memory_space<vmem>>, vector<1x1xf32>,
    %c0_168 = arith.constant 0 : index
    %c0_169 = arith.constant 0 : index
    %922 = vector.load %arg27[%c0_168, %c0_169] : memref<1x1xf32, #tpu.memory_space<vmem>>, vector<1x1xf32>
    tpu.vector_store %arg27[%c0_168, %c0_169], %920 {strides = array<i32>} : memref<1x1xf32, #tpu.memory_space<vmem>>, vector<1x1xf32>,
    %923 = arith.addf %911, %920 : vector<1x1xf32>
    %c0_170 = arith.constant 0 : index
    %c0_171 = arith.constant 0 : index
    %924 = vector.load %arg25[%c0_170, %c0_171] : memref<1x1xf32, #tpu.memory_space<vmem>>, vector<1x1xf32>
    tpu.vector_store %arg25[%c0_170, %c0_171], %923 {strides = array<i32>} : memref<1x1xf32, #tpu.memory_space<vmem>>, vector<1x1xf32>,
    return
  }
}

</mosaic_0001>

<llo_original>
// kernel: model7_forward.1
$region0: #{model7_forward.1}
  #allocation0 [shape = 'u32[]', space=smem, size = 0x4, offset = 0x4, fixed_abs, tag = 'smem constant byte address 0x4 - core index']
  #allocation1 [shape = 'u32[72,128]{1,0:T(1,128)}', space=vmem, size = 0x9000, scoped, tag = 'internal scratch']
  %s0 = inlined_call_operand.vmem [shape: f32[16,6], index: 0, kind: input, shape index: {}]
  %s1 = inlined_call_operand.vmem [shape: f32[16,3], index: 1, kind: input, shape index: {}]
  %s2 = inlined_call_operand.vmem [shape: f32[16,3], index: 2, kind: input, shape index: {}]
  %s3 = inlined_call_operand.vmem [shape: f32[16,1], index: 3, kind: input, shape index: {}]
  %s4 = inlined_call_operand.vmem [shape: f32[6,36], index: 4, kind: input, shape index: {}]
  %s5 = inlined_call_operand.vmem [shape: f32[1,36], index: 5, kind: input, shape index: {}]
  %s6 = inlined_call_operand.hbm [shape: f32[36,36], index: 6, kind: input, shape index: {}]
  %s7 = inlined_call_operand.vmem [shape: f32[1,36], index: 7, kind: input, shape index: {}]
  %s8 = inlined_call_operand.vmem [shape: f32[36,8], index: 8, kind: input, shape index: {}]
  %s9 = inlined_call_operand.vmem [shape: f32[1,8], index: 9, kind: input, shape index: {}]
  %s10 = inlined_call_operand.vmem [shape: f32[8,144], index: 10, kind: input, shape index: {}]
  %s11 = inlined_call_operand.vmem [shape: f32[1,144], index: 11, kind: input, shape index: {}]
  %s12 = inlined_call_operand.vmem [shape: f32[48,144], index: 12, kind: input, shape index: {}]
  %s13 = inlined_call_operand.vmem [shape: f32[1,144], index: 13, kind: input, shape index: {}]
  %s14 = inlined_call_operand.vmem [shape: f32[48,144], index: 14, kind: input, shape index: {}]
  %s15 = inlined_call_operand.vmem [shape: f32[1,144], index: 15, kind: input, shape index: {}]
  %s16 = inlined_call_operand.hbm [shape: f32[48,144], index: 16, kind: input, shape index: {}]
  %s17 = inlined_call_operand.vmem [shape: f32[1,144], index: 17, kind: input, shape index: {}]
  %s18 = inlined_call_operand.hbm [shape: f32[48,144], index: 18, kind: input, shape index: {}]
  %s19 = inlined_call_operand.vmem [shape: f32[1,144], index: 19, kind: input, shape index: {}]
  %s20 = inlined_call_operand.hbm [shape: f32[48,144], index: 20, kind: input, shape index: {}]
  %s21 = inlined_call_operand.vmem [shape: f32[1,144], index: 21, kind: input, shape index: {}]
  %s22 = inlined_call_operand.vmem [shape: f32[48,6], index: 22, kind: input, shape index: {}]
  %s23 = inlined_call_operand.vmem [shape: f32[1,6], index: 23, kind: input, shape index: {}]
  %s24 = inlined_call_operand.vmem [shape: f32[16,6], index: 24, kind: output, shape index: {0}]
  %s25 = inlined_call_operand.hbm [shape: f32[1,1], index: 25, kind: output, shape index: {1}]
  %s26 = inlined_call_operand.hbm [shape: f32[1,1], index: 26, kind: output, shape index: {2}]
  %s27 = inlined_call_operand.hbm [shape: f32[1,1], index: 27, kind: output, shape index: {3}]
  %28 = xla_tuple %s24, %s25, %s26, %s27
  %s29 = sld [smem:[#allocation0]]
  $region146: #{model7_forward.1} parent=0
    _
  %s31 = ssub.s32 1, %s29
  %s32 = scalar_select 0, %s31, %s29
  $region1: #{model7_forward.1} parent=0
    #allocation2 [shape = 'u8[20480]{0}', space=vmem, size = 0x5000, scoped, tag = 'input window, operand 6, single buffered']
    #allocation3 [shape = 's32[1]{0}', space=sflag, size = 0x4, scoped, tag = 'scoped memory for model7_forward.1']
    #allocation4 [shape = 's32[1]{0}', space=sflag, size = 0x4, scoped, tag = 'scoped memory for model7_forward.1']
    #allocation5 [shape = 'u8[49152]{0}', space=vmem, size = 0xc000, scoped, tag = 'input window, operand 16, single buffered']
    #allocation6 [shape = 's32[1]{0}', space=sflag, size = 0x4, scoped, tag = 'scoped memory for model7_forward.1']
    #allocation7 [shape = 'u8[49152]{0}', space=vmem, size = 0xc000, scoped, tag = 'input window, operand 18, single buffered']
    #allocation8 [shape = 'u8[49152]{0}', space=vmem, size = 0xc000, scoped, tag = 'input window, operand 20, single buffered']
    #allocation9 [shape = 's32[1]{0}', space=sflag, size = 0x4, scoped, tag = 'scoped memory for model7_forward.1']
    #allocation10 [shape = 'u8[512]{0}', space=vmem, size = 0x400, scoped, tag = 'output window, operand 1, single buffered']
    #allocation11 [shape = 'u8[512]{0}', space=vmem, size = 0x400, scoped, tag = 'output window, operand 2, single buffered']
    #allocation12 [shape = 's32[1]{0}', space=sflag, size = 0x4, scoped, tag = 'scoped memory for model7_forward.1']
    #allocation13 [shape = 'u8[512]{0}', space=vmem, size = 0x400, scoped, tag = 'output window, operand 3, single buffered']
    %33 = vsyncpa [#allocation3], 0
    %34 = vsyncpa [#allocation6], 0
    %35 = vsyncpa [#allocation9], 0
    %36 = vsyncpa [#allocation4], 0
    %37 = vsyncpa [#allocation12], 0
    // Predicated region
    $region2: #{model7_forward.1} parent=1 // pred_check
      _
    $region3: #{model7_forward.1} parent=1 // pred_check_branch
      %39 = sbr.rel (0) target = $region5
    $region4: #{model7_forward.1} parent=1 // pred_region
      _
    $region5: #{model7_forward.1} parent=1 // pred_fallthru
      _
    // Predicated region
    $region6: #{model7_forward.1} parent=1 // pred_check
      _
    $region7: #{model7_forward.1} parent=1 // pred_check_branch
      %41 = sbr.rel (0) target = $region9
    $region8: #{model7_forward.1} parent=1 // pred_region
      _
    $region9: #{model7_forward.1} parent=1 // pred_fallthru
      _
    // Predicated region
    $region10: #{model7_forward.1} parent=1 // pred_check
      _
    $region11: #{model7_forward.1} parent=1 // pred_check_branch
      %43 = sbr.rel (0) target = $region13
    $region12: #{model7_forward.1} parent=1 // pred_region
      _
    $region13: #{model7_forward.1} parent=1 // pred_fallthru
      _
    // Predicated region
    $region14: #{model7_forward.1} parent=1 // pred_check
      _
    $region15: #{model7_forward.1} parent=1 // pred_check_branch
      %45 = sbr.rel (0) target = $region17
    $region16: #{model7_forward.1} parent=1 // pred_region
      _
    $region17: #{model7_forward.1} parent=1 // pred_fallthru
      _
    // Predicated region
    $region18: #{model7_forward.1} parent=1 // pred_check
      _
    $region19: #{model7_forward.1} parent=1 // pred_check_branch
      %47 = sbr.rel (0) target = $region21
    $region20: #{model7_forward.1} parent=1 // pred_region
      _
    $region21: #{model7_forward.1} parent=1 // pred_fallthru
      _
    // Predicated region
    $region22: #{model7_forward.1} parent=1 // pred_check
      _
    $region23: #{model7_forward.1} parent=1 // pred_check_branch
      %49 = sbr.rel (0) target = $region25
    $region24: #{model7_forward.1} parent=1 // pred_region
      _
    $region25: #{model7_forward.1} parent=1 // pred_fallthru
      _
    // Predicated region
    $region26: #{model7_forward.1} parent=1 // pred_check
      _
    $region27: #{model7_forward.1} parent=1 // pred_check_branch
      %51 = sbr.rel (0) target = $region29
    $region28: #{model7_forward.1} parent=1 // pred_region
      %53 = vsyncadd [#allocation3], 0
      %s54 = sshll.u32 %s6, 4
      %s55 = int_to_ptr.hbm [resolvable:$true] %s54
      %s56 = sshll.u32 [#allocation2], 4
      %s57 = int_to_ptr.vmem [resolvable:$true] %s56
      %62 = dma.hbm_to_vmem [thread:$0]  %s55, 640, %s57, [#allocation3], 128, 128, 8
    $region29: #{model7_forward.1} parent=1 // pred_fallthru
      _
    // Predicated region
    $region30: #{model7_forward.1} parent=1 // pred_check
      _
    $region31: #{model7_forward.1} parent=1 // pred_check_branch
      %64 = sbr.rel (0) target = $region33
    $region32: #{model7_forward.1} parent=1 // pred_region
      _
    $region33: #{model7_forward.1} parent=1 // pred_fallthru
      _
    // Predicated region
    $region34: #{model7_forward.1} parent=1 // pred_check
      _
    $region35: #{model7_forward.1} parent=1 // pred_check_branch
      %66 = sbr.rel (0) target = $region37
    $region36: #{model7_forward.1} parent=1 // pred_region
      _
    $region37: #{model7_forward.1} parent=1 // pred_fallthru
      _
    // Predicated region
    $region38: #{model7_forward.1} parent=1 // pred_check
      _
    $region39: #{model7_forward.1} parent=1 // pred_check_branch
      %68 = sbr.rel (0) target = $region41
    $region40: #{model7_forward.1} parent=1 // pred_region
      _
    $region41: #{model7_forward.1} parent=1 // pred_fallthru
      _
    // Predicated region
    $region42: #{model7_forward.1} parent=1 // pred_check
      _
    $region43: #{model7_forward.1} parent=1 // pred_check_branch
      %70 = sbr.rel (0) target = $region45
    $region44: #{model7_forward.1} parent=1 // pred_region
      _
    $region45: #{model7_forward.1} parent=1 // pred_fallthru
      _
    // Predicated region
    $region46: #{model7_forward.1} parent=1 // pred_check
      _
    $region47: #{model7_forward.1} parent=1 // pred_check_branch
      %72 = sbr.rel (0) target = $region49
    $region48: #{model7_forward.1} parent=1 // pred_region
      _
    $region49: #{model7_forward.1} parent=1 // pred_fallthru
      _
    // Predicated region
    $region50: #{model7_forward.1} parent=1 // pred_check
      _
    $region51: #{model7_forward.1} parent=1 // pred_check_branch
      %74 = sbr.rel (0) target = $region53
    $region52: #{model7_forward.1} parent=1 // pred_region
      _
    $region53: #{model7_forward.1} parent=1 // pred_fallthru
      _
    // Predicated region
    $region54: #{model7_forward.1} parent=1 // pred_check
      _
    $region55: #{model7_forward.1} parent=1 // pred_check_branch
      %76 = sbr.rel (0) target = $region57
    $region56: #{model7_forward.1} parent=1 // pred_region
      _
    $region57: #{model7_forward.1} parent=1 // pred_fallthru
      _
    // Predicated region
    $region58: #{model7_forward.1} parent=1 // pred_check
      _
    $region59: #{model7_forward.1} parent=1 // pred_check_branch
      %78 = sbr.rel (0) target = $region61
    $region60: #{model7_forward.1} parent=1 // pred_region
      _
    $region61: #{model7_forward.1} parent=1 // pred_fallthru
      _
    // Predicated region
    $region62: #{model7_forward.1} parent=1 // pred_check
      _
    $region63: #{model7_forward.1} parent=1 // pred_check_branch
      %80 = sbr.rel (0) target = $region65
    $region64: #{model7_forward.1} parent=1 // pred_region
      _
    $region65: #{model7_forward.1} parent=1 // pred_fallthru
      _
    // Predicated region
    $region66: #{model7_forward.1} parent=1 // pred_check
      _
    $region67: #{model7_forward.1} parent=1 // pred_check_branch
      %82 = sbr.rel (0) target = $region69
    $region68: #{model7_forward.1} parent=1 // pred_region
      %84 = vsyncadd [#allocation6], 0
      %s85 = sshll.u32 %s16, 4
      %s86 = int_to_ptr.hbm [resolvable:$true] %s85
      %s87 = sshll.u32 [#allocation5], 4
      %s88 = int_to_ptr.vmem [resolvable:$true] %s87
      %93 = dma.hbm_to_vmem [thread:$0]  %s86, 1536, %s88, [#allocation6], 256, 256, 16
    $region69: #{model7_forward.1} parent=1 // pred_fallthru
      _
    // Predicated region
    $region70: #{model7_forward.1} parent=1 // pred_check
      _
    $region71: #{model7_forward.1} parent=1 // pred_check_branch
      %95 = sbr.rel (0) target = $region73
    $region72: #{model7_forward.1} parent=1 // pred_region
      _
    $region73: #{model7_forward.1} parent=1 // pred_fallthru
      _
    // Predicated region
    $region74: #{model7_forward.1} parent=1 // pred_check
      _
    $region75: #{model7_forward.1} parent=1 // pred_check_branch
      %97 = sbr.rel (0) target = $region77
    $region76: #{model7_forward.1} parent=1 // pred_region
      %99 = vsyncadd [#allocation6], 0
      %s100 = sshll.u32 %s18, 4
      %s101 = int_to_ptr.hbm [resolvable:$true] %s100
      %s102 = sshll.u32 [#allocation7], 4
      %s103 = int_to_ptr.vmem [resolvable:$true] %s102
      %108 = dma.hbm_to_vmem [thread:$0]  %s101, 1536, %s103, [#allocation6], 256, 256, 16
    $region77: #{model7_forward.1} parent=1 // pred_fallthru
      _
    // Predicated region
    $region78: #{model7_forward.1} parent=1 // pred_check
      _
    $region79: #{model7_forward.1} parent=1 // pred_check_branch
      %110 = sbr.rel (0) target = $region81
    $region80: #{model7_forward.1} parent=1 // pred_region
      _
    $region81: #{model7_forward.1} parent=1 // pred_fallthru
      _
    // Predicated region
    $region82: #{model7_forward.1} parent=1 // pred_check
      _
    $region83: #{model7_forward.1} parent=1 // pred_check_branch
      %112 = sbr.rel (0) target = $region85
    $region84: #{model7_forward.1} parent=1 // pred_region
      %114 = vsyncadd [#allocation9], 0
      %s115 = sshll.u32 %s20, 4
      %s116 = int_to_ptr.hbm [resolvable:$true] %s115
      %s117 = sshll.u32 [#allocation8], 4
      %s118 = int_to_ptr.vmem [resolvable:$true] %s117
      %123 = dma.hbm_to_vmem [thread:$0]  %s116, 1536, %s118, [#allocation9], 256, 256, 16
    $region85: #{model7_forward.1} parent=1 // pred_fallthru
      _
    // Predicated region
    $region86: #{model7_forward.1} parent=1 // pred_check
      _
    $region87: #{model7_forward.1} parent=1 // pred_check_branch
      %125 = sbr.rel (0) target = $region89
    $region88: #{model7_forward.1} parent=1 // pred_region
      _
    $region89: #{model7_forward.1} parent=1 // pred_fallthru
      _
    // Predicated region
    $region90: #{model7_forward.1} parent=1 // pred_check
      _
    $region91: #{model7_forward.1} parent=1 // pred_check_branch
      %127 = sbr.rel (0) target = $region93
    $region92: #{model7_forward.1} parent=1 // pred_region
      _
    $region93: #{model7_forward.1} parent=1 // pred_fallthru
      _
    // Predicated region
    $region94: #{model7_forward.1} parent=1 // pred_check
      _
    $region95: #{model7_forward.1} parent=1 // pred_check_branch
      %129 = sbr.rel (0) target = $region97
    $region96: #{model7_forward.1} parent=1 // pred_region
      _
    $region97: #{model7_forward.1} parent=1 // pred_fallthru
      _
    // Predicated region
    $region98: #{model7_forward.1} parent=1 // pred_check
      _
    $region99: #{model7_forward.1} parent=1 // pred_check_branch
      %131 = sbr.rel (0) target = $region101
    $region100: #{model7_forward.1} parent=1 // pred_region
      %133 = dma.done [#allocation3], 640
    $region101: #{model7_forward.1} parent=1 // pred_fallthru
      _
    // Predicated region
    $region102: #{model7_forward.1} parent=1 // pred_check
      _
    $region103: #{model7_forward.1} parent=1 // pred_check_branch
      %135 = sbr.rel (0) target = $region105
    $region104: #{model7_forward.1} parent=1 // pred_region
      %137 = dma.done [#allocation6], 1536
    $region105: #{model7_forward.1} parent=1 // pred_fallthru
      _
    // Predicated region
    $region106: #{model7_forward.1} parent=1 // pred_check
      _
    $region107: #{model7_forward.1} parent=1 // pred_check_branch
      %139 = sbr.rel (0) target = $region109
    $region108: #{model7_forward.1} parent=1 // pred_region
      %141 = dma.done [#allocation6], 1536
    $region109: #{model7_forward.1} parent=1 // pred_fallthru
      _
    // Predicated region
    $region110: #{model7_forward.1} parent=1 // pred_check
      _
    $region111: #{model7_forward.1} parent=1 // pred_check_branch
      %143 = sbr.rel (0) target = $region113
    $region112: #{model7_forward.1} parent=1 // pred_region
      %145 = dma.done [#allocation9], 1536
    $region113: #{model7_forward.1} parent=1 // pred_fallthru
      _
    %v146 = vld [vmem:[%s0] sm:$0xff]
    %v147 = vld [vmem:[%s0 + $0x8] sm:$0xff]
    %v148 = vld [vmem:[%s4] sm:$0x3f]
    %v149 = vld [vmem:[%s5] sm:$0x1]
    %v151 = vperm.slane %v149, 0
    %vm153 = vcmask 48128
    %v155 = vsel %vm153, %v146, 0
    %v158 = vsel %vm153, %v147, 0
    %vm160 = vcmask 1045504
    %v162 = vsel %vm160, %v148, 0
    %164 = vmatpush.msra.mxu0 0.0
    %165 = vmatpush.msra.mxu0 0.0
    %166 = vmatpush.msra.mxu0 0.0
    %167 = vmatpush.msra.mxu0 0.0
    %168 = vmatpush.msra.mxu0 0.0
    %169 = vmatpush.msra.mxu0 0.0
    %170 = vmatpush.msra.mxu0 0.0
    %171 = vmatpush.msra.mxu0 0.0
    %172 = vmatpush.msra.mxu0 0.0
    %173 = vmatpush.msra.mxu0 0.0
    %174 = vmatpush.msra.mxu0 0.0
    %175 = vmatpush.msra.mxu0 0.0
    %176 = vmatpush.msra.mxu0 0.0
    %177 = vmatpush.msra.mxu0 0.0
    %178 = vmatpush.msra.mxu0 0.0
    %179 = vmatpush.msra.mxu0 %v162
    %180 = vmatmul.f32.gmra.mxu0 %v155
    %v181 = vpop.f32.mrf.mxu0
    %v182 = vadd.f32 %v151, %v181
    %183 = vmatmul.f32.gmra.mxu0 %v158
    %v184 = vpop.f32.mrf.mxu0
    %v185 = vadd.f32 %v151, %v184
    %186 = vdwg.mxu0
    %v187 = vmax.f32 %v182, 0.0
    %v188 = vmax.f32 %v185, 0.0
    %v189 = vld [vmem:[#allocation2] sm:$0xff]
    %v190 = vld [vmem:[#allocation2 + $0x8] sm:$0xff]
    %v191 = vld [vmem:[#allocation2 + $0x10] sm:$0xff]
    %v192 = vld [vmem:[#allocation2 + $0x18] sm:$0xff]
    %v193 = vld [vmem:[#allocation2 + $0x20] sm:$0xf]
    %v194 = vld [vmem:[%s7] sm:$0x1]
    %v196 = vperm.slane %v194, 0
    %vm198 = vcmask 293888
    %v200 = vsel %vm198, %v187, 0
    %v203 = vsel %vm198, %v188, 0
    %vm205 = vcmask 1043456
    %v207 = vsel %vm205, %v193, 0
    %209 = vmatpush.msra.mxu0 0.0
    %210 = vmatpush.msra.mxu0 0.0
    %211 = vmatpush.msra.mxu0 0.0
    %212 = vmatpush.msra.mxu0 0.0
    %213 = vmatpush.msra.mxu0 0.0
    %214 = vmatpush.msra.mxu0 0.0
    %215 = vmatpush.msra.mxu0 0.0
    %216 = vmatpush.msra.mxu0 0.0
    %217 = vmatpush.msra.mxu0 0.0
    %218 = vmatpush.msra.mxu0 0.0
    %219 = vmatpush.msra.mxu0 0.0
    %220 = vmatpush.msra.mxu0 %v207
    %221 = vmatpush.msra.mxu0 %v192
    %222 = vmatpush.msra.mxu0 %v191
    %223 = vmatpush.msra.mxu0 %v190
    %224 = vmatpush.msra.mxu0 %v189
    %225 = vmatmul.f32.gmra.mxu0 %v200
    %v226 = vpop.f32.mrf.mxu0
    %v227 = vadd.f32 %v196, %v226
    %228 = vmatmul.f32.gmra.mxu0 %v203
    %v229 = vpop.f32.mrf.mxu0
    %v230 = vadd.f32 %v196, %v229
    %231 = vdwg.mxu0
    %v232 = vmax.f32 %v227, 0.0
    %v233 = vmax.f32 %v230, 0.0
    %v234 = vld [vmem:[%s8] sm:$0xff]
    %v235 = vld [vmem:[%s8 + $0x8] sm:$0xff]
    %v236 = vld [vmem:[%s8 + $0x10] sm:$0xff]
    %v237 = vld [vmem:[%s8 + $0x18] sm:$0xff]
    %v238 = vld [vmem:[%s8 + $0x20] sm:$0xf]
    %v239 = vld [vmem:[%s9] sm:$0x1]
    %v241 = vperm.slane %v239, 0
    %v244 = vsel %vm198, %v232, 0
    %v247 = vsel %vm198, %v233, 0
    %v250 = vsel %vm205, %v238, 0
    %252 = vmatpush.msra.mxu0 0.0
    %253 = vmatpush.msra.mxu0 0.0
    %254 = vmatpush.msra.mxu0 0.0
    %255 = vmatpush.msra.mxu0 0.0
    %256 = vmatpush.msra.mxu0 0.0
    %257 = vmatpush.msra.mxu0 0.0
    %258 = vmatpush.msra.mxu0 0.0
    %259 = vmatpush.msra.mxu0 0.0
    %260 = vmatpush.msra.mxu0 0.0
    %261 = vmatpush.msra.mxu0 0.0
    %262 = vmatpush.msra.mxu0 0.0
    %263 = vmatpush.msra.mxu0 %v250
    %264 = vmatpush.msra.mxu0 %v237
    %265 = vmatpush.msra.mxu0 %v236
    %266 = vmatpush.msra.mxu0 %v235
    %267 = vmatpush.msra.mxu0 %v234
    %268 = vmatmul.f32.gmra.mxu0 %v244
    %v269 = vpop.f32.mrf.mxu0
    %v270 = vadd.f32 %v241, %v269
    %271 = vmatmul.f32.gmra.mxu0 %v247
    %v272 = vpop.f32.mrf.mxu0
    %v273 = vadd.f32 %v241, %v272
    %274 = vdwg.mxu0
    %v275 = vlaneseq
    %v276 = vand.u32 %v275, 127
    %v277 = vadd.s32 %v276, 128
    %vm278 = vcmp.lt.s32.totalorder %v276, 0
    %v279 = vsub.s32 0, %v276
    %v280 = vsel %vm278, %v279, %v276
    %v281 = vand.u32 %v280, 65535
    %v282 = vshrl.u32 %v280, 16
    %v284 = vmul.u32 %v281, 43691
    %v285 = vmul.u32 %v281, 43690
    %v286 = vmul.u32 %v282, 43691
    %v287 = vmul.u32 %v282, 43690
    %v288 = vshll.u32 %v285, 16
    %v289 = vshrl.u32 %v285, 16
    %v290 = vshll.u32 %v286, 16
    %v291 = vshrl.u32 %v286, 16
    %vm292 = vc.u32 %v284, %v288
    %v293 = vsel %vm292, 1, 0
    %v294 = vadd.s32 %v284, %v288
    %v295 = vadd.s32 %v287, %v293
    %vm296 = vc.u32 %v294, %v290
    %v297 = vsel %vm296, 1, 0
    %v298 = vadd.s32 %v294, %v290
    %v299 = vadd.s32 %v295, %v297
    %v300 = vadd.s32 %v299, %v289
    %v301 = vadd.s32 %v300, %v291
    %v302 = vshrl.u32 %v301, 5
    %v303 = vmul.u32 %v302, 48
    %v304 = vsub.s32 %v280, %v303
    %v305 = vsub.s32 0, %v304
    %v306 = vsel %vm278, %v305, %v304
    %vm307 = vcmp.lt.s32.totalorder %v277, 0
    %v308 = vsub.s32 0, %v277
    %v309 = vsel %vm307, %v308, %v277
    %v310 = vand.u32 %v309, 65535
    %v311 = vshrl.u32 %v309, 16
    %v313 = vmul.u32 %v310, 43691
    %v314 = vmul.u32 %v310, 43690
    %v315 = vmul.u32 %v311, 43691
    %v316 = vmul.u32 %v311, 43690
    %v317 = vshll.u32 %v314, 16
    %v318 = vshrl.u32 %v314, 16
    %v319 = vshll.u32 %v315, 16
    %v320 = vshrl.u32 %v315, 16
    %vm321 = vc.u32 %v313, %v317
    %v322 = vsel %vm321, 1, 0
    %v323 = vadd.s32 %v313, %v317
    %v324 = vadd.s32 %v316, %v322
    %vm325 = vc.u32 %v323, %v319
    %v326 = vsel %vm325, 1, 0
    %v327 = vadd.s32 %v323, %v319
    %v328 = vadd.s32 %v324, %v326
    %v329 = vadd.s32 %v328, %v318
    %v330 = vadd.s32 %v329, %v320
    %v331 = vshrl.u32 %v330, 5
    %v332 = vmul.u32 %v331, 48
    %v333 = vsub.s32 %v309, %v332
    %v334 = vsub.s32 0, %v333
    %v335 = vsel %vm307, %v334, %v333
    %vm336 = vcmp.ne.s32.totalorder %v306, 0
    %vm337 = vcmp.ne.s32.totalorder %v335, 0
    %vm338 = vcmp.lt.s32.totalorder %v306, 0
    %vm339 = vcmp.lt.s32.totalorder %v335, 0
    %vm340 = vmand %vm338, %vm336
    %vm341 = vmand %vm339, %vm337
    %v342 = vadd.s32 %v306, 48
    %v343 = vadd.s32 %v335, 48
    %v344 = vsel %vm340, %v342, %v306
    %v345 = vsel %vm341, %v343, %v335
    %vm346 = vcmp.lt.s32.totalorder %v344, 24
    %vm347 = vcmp.lt.s32.totalorder %v345, 24
    %v348 = vld [vmem:[%s10] sm:$0xff]
    %v349 = vld [vmem:[%s10 + $0x8] sm:$0xff]
    %v350 = vld [vmem:[%s11] sm:$0x3]
    %v352 = vperm.slane %v350, 0
    %v353 = vperm.slane %v350, 1
    %vm356 = vcmask 64512
    %v358 = vsel %vm356, %v270, 0
    %v361 = vsel %vm356, %v273, 0
    %363 = vmatpush.msra.mxu0 0.0
    %364 = vmatpush.msra.mxu0 0.0
    %365 = vmatpush.msra.mxu0 0.0
    %366 = vmatpush.msra.mxu0 0.0
    %367 = vmatpush.msra.mxu0 0.0
    %368 = vmatpush.msra.mxu0 0.0
    %369 = vmatpush.msra.mxu0 0.0
    %370 = vmatpush.msra.mxu0 0.0
    %371 = vmatpush.msra.mxu0 0.0
    %372 = vmatpush.msra.mxu0 0.0
    %373 = vmatpush.msra.mxu0 0.0
    %374 = vmatpush.msra.mxu0 0.0
    %375 = vmatpush.msra.mxu0 0.0
    %376 = vmatpush.msra.mxu0 0.0
    %377 = vmatpush.msra.mxu0 0.0
    %378 = vmatpush.msra.mxu0 %v348
    %379 = vmatmul.f32.gmra.mxu0 %v358
    %v380 = vpop.f32.mrf.mxu0
    %v381 = vadd.f32 %v352, %v380
    %382 = vmatmul.f32.gmra.mxu0 %v361
    %v383 = vpop.f32.mrf.mxu0
    %v384 = vadd.f32 %v352, %v383
    %385 = vdwg.mxu0
    %386 = vmatpush.msra.mxu0 0.0
    %387 = vmatpush.msra.mxu0 0.0
    %388 = vmatpush.msra.mxu0 0.0
    %389 = vmatpush.msra.mxu0 0.0
    %390 = vmatpush.msra.mxu0 0.0
    %391 = vmatpush.msra.mxu0 0.0
    %392 = vmatpush.msra.mxu0 0.0
    %393 = vmatpush.msra.mxu0 0.0
    %394 = vmatpush.msra.mxu0 0.0
    %395 = vmatpush.msra.mxu0 0.0
    %396 = vmatpush.msra.mxu0 0.0
    %397 = vmatpush.msra.mxu0 0.0
    %398 = vmatpush.msra.mxu0 0.0
    %399 = vmatpush.msra.mxu0 0.0
    %400 = vmatpush.msra.mxu0 0.0
    %401 = vmatpush.msra.mxu0 %v349
    %402 = vmatmul.f32.gmra.mxu0 %v358
    %v403 = vpop.f32.mrf.mxu0
    %v404 = vadd.f32 %v353, %v403
    %405 = vmatmul.f32.gmra.mxu0 %v361
    %v406 = vpop.f32.mrf.mxu0
    %v407 = vadd.f32 %v353, %v406
    %408 = vdwg.mxu0
    %v409 = vld [vmem:[%s12] sm:$0xff]
    %v410 = vld [vmem:[%s12 + $0x8] sm:$0xff]
    %v411 = vld [vmem:[%s12 + $0x10] sm:$0xff]
    %v412 = vld [vmem:[%s12 + $0x18] sm:$0xff]
    %v413 = vld [vmem:[%s12 + $0x20] sm:$0xff]
    %v414 = vld [vmem:[%s12 + $0x28] sm:$0xff]
    %v415 = vld [vmem:[%s12 + $0x30] sm:$0xff]
    %v416 = vld [vmem:[%s12 + $0x38] sm:$0xff]
    %v417 = vld [vmem:[%s12 + $0x40] sm:$0xff]
    %v418 = vld [vmem:[%s12 + $0x48] sm:$0xff]
    %v419 = vld [vmem:[%s12 + $0x50] sm:$0xff]
    %v420 = vld [vmem:[%s12 + $0x58] sm:$0xff]
    %v421 = vld [vmem:[%s13] sm:$0x3]
    %v423 = vperm.slane %v421, 0
    %v424 = vperm.slane %v421, 1
    %v429 = vrot.slane %v384, 6
    %v430 = vrot.slane %v407, 6
    %v433 = vsel %vm346, %v381, %v429
    %v434 = vsel %vm347, %v404, %v430
    %vm435 = vcmask 392192
    %v437 = vsel %vm435, 0.0, 0
    %439 = vmatpush.msra.mxu0 0.0
    %440 = vmatpush.msra.mxu0 0.0
    %441 = vmatpush.msra.mxu0 0.0
    %442 = vmatpush.msra.mxu0 0.0
    %443 = vmatpush.msra.mxu0 0.0
    %444 = vmatpush.msra.mxu0 0.0
    %445 = vmatpush.msra.mxu0 0.0
    %446 = vmatpush.msra.mxu0 0.0
    %447 = vmatpush.msra.mxu0 0.0
    %448 = vmatpush.msra.mxu0 0.0
    %449 = vmatpush.msra.mxu0 %v419
    %450 = vmatpush.msra.mxu0 %v417
    %451 = vmatpush.msra.mxu0 %v415
    %452 = vmatpush.msra.mxu0 %v413
    %453 = vmatpush.msra.mxu0 %v411
    %454 = vmatpush.msra.mxu0 %v409
    %455 = vmatmul.f32.gmra.mxu0 %v437
    %v456 = vpop.f32.mrf.mxu0
    %v457 = vadd.f32 %v423, %v456
    %458 = vdwg.mxu0
    %459 = vmatpush.msra.mxu0 0.0
    %460 = vmatpush.msra.mxu0 0.0
    %461 = vmatpush.msra.mxu0 0.0
    %462 = vmatpush.msra.mxu0 0.0
    %463 = vmatpush.msra.mxu0 0.0
    %464 = vmatpush.msra.mxu0 0.0
    %465 = vmatpush.msra.mxu0 0.0
    %466 = vmatpush.msra.mxu0 0.0
    %467 = vmatpush.msra.mxu0 0.0
    %468 = vmatpush.msra.mxu0 0.0
    %469 = vmatpush.msra.mxu0 %v420
    %470 = vmatpush.msra.mxu0 %v418
    %471 = vmatpush.msra.mxu0 %v416
    %472 = vmatpush.msra.mxu0 %v414
    %473 = vmatpush.msra.mxu0 %v412
    %474 = vmatpush.msra.mxu0 %v410
    %475 = vmatmul.f32.gmra.mxu0 %v437
    %v476 = vpop.f32.mrf.mxu0
    %v477 = vadd.f32 %v424, %v476
    %478 = vdwg.mxu0
    %v479 = vadd.f32 %v433, %v457
    %v480 = vxor.u32 %v479, 2147483648
    %v481 = vmul.f32 %v480, 1.442695
    %v482 = vpow.pop %v481
    %v483 = vadd.f32 %v482, 1.0
    %v484 = vrcp.pop %v483
    %v485 = vmul.f32 %v483, %v484
    %v486 = vsub.f32 1.0, %v485
    %v487 = vmul.f32 %v484, %v486
    %v488 = vadd.f32 %v484, %v487
    %vm489 = vweird.f32 %v483
    %vm490 = vweird.f32 %v484
    %vm491 = vmor %vm489, %vm490
    %v492 = vsel %vm491, %v484, %v488
    %v493 = vand.u32 2147483647, %v483
    %vm494 = vcmp.eq.f32.partialorder %v493, 8.507059e+37
    %v495 = vand.u32 %v483, 2147483648
    %v496 = vor.u32 1.1754944e-38, %v495
    %v497 = vsel %vm494, %v496, %v492
    %v498 = vmul.f32 1.0, %v497
    %501 = vrot.lane.b32.xlu0 %v457, 32
    %v502 = vpop.permute.xlu0 %501
    %503 = vrot.lane.b32.xlu0 %v477, 32
    %v504 = vpop.permute.xlu0 %503
    %vm505 = vcmask 261120
    %v506 = vsel %vm505, %v502, %v504
    %v508 = vmul.f32 %v498, %v506
    %510 = vrot.lane.b32.xlu0 %v508, 96
    %v511 = vpop.permute.xlu0 %510
    %v513 = vadd.f32 %v433, %v511
    %v514 = vadd.f32 %v434, %v511
    %v515 = vtanh.pop %v513
    %v516 = vtanh.pop %v514
    %v517 = vsub.f32 1.0, %v498
    %520 = vrot.lane.b32.xlu0 %v515, 80
    %v521 = vpop.permute.xlu0 %520
    %522 = vrot.lane.b32.xlu0 %v516, 80
    %v523 = vpop.permute.xlu0 %522
    %vm524 = vcmask 654336
    %v525 = vsel %vm524, %v521, %v523
    %v527 = vmul.f32 %v517, %v525
    %v528 = vmul.f32 %v498, 0.0
    %v529 = vadd.f32 %v527, %v528
    %v530 = vrot.slane %v384, 2
    %v531 = vrot.slane %v407, 2
    %v534 = vsel %vm346, %v381, %v530
    %v535 = vsel %vm347, %v404, %v531
    %537 = vrot.lane.b32.xlu0 %v529, 80
    %v538 = vpop.permute.xlu0 %537
    %v539 = vsel %vm435, %v538, 0
    %541 = vmatpush.msra.mxu0 0.0
    %542 = vmatpush.msra.mxu0 0.0
    %543 = vmatpush.msra.mxu0 0.0
    %544 = vmatpush.msra.mxu0 0.0
    %545 = vmatpush.msra.mxu0 0.0
    %546 = vmatpush.msra.mxu0 0.0
    %547 = vmatpush.msra.mxu0 0.0
    %548 = vmatpush.msra.mxu0 0.0
    %549 = vmatpush.msra.mxu0 0.0
    %550 = vmatpush.msra.mxu0 0.0
    %551 = vmatpush.msra.mxu0 %v419
    %552 = vmatpush.msra.mxu0 %v417
    %553 = vmatpush.msra.mxu0 %v415
    %554 = vmatpush.msra.mxu0 %v413
    %555 = vmatpush.msra.mxu0 %v411
    %556 = vmatpush.msra.mxu0 %v409
    %557 = vmatmul.f32.gmra.mxu0 %v539
    %v558 = vpop.f32.mrf.mxu0
    %v559 = vadd.f32 %v423, %v558
    %560 = vdwg.mxu0
    %561 = vmatpush.msra.mxu0 0.0
    %562 = vmatpush.msra.mxu0 0.0
    %563 = vmatpush.msra.mxu0 0.0
    %564 = vmatpush.msra.mxu0 0.0
    %565 = vmatpush.msra.mxu0 0.0
    %566 = vmatpush.msra.mxu0 0.0
    %567 = vmatpush.msra.mxu0 0.0
    %568 = vmatpush.msra.mxu0 0.0
    %569 = vmatpush.msra.mxu0 0.0
    %570 = vmatpush.msra.mxu0 0.0
    %571 = vmatpush.msra.mxu0 %v420
    %572 = vmatpush.msra.mxu0 %v418
    %573 = vmatpush.msra.mxu0 %v416
    %574 = vmatpush.msra.mxu0 %v414
    %575 = vmatpush.msra.mxu0 %v412
    %576 = vmatpush.msra.mxu0 %v410
    %577 = vmatmul.f32.gmra.mxu0 %v539
    %v578 = vpop.f32.mrf.mxu0
    %v579 = vadd.f32 %v424, %v578
    %580 = vdwg.mxu0
    %v582 = vrot.slane %v559, 6
    %v584 = vadd.f32 %v534, %v582
    %v585 = vxor.u32 %v584, 2147483648
    %v586 = vmul.f32 %v585, 1.442695
    %v587 = vpow.pop %v586
    %v588 = vadd.f32 %v587, 1.0
    %v589 = vrcp.pop %v588
    %v590 = vmul.f32 %v588, %v589
    %v591 = vsub.f32 1.0, %v590
    %v592 = vmul.f32 %v589, %v591
    %v593 = vadd.f32 %v589, %v592
    %vm594 = vweird.f32 %v588
    %vm595 = vweird.f32 %v589
    %vm596 = vmor %vm594, %vm595
    %v597 = vsel %vm596, %v589, %v593
    %v598 = vand.u32 2147483647, %v588
    %vm599 = vcmp.eq.f32.partialorder %v598, 8.507059e+37
    %v600 = vand.u32 %v588, 2147483648
    %v601 = vor.u32 1.1754944e-38, %v600
    %v602 = vsel %vm599, %v601, %v597
    %v603 = vmul.f32 1.0, %v602
    %v605 = vrot.slane %v579, 6
    %606 = vrot.lane.b32.xlu0 %v582, 32
    %v607 = vpop.permute.xlu0 %606
    %608 = vrot.lane.b32.xlu0 %v605, 32
    %v609 = vpop.permute.xlu0 %608
    %v610 = vsel %vm505, %v607, %v609
    %v612 = vmul.f32 %v603, %v610
    %614 = vrot.lane.b32.xlu0 %v612, 96
    %v615 = vpop.permute.xlu0 %614
    %v617 = vadd.f32 %v534, %v615
    %v618 = vadd.f32 %v535, %v615
    %v619 = vtanh.pop %v617
    %v620 = vtanh.pop %v618
    %v621 = vsub.f32 1.0, %v603
    %624 = vrot.lane.b32.xlu0 %v619, 80
    %v625 = vpop.permute.xlu0 %624
    %626 = vrot.lane.b32.xlu0 %v620, 80
    %v627 = vpop.permute.xlu0 %626
    %v628 = vsel %vm524, %v625, %v627
    %v630 = vmul.f32 %v621, %v628
    %v631 = vrot.slane %v529, 6
    %v633 = vmul.f32 %v603, %v631
    %v634 = vadd.f32 %v630, %v633
    %v636 = vrot.slane %v634, 2
    %637 = vrot.lane.b32.xlu0 %v636, 80
    %v638 = vpop.permute.xlu0 %637
    %v639 = vsel %vm435, %v638, 0
    %641 = vmatpush.msra.mxu0 0.0
    %642 = vmatpush.msra.mxu0 0.0
    %643 = vmatpush.msra.mxu0 0.0
    %644 = vmatpush.msra.mxu0 0.0
    %645 = vmatpush.msra.mxu0 0.0
    %646 = vmatpush.msra.mxu0 0.0
    %647 = vmatpush.msra.mxu0 0.0
    %648 = vmatpush.msra.mxu0 0.0
    %649 = vmatpush.msra.mxu0 0.0
    %650 = vmatpush.msra.mxu0 0.0
    %651 = vmatpush.msra.mxu0 %v419
    %652 = vmatpush.msra.mxu0 %v417
    %653 = vmatpush.msra.mxu0 %v415
    %654 = vmatpush.msra.mxu0 %v413
    %655 = vmatpush.msra.mxu0 %v411
    %656 = vmatpush.msra.mxu0 %v409
    %657 = vmatmul.f32.gmra.mxu0 %v639
    %v658 = vpop.f32.mrf.mxu0
    %v659 = vadd.f32 %v423, %v658
    %660 = vdwg.mxu0
    %661 = vmatpush.msra.mxu0 0.0
    %662 = vmatpush.msra.mxu0 0.0
    %663 = vmatpush.msra.mxu0 0.0
    %664 = vmatpush.msra.mxu0 0.0
    %665 = vmatpush.msra.mxu0 0.0
    %666 = vmatpush.msra.mxu0 0.0
    %667 = vmatpush.msra.mxu0 0.0
    %668 = vmatpush.msra.mxu0 0.0
    %669 = vmatpush.msra.mxu0 0.0
    %670 = vmatpush.msra.mxu0 0.0
    %671 = vmatpush.msra.mxu0 %v420
    %672 = vmatpush.msra.mxu0 %v418
    %673 = vmatpush.msra.mxu0 %v416
    %674 = vmatpush.msra.mxu0 %v414
    %675 = vmatpush.msra.mxu0 %v412
    %676 = vmatpush.msra.mxu0 %v410
    %677 = vmatmul.f32.gmra.mxu0 %v639
    %v678 = vpop.f32.mrf.mxu0
    %v679 = vadd.f32 %v424, %v678
    %680 = vdwg.mxu0
    %v682 = vrot.slane %v659, 4
    %v684 = vadd.f32 %v433, %v682
    %v685 = vxor.u32 %v684, 2147483648
    %v686 = vmul.f32 %v685, 1.442695
    %v687 = vpow.pop %v686
    %v688 = vadd.f32 %v687, 1.0
    %v689 = vrcp.pop %v688
    %v690 = vmul.f32 %v688, %v689
    %v691 = vsub.f32 1.0, %v690
    %v692 = vmul.f32 %v689, %v691
    %v693 = vadd.f32 %v689, %v692
    %vm694 = vweird.f32 %v688
    %vm695 = vweird.f32 %v689
    %vm696 = vmor %vm694, %vm695
    %v697 = vsel %vm696, %v689, %v693
    %v698 = vand.u32 2147483647, %v688
    %vm699 = vcmp.eq.f32.partialorder %v698, 8.507059e+37
    %v700 = vand.u32 %v688, 2147483648
    %v701 = vor.u32 1.1754944e-38, %v700
    %v702 = vsel %vm699, %v701, %v697
    %v703 = vmul.f32 1.0, %v702
    %v705 = vrot.slane %v679, 4
    %706 = vrot.lane.b32.xlu0 %v682, 32
    %v707 = vpop.permute.xlu0 %706
    %708 = vrot.lane.b32.xlu0 %v705, 32
    %v709 = vpop.permute.xlu0 %708
    %v710 = vsel %vm505, %v707, %v709
    %v712 = vmul.f32 %v703, %v710
    %714 = vrot.lane.b32.xlu0 %v712, 96
    %v715 = vpop.permute.xlu0 %714
    %v717 = vadd.f32 %v433, %v715
    %v718 = vadd.f32 %v434, %v715
    %v719 = vtanh.pop %v717
    %v720 = vtanh.pop %v718
    %v721 = vsub.f32 1.0, %v703
    %724 = vrot.lane.b32.xlu0 %v719, 80
    %v725 = vpop.permute.xlu0 %724
    %726 = vrot.lane.b32.xlu0 %v720, 80
    %v727 = vpop.permute.xlu0 %726
    %v728 = vsel %vm524, %v725, %v727
    %v730 = vmul.f32 %v721, %v728
    %v731 = vrot.slane %v634, 6
    %v733 = vmul.f32 %v703, %v731
    %v734 = vadd.f32 %v730, %v733
    %v736 = vrot.slane %v734, 4
    %737 = vrot.lane.b32.xlu0 %v736, 80
    %v738 = vpop.permute.xlu0 %737
    %v739 = vsel %vm435, %v738, 0
    %741 = vmatpush.msra.mxu0 0.0
    %742 = vmatpush.msra.mxu0 0.0
    %743 = vmatpush.msra.mxu0 0.0
    %744 = vmatpush.msra.mxu0 0.0
    %745 = vmatpush.msra.mxu0 0.0
    %746 = vmatpush.msra.mxu0 0.0
    %747 = vmatpush.msra.mxu0 0.0
    %748 = vmatpush.msra.mxu0 0.0
    %749 = vmatpush.msra.mxu0 0.0
    %750 = vmatpush.msra.mxu0 0.0
    %751 = vmatpush.msra.mxu0 %v419
    %752 = vmatpush.msra.mxu0 %v417
    %753 = vmatpush.msra.mxu0 %v415
    %754 = vmatpush.msra.mxu0 %v413
    %755 = vmatpush.msra.mxu0 %v411
    %756 = vmatpush.msra.mxu0 %v409
    %757 = vmatmul.f32.gmra.mxu0 %v739
    %v758 = vpop.f32.mrf.mxu0
    %v759 = vadd.f32 %v423, %v758
    %760 = vdwg.mxu0
    %761 = vmatpush.msra.mxu0 0.0
    %762 = vmatpush.msra.mxu0 0.0
    %763 = vmatpush.msra.mxu0 0.0
    %764 = vmatpush.msra.mxu0 0.0
    %765 = vmatpush.msra.mxu0 0.0
    %766 = vmatpush.msra.mxu0 0.0
    %767 = vmatpush.msra.mxu0 0.0
    %768 = vmatpush.msra.mxu0 0.0
    %769 = vmatpush.msra.mxu0 0.0
    %770 = vmatpush.msra.mxu0 0.0
    %771 = vmatpush.msra.mxu0 %v420
    %772 = vmatpush.msra.mxu0 %v418
    %773 = vmatpush.msra.mxu0 %v416
    %774 = vmatpush.msra.mxu0 %v414
    %775 = vmatpush.msra.mxu0 %v412
    %776 = vmatpush.msra.mxu0 %v410
    %777 = vmatmul.f32.gmra.mxu0 %v739
    %v778 = vpop.f32.mrf.mxu0
    %v779 = vadd.f32 %v424, %v778
    %780 = vdwg.mxu0
    %v782 = vrot.slane %v759, 2
    %v784 = vadd.f32 %v534, %v782
    %v785 = vxor.u32 %v784, 2147483648
    %v786 = vmul.f32 %v785, 1.442695
    %v787 = vpow.pop %v786
    %v788 = vadd.f32 %v787, 1.0
    %v789 = vrcp.pop %v788
    %v790 = vmul.f32 %v788, %v789
    %v791 = vsub.f32 1.0, %v790
    %v792 = vmul.f32 %v789, %v791
    %v793 = vadd.f32 %v789, %v792
    %vm794 = vweird.f32 %v788
    %vm795 = vweird.f32 %v789
    %vm796 = vmor %vm794, %vm795
    %v797 = vsel %vm796, %v789, %v793
    %v798 = vand.u32 2147483647, %v788
    %vm799 = vcmp.eq.f32.partialorder %v798, 8.507059e+37
    %v800 = vand.u32 %v788, 2147483648
    %v801 = vor.u32 1.1754944e-38, %v800
    %v802 = vsel %vm799, %v801, %v797
    %v803 = vmul.f32 1.0, %v802
    %v805 = vrot.slane %v779, 2
    %806 = vrot.lane.b32.xlu0 %v782, 32
    %v807 = vpop.permute.xlu0 %806
    %808 = vrot.lane.b32.xlu0 %v805, 32
    %v809 = vpop.permute.xlu0 %808
    %v810 = vsel %vm505, %v807, %v809
    %v812 = vmul.f32 %v803, %v810
    %814 = vrot.lane.b32.xlu0 %v812, 96
    %v815 = vpop.permute.xlu0 %814
    %v817 = vadd.f32 %v534, %v815
    %v818 = vadd.f32 %v535, %v815
    %v819 = vtanh.pop %v817
    %v820 = vtanh.pop %v818
    %v821 = vsub.f32 1.0, %v803
    %824 = vrot.lane.b32.xlu0 %v819, 80
    %v825 = vpop.permute.xlu0 %824
    %826 = vrot.lane.b32.xlu0 %v820, 80
    %v827 = vpop.permute.xlu0 %826
    %v828 = vsel %vm524, %v825, %v827
    %v830 = vmul.f32 %v821, %v828
    %v831 = vrot.slane %v734, 6
    %v833 = vmul.f32 %v803, %v831
    %v834 = vadd.f32 %v830, %v833
    %v837 = vrot.slane %v381, 6
    %v838 = vrot.slane %v404, 6
    %v841 = vsel %vm346, %v384, %v837
    %v842 = vsel %vm347, %v407, %v838
    %v844 = vrot.slane %v834, 6
    %845 = vrot.lane.b32.xlu0 %v844, 80
    %v846 = vpop.permute.xlu0 %845
    %v847 = vsel %vm435, %v846, 0
    %849 = vmatpush.msra.mxu0 0.0
    %850 = vmatpush.msra.mxu0 0.0
    %851 = vmatpush.msra.mxu0 0.0
    %852 = vmatpush.msra.mxu0 0.0
    %853 = vmatpush.msra.mxu0 0.0
    %854 = vmatpush.msra.mxu0 0.0
    %855 = vmatpush.msra.mxu0 0.0
    %856 = vmatpush.msra.mxu0 0.0
    %857 = vmatpush.msra.mxu0 0.0
    %858 = vmatpush.msra.mxu0 0.0
    %859 = vmatpush.msra.mxu0 %v419
    %860 = vmatpush.msra.mxu0 %v417
    %861 = vmatpush.msra.mxu0 %v415
    %862 = vmatpush.msra.mxu0 %v413
    %863 = vmatpush.msra.mxu0 %v411
    %864 = vmatpush.msra.mxu0 %v409
    %865 = vmatmul.f32.gmra.mxu0 %v847
    %v866 = vpop.f32.mrf.mxu0
    %v867 = vadd.f32 %v423, %v866
    %868 = vdwg.mxu0
    %869 = vmatpush.msra.mxu0 0.0
    %870 = vmatpush.msra.mxu0 0.0
    %871 = vmatpush.msra.mxu0 0.0
    %872 = vmatpush.msra.mxu0 0.0
    %873 = vmatpush.msra.mxu0 0.0
    %874 = vmatpush.msra.mxu0 0.0
    %875 = vmatpush.msra.mxu0 0.0
    %876 = vmatpush.msra.mxu0 0.0
    %877 = vmatpush.msra.mxu0 0.0
    %878 = vmatpush.msra.mxu0 0.0
    %879 = vmatpush.msra.mxu0 %v420
    %880 = vmatpush.msra.mxu0 %v418
    %881 = vmatpush.msra.mxu0 %v416
    %882 = vmatpush.msra.mxu0 %v414
    %883 = vmatpush.msra.mxu0 %v412
    %884 = vmatpush.msra.mxu0 %v410
    %885 = vmatmul.f32.gmra.mxu0 %v847
    %v886 = vpop.f32.mrf.mxu0
    %v887 = vadd.f32 %v424, %v886
    %888 = vdwg.mxu0
    %v889 = vadd.f32 %v841, %v867
    %v890 = vxor.u32 %v889, 2147483648
    %v891 = vmul.f32 %v890, 1.442695
    %v892 = vpow.pop %v891
    %v893 = vadd.f32 %v892, 1.0
    %v894 = vrcp.pop %v893
    %v895 = vmul.f32 %v893, %v894
    %v896 = vsub.f32 1.0, %v895
    %v897 = vmul.f32 %v894, %v896
    %v898 = vadd.f32 %v894, %v897
    %vm899 = vweird.f32 %v893
    %vm900 = vweird.f32 %v894
    %vm901 = vmor %vm899, %vm900
    %v902 = vsel %vm901, %v894, %v898
    %v903 = vand.u32 2147483647, %v893
    %vm904 = vcmp.eq.f32.partialorder %v903, 8.507059e+37
    %v905 = vand.u32 %v893, 2147483648
    %v906 = vor.u32 1.1754944e-38, %v905
    %v907 = vsel %vm904, %v906, %v902
    %v908 = vmul.f32 1.0, %v907
    %911 = vrot.lane.b32.xlu0 %v867, 32
    %v912 = vpop.permute.xlu0 %911
    %913 = vrot.lane.b32.xlu0 %v887, 32
    %v914 = vpop.permute.xlu0 %913
    %v915 = vsel %vm505, %v912, %v914
    %v917 = vmul.f32 %v908, %v915
    %919 = vrot.lane.b32.xlu0 %v917, 96
    %v920 = vpop.permute.xlu0 %919
    %v922 = vadd.f32 %v841, %v920
    %v923 = vadd.f32 %v842, %v920
    %v924 = vtanh.pop %v922
    %v925 = vtanh.pop %v923
    %v926 = vsub.f32 1.0, %v908
    %929 = vrot.lane.b32.xlu0 %v924, 80
    %v930 = vpop.permute.xlu0 %929
    %931 = vrot.lane.b32.xlu0 %v925, 80
    %v932 = vpop.permute.xlu0 %931
    %v933 = vsel %vm524, %v930, %v932
    %v935 = vmul.f32 %v926, %v933
    %v937 = vmul.f32 %v908, %v844
    %v938 = vadd.f32 %v935, %v937
    %v939 = vrot.slane %v381, 2
    %v940 = vrot.slane %v404, 2
    %v943 = vsel %vm346, %v384, %v939
    %v944 = vsel %vm347, %v407, %v940
    %946 = vrot.lane.b32.xlu0 %v938, 80
    %v947 = vpop.permute.xlu0 %946
    %v948 = vsel %vm435, %v947, 0
    %950 = vmatpush.msra.mxu0 0.0
    %951 = vmatpush.msra.mxu0 0.0
    %952 = vmatpush.msra.mxu0 0.0
    %953 = vmatpush.msra.mxu0 0.0
    %954 = vmatpush.msra.mxu0 0.0
    %955 = vmatpush.msra.mxu0 0.0
    %956 = vmatpush.msra.mxu0 0.0
    %957 = vmatpush.msra.mxu0 0.0
    %958 = vmatpush.msra.mxu0 0.0
    %959 = vmatpush.msra.mxu0 0.0
    %960 = vmatpush.msra.mxu0 %v419
    %961 = vmatpush.msra.mxu0 %v417
    %962 = vmatpush.msra.mxu0 %v415
    %963 = vmatpush.msra.mxu0 %v413
    %964 = vmatpush.msra.mxu0 %v411
    %965 = vmatpush.msra.mxu0 %v409
    %966 = vmatmul.f32.gmra.mxu0 %v948
    %v967 = vpop.f32.mrf.mxu0
    %v968 = vadd.f32 %v423, %v967
    %969 = vdwg.mxu0
    %970 = vmatpush.msra.mxu0 0.0
    %971 = vmatpush.msra.mxu0 0.0
    %972 = vmatpush.msra.mxu0 0.0
    %973 = vmatpush.msra.mxu0 0.0
    %974 = vmatpush.msra.mxu0 0.0
    %975 = vmatpush.msra.mxu0 0.0
    %976 = vmatpush.msra.mxu0 0.0
    %977 = vmatpush.msra.mxu0 0.0
    %978 = vmatpush.msra.mxu0 0.0
    %979 = vmatpush.msra.mxu0 0.0
    %980 = vmatpush.msra.mxu0 %v420
    %981 = vmatpush.msra.mxu0 %v418
    %982 = vmatpush.msra.mxu0 %v416
    %983 = vmatpush.msra.mxu0 %v414
    %984 = vmatpush.msra.mxu0 %v412
    %985 = vmatpush.msra.mxu0 %v410
    %986 = vmatmul.f32.gmra.mxu0 %v948
    %v987 = vpop.f32.mrf.mxu0
    %v988 = vadd.f32 %v424, %v987
    %989 = vdwg.mxu0
    %v991 = vrot.slane %v968, 6
    %v993 = vadd.f32 %v943, %v991
    %v994 = vxor.u32 %v993, 2147483648
    %v995 = vmul.f32 %v994, 1.442695
    %v996 = vpow.pop %v995
    %v997 = vadd.f32 %v996, 1.0
    %v998 = vrcp.pop %v997
    %v999 = vmul.f32 %v997, %v998
    %v1000 = vsub.f32 1.0, %v999
    %v1001 = vmul.f32 %v998, %v1000
    %v1002 = vadd.f32 %v998, %v1001
    %vm1003 = vweird.f32 %v997
    %vm1004 = vweird.f32 %v998
    %vm1005 = vmor %vm1003, %vm1004
    %v1006 = vsel %vm1005, %v998, %v1002
    %v1007 = vand.u32 2147483647, %v997
    %vm1008 = vcmp.eq.f32.partialorder %v1007, 8.507059e+37
    %v1009 = vand.u32 %v997, 2147483648
    %v1010 = vor.u32 1.1754944e-38, %v1009
    %v1011 = vsel %vm1008, %v1010, %v1006
    %v1012 = vmul.f32 1.0, %v1011
    %v1014 = vrot.slane %v988, 6
    %1015 = vrot.lane.b32.xlu0 %v991, 32
    %v1016 = vpop.permute.xlu0 %1015
    %1017 = vrot.lane.b32.xlu0 %v1014, 32
    %v1018 = vpop.permute.xlu0 %1017
    %v1019 = vsel %vm505, %v1016, %v1018
    %v1021 = vmul.f32 %v1012, %v1019
    %1023 = vrot.lane.b32.xlu0 %v1021, 96
    %v1024 = vpop.permute.xlu0 %1023
    %v1026 = vadd.f32 %v943, %v1024
    %v1027 = vadd.f32 %v944, %v1024
    %v1028 = vtanh.pop %v1026
    %v1029 = vtanh.pop %v1027
    %v1030 = vsub.f32 1.0, %v1012
    %1033 = vrot.lane.b32.xlu0 %v1028, 80
    %v1034 = vpop.permute.xlu0 %1033
    %1035 = vrot.lane.b32.xlu0 %v1029, 80
    %v1036 = vpop.permute.xlu0 %1035
    %v1037 = vsel %vm524, %v1034, %v1036
    %v1039 = vmul.f32 %v1030, %v1037
    %v1040 = vrot.slane %v938, 6
    %v1042 = vmul.f32 %v1012, %v1040
    %v1043 = vadd.f32 %v1039, %v1042
    %v1045 = vrot.slane %v1043, 2
    %1046 = vrot.lane.b32.xlu0 %v1045, 80
    %v1047 = vpop.permute.xlu0 %1046
    %v1048 = vsel %vm435, %v1047, 0
    %1050 = vmatpush.msra.mxu0 0.0
    %1051 = vmatpush.msra.mxu0 0.0
    %1052 = vmatpush.msra.mxu0 0.0
    %1053 = vmatpush.msra.mxu0 0.0
    %1054 = vmatpush.msra.mxu0 0.0
    %1055 = vmatpush.msra.mxu0 0.0
    %1056 = vmatpush.msra.mxu0 0.0
    %1057 = vmatpush.msra.mxu0 0.0
    %1058 = vmatpush.msra.mxu0 0.0
    %1059 = vmatpush.msra.mxu0 0.0
    %1060 = vmatpush.msra.mxu0 %v419
    %1061 = vmatpush.msra.mxu0 %v417
    %1062 = vmatpush.msra.mxu0 %v415
    %1063 = vmatpush.msra.mxu0 %v413
    %1064 = vmatpush.msra.mxu0 %v411
    %1065 = vmatpush.msra.mxu0 %v409
    %1066 = vmatmul.f32.gmra.mxu0 %v1048
    %v1067 = vpop.f32.mrf.mxu0
    %v1068 = vadd.f32 %v423, %v1067
    %1069 = vdwg.mxu0
    %1070 = vmatpush.msra.mxu0 0.0
    %1071 = vmatpush.msra.mxu0 0.0
    %1072 = vmatpush.msra.mxu0 0.0
    %1073 = vmatpush.msra.mxu0 0.0
    %1074 = vmatpush.msra.mxu0 0.0
    %1075 = vmatpush.msra.mxu0 0.0
    %1076 = vmatpush.msra.mxu0 0.0
    %1077 = vmatpush.msra.mxu0 0.0
    %1078 = vmatpush.msra.mxu0 0.0
    %1079 = vmatpush.msra.mxu0 0.0
    %1080 = vmatpush.msra.mxu0 %v420
    %1081 = vmatpush.msra.mxu0 %v418
    %1082 = vmatpush.msra.mxu0 %v416
    %1083 = vmatpush.msra.mxu0 %v414
    %1084 = vmatpush.msra.mxu0 %v412
    %1085 = vmatpush.msra.mxu0 %v410
    %1086 = vmatmul.f32.gmra.mxu0 %v1048
    %v1087 = vpop.f32.mrf.mxu0
    %v1088 = vadd.f32 %v424, %v1087
    %1089 = vdwg.mxu0
    %v1091 = vrot.slane %v1068, 4
    %v1093 = vadd.f32 %v841, %v1091
    %v1094 = vxor.u32 %v1093, 2147483648
    %v1095 = vmul.f32 %v1094, 1.442695
    %v1096 = vpow.pop %v1095
    %v1097 = vadd.f32 %v1096, 1.0
    %v1098 = vrcp.pop %v1097
    %v1099 = vmul.f32 %v1097, %v1098
    %v1100 = vsub.f32 1.0, %v1099
    %v1101 = vmul.f32 %v1098, %v1100
    %v1102 = vadd.f32 %v1098, %v1101
    %vm1103 = vweird.f32 %v1097
    %vm1104 = vweird.f32 %v1098
    %vm1105 = vmor %vm1103, %vm1104
    %v1106 = vsel %vm1105, %v1098, %v1102
    %v1107 = vand.u32 2147483647, %v1097
    %vm1108 = vcmp.eq.f32.partialorder %v1107, 8.507059e+37
    %v1109 = vand.u32 %v1097, 2147483648
    %v1110 = vor.u32 1.1754944e-38, %v1109
    %v1111 = vsel %vm1108, %v1110, %v1106
    %v1112 = vmul.f32 1.0, %v1111
    %v1114 = vrot.slane %v1088, 4
    %1115 = vrot.lane.b32.xlu0 %v1091, 32
    %v1116 = vpop.permute.xlu0 %1115
    %1117 = vrot.lane.b32.xlu0 %v1114, 32
    %v1118 = vpop.permute.xlu0 %1117
    %v1119 = vsel %vm505, %v1116, %v1118
    %v1121 = vmul.f32 %v1112, %v1119
    %1123 = vrot.lane.b32.xlu0 %v1121, 96
    %v1124 = vpop.permute.xlu0 %1123
    %v1126 = vadd.f32 %v841, %v1124
    %v1127 = vadd.f32 %v842, %v1124
    %v1128 = vtanh.pop %v1126
    %v1129 = vtanh.pop %v1127
    %v1130 = vsub.f32 1.0, %v1112
    %1133 = vrot.lane.b32.xlu0 %v1128, 80
    %v1134 = vpop.permute.xlu0 %1133
    %1135 = vrot.lane.b32.xlu0 %v1129, 80
    %v1136 = vpop.permute.xlu0 %1135
    %v1137 = vsel %vm524, %v1134, %v1136
    %v1139 = vmul.f32 %v1130, %v1137
    %v1140 = vrot.slane %v1043, 6
    %v1142 = vmul.f32 %v1112, %v1140
    %v1143 = vadd.f32 %v1139, %v1142
    %v1145 = vrot.slane %v1143, 4
    %1146 = vrot.lane.b32.xlu0 %v1145, 80
    %v1147 = vpop.permute.xlu0 %1146
    %v1148 = vsel %vm435, %v1147, 0
    %1150 = vmatpush.msra.mxu0 0.0
    %1151 = vmatpush.msra.mxu0 0.0
    %1152 = vmatpush.msra.mxu0 0.0
    %1153 = vmatpush.msra.mxu0 0.0
    %1154 = vmatpush.msra.mxu0 0.0
    %1155 = vmatpush.msra.mxu0 0.0
    %1156 = vmatpush.msra.mxu0 0.0
    %1157 = vmatpush.msra.mxu0 0.0
    %1158 = vmatpush.msra.mxu0 0.0
    %1159 = vmatpush.msra.mxu0 0.0
    %1160 = vmatpush.msra.mxu0 %v419
    %1161 = vmatpush.msra.mxu0 %v417
    %1162 = vmatpush.msra.mxu0 %v415
    %1163 = vmatpush.msra.mxu0 %v413
    %1164 = vmatpush.msra.mxu0 %v411
    %1165 = vmatpush.msra.mxu0 %v409
    %1166 = vmatmul.f32.gmra.mxu0 %v1148
    %v1167 = vpop.f32.mrf.mxu0
    %v1168 = vadd.f32 %v423, %v1167
    %1169 = vdwg.mxu0
    %1170 = vmatpush.msra.mxu0 0.0
    %1171 = vmatpush.msra.mxu0 0.0
    %1172 = vmatpush.msra.mxu0 0.0
    %1173 = vmatpush.msra.mxu0 0.0
    %1174 = vmatpush.msra.mxu0 0.0
    %1175 = vmatpush.msra.mxu0 0.0
    %1176 = vmatpush.msra.mxu0 0.0
    %1177 = vmatpush.msra.mxu0 0.0
    %1178 = vmatpush.msra.mxu0 0.0
    %1179 = vmatpush.msra.mxu0 0.0
    %1180 = vmatpush.msra.mxu0 %v420
    %1181 = vmatpush.msra.mxu0 %v418
    %1182 = vmatpush.msra.mxu0 %v416
    %1183 = vmatpush.msra.mxu0 %v414
    %1184 = vmatpush.msra.mxu0 %v412
    %1185 = vmatpush.msra.mxu0 %v410
    %1186 = vmatmul.f32.gmra.mxu0 %v1148
    %v1187 = vpop.f32.mrf.mxu0
    %v1188 = vadd.f32 %v424, %v1187
    %1189 = vdwg.mxu0
    %v1191 = vrot.slane %v1168, 2
    %v1193 = vadd.f32 %v943, %v1191
    %v1194 = vxor.u32 %v1193, 2147483648
    %v1195 = vmul.f32 %v1194, 1.442695
    %v1196 = vpow.pop %v1195
    %v1197 = vadd.f32 %v1196, 1.0
    %v1198 = vrcp.pop %v1197
    %v1199 = vmul.f32 %v1197, %v1198
    %v1200 = vsub.f32 1.0, %v1199
    %v1201 = vmul.f32 %v1198, %v1200
    %v1202 = vadd.f32 %v1198, %v1201
    %vm1203 = vweird.f32 %v1197
    %vm1204 = vweird.f32 %v1198
    %vm1205 = vmor %vm1203, %vm1204
    %v1206 = vsel %vm1205, %v1198, %v1202
    %v1207 = vand.u32 2147483647, %v1197
    %vm1208 = vcmp.eq.f32.partialorder %v1207, 8.507059e+37
    %v1209 = vand.u32 %v1197, 2147483648
    %v1210 = vor.u32 1.1754944e-38, %v1209
    %v1211 = vsel %vm1208, %v1210, %v1206
    %v1212 = vmul.f32 1.0, %v1211
    %v1214 = vrot.slane %v1188, 2
    %1215 = vrot.lane.b32.xlu0 %v1191, 32
    %v1216 = vpop.permute.xlu0 %1215
    %1217 = vrot.lane.b32.xlu0 %v1214, 32
    %v1218 = vpop.permute.xlu0 %1217
    %v1219 = vsel %vm505, %v1216, %v1218
    %v1221 = vmul.f32 %v1212, %v1219
    %1223 = vrot.lane.b32.xlu0 %v1221, 96
    %v1224 = vpop.permute.xlu0 %1223
    %v1226 = vadd.f32 %v943, %v1224
    %v1227 = vadd.f32 %v944, %v1224
    %v1228 = vtanh.pop %v1226
    %v1229 = vtanh.pop %v1227
    %v1230 = vsub.f32 1.0, %v1212
    %1233 = vrot.lane.b32.xlu0 %v1228, 80
    %v1234 = vpop.permute.xlu0 %1233
    %1235 = vrot.lane.b32.xlu0 %v1229, 80
    %v1236 = vpop.permute.xlu0 %1235
    %v1237 = vsel %vm524, %v1234, %v1236
    %v1239 = vmul.f32 %v1230, %v1237
    %v1240 = vrot.slane %v1143, 6
    %v1242 = vmul.f32 %v1212, %v1240
    %v1243 = vadd.f32 %v1239, %v1242
    %v1246 = vrot.slane %v1243, 6
    %1247 = vrot.lane.b32.xlu0 %v1246, 80
    %v1248 = vpop.permute.xlu0 %1247
    %vm1250 = vcmask 195584
    %v1251 = vsel %vm1250, %v538, %v1248
    %1252 = vrot.lane.b32.xlu0 %v634, 80
    %v1253 = vpop.permute.xlu0 %1252
    %v1255 = vrot.slane %v1143, 2
    %1256 = vrot.lane.b32.xlu0 %v1255, 80
    %v1257 = vpop.permute.xlu0 %1256
    %v1259 = vsel %vm1250, %v1253, %v1257
    %1260 = vrot.lane.b32.xlu0 %v734, 80
    %v1261 = vpop.permute.xlu0 %1260
    %1263 = vrot.lane.b32.xlu0 %v1140, 80
    %v1264 = vpop.permute.xlu0 %1263
    %v1266 = vsel %vm1250, %v1261, %v1264
    %1267 = vrot.lane.b32.xlu0 %v834, 80
    %v1268 = vpop.permute.xlu0 %1267
    %v1270 = vrot.slane %v938, 2
    %1271 = vrot.lane.b32.xlu0 %v1270, 80
    %v1272 = vpop.permute.xlu0 %1271
    %v1274 = vsel %vm1250, %v1268, %v1272
    %v1277 = vsel %vm1250, %v947, %v846
    %1278 = vrot.lane.b32.xlu0 %v1043, 80
    %v1279 = vpop.permute.xlu0 %1278
    %v1281 = vrot.slane %v734, 2
    %1282 = vrot.lane.b32.xlu0 %v1281, 80
    %v1283 = vpop.permute.xlu0 %1282
    %v1285 = vsel %vm1250, %v1279, %v1283
    %1286 = vrot.lane.b32.xlu0 %v1143, 80
    %v1287 = vpop.permute.xlu0 %1286
    %1289 = vrot.lane.b32.xlu0 %v731, 80
    %v1290 = vpop.permute.xlu0 %1289
    %v1292 = vsel %vm1250, %v1287, %v1290
    %1293 = vrot.lane.b32.xlu0 %v1243, 80
    %v1294 = vpop.permute.xlu0 %1293
    %v1296 = vrot.slane %v529, 2
    %1297 = vrot.lane.b32.xlu0 %v1296, 80
    %v1298 = vpop.permute.xlu0 %1297
    %v1300 = vsel %vm1250, %v1294, %v1298
    %vm1301 = vcmask 1041408
    %v1302 = vsel %vm1301, %v1251, %v1259
    %v1303 = vsel %vm205, %v1302, %v1266
    %v1304 = vsel %vm160, %v1303, %v1274
    %v1305 = vsel %vm1301, %v1277, %v1285
    %v1306 = vsel %vm205, %v1305, %v1292
    %v1307 = vsel %vm160, %v1306, %v1300
    %v1308 = vld [vmem:[%s14] sm:$0xff]
    %v1309 = vld [vmem:[%s14 + $0x8] sm:$0xff]
    %v1310 = vld [vmem:[%s14 + $0x10] sm:$0xff]
    %v1311 = vld [vmem:[%s14 + $0x18] sm:$0xff]
    %v1312 = vld [vmem:[%s14 + $0x20] sm:$0xff]
    %v1313 = vld [vmem:[%s14 + $0x28] sm:$0xff]
    %v1314 = vld [vmem:[%s14 + $0x30] sm:$0xff]
    %v1315 = vld [vmem:[%s14 + $0x38] sm:$0xff]
    %v1316 = vld [vmem:[%s14 + $0x40] sm:$0xff]
    %v1317 = vld [vmem:[%s14 + $0x48] sm:$0xff]
    %v1318 = vld [vmem:[%s14 + $0x50] sm:$0xff]
    %v1319 = vld [vmem:[%s14 + $0x58] sm:$0xff]
    %v1320 = vld [vmem:[%s15] sm:$0x3]
    %v1322 = vperm.slane %v1320, 0
    %v1323 = vperm.slane %v1320, 1
    %v1327 = vsel %vm435, %v1304, 0
    %v1330 = vsel %vm435, %v1307, 0
    %1332 = vmatpush.msra.mxu0 0.0
    %1333 = vmatpush.msra.mxu0 0.0
    %1334 = vmatpush.msra.mxu0 0.0
    %1335 = vmatpush.msra.mxu0 0.0
    %1336 = vmatpush.msra.mxu0 0.0
    %1337 = vmatpush.msra.mxu0 0.0
    %1338 = vmatpush.msra.mxu0 0.0
    %1339 = vmatpush.msra.mxu0 0.0
    %1340 = vmatpush.msra.mxu0 0.0
    %1341 = vmatpush.msra.mxu0 0.0
    %1342 = vmatpush.msra.mxu0 %v1318
    %1343 = vmatpush.msra.mxu0 %v1316
    %1344 = vmatpush.msra.mxu0 %v1314
    %1345 = vmatpush.msra.mxu0 %v1312
    %1346 = vmatpush.msra.mxu0 %v1310
    %1347 = vmatpush.msra.mxu0 %v1308
    %1348 = vmatmul.f32.gmra.mxu0 %v1327
    %v1349 = vpop.f32.mrf.mxu0
    %v1350 = vadd.f32 %v1322, %v1349
    %1351 = vmatmul.f32.gmra.mxu0 %v1330
    %v1352 = vpop.f32.mrf.mxu0
    %v1353 = vadd.f32 %v1322, %v1352
    %1354 = vdwg.mxu0
    %1355 = vmatpush.msra.mxu0 0.0
    %1356 = vmatpush.msra.mxu0 0.0
    %1357 = vmatpush.msra.mxu0 0.0
    %1358 = vmatpush.msra.mxu0 0.0
    %1359 = vmatpush.msra.mxu0 0.0
    %1360 = vmatpush.msra.mxu0 0.0
    %1361 = vmatpush.msra.mxu0 0.0
    %1362 = vmatpush.msra.mxu0 0.0
    %1363 = vmatpush.msra.mxu0 0.0
    %1364 = vmatpush.msra.mxu0 0.0
    %1365 = vmatpush.msra.mxu0 %v1319
    %1366 = vmatpush.msra.mxu0 %v1317
    %1367 = vmatpush.msra.mxu0 %v1315
    %1368 = vmatpush.msra.mxu0 %v1313
    %1369 = vmatpush.msra.mxu0 %v1311
    %1370 = vmatpush.msra.mxu0 %v1309
    %1371 = vmatmul.f32.gmra.mxu0 %v1327
    %v1372 = vpop.f32.mrf.mxu0
    %v1373 = vadd.f32 %v1323, %v1372
    %1374 = vmatmul.f32.gmra.mxu0 %v1330
    %v1375 = vpop.f32.mrf.mxu0
    %v1376 = vadd.f32 %v1323, %v1375
    %1377 = vdwg.mxu0
    %v1378 = vld [vmem:[#allocation5] sm:$0xff]
    %v1379 = vld [vmem:[#allocation5 + $0x8] sm:$0xff]
    %v1380 = vld [vmem:[#allocation5 + $0x10] sm:$0xff]
    %v1381 = vld [vmem:[#allocation5 + $0x18] sm:$0xff]
    %v1382 = vld [vmem:[#allocation5 + $0x20] sm:$0xff]
    %v1383 = vld [vmem:[#allocation5 + $0x28] sm:$0xff]
    %v1384 = vld [vmem:[#allocation5 + $0x30] sm:$0xff]
    %v1385 = vld [vmem:[#allocation5 + $0x38] sm:$0xff]
    %v1386 = vld [vmem:[#allocation5 + $0x40] sm:$0xff]
    %v1387 = vld [vmem:[#allocation5 + $0x48] sm:$0xff]
    %v1388 = vld [vmem:[#allocation5 + $0x50] sm:$0xff]
    %v1389 = vld [vmem:[#allocation5 + $0x58] sm:$0xff]
    %v1390 = vld [vmem:[%s17] sm:$0x3]
    %v1392 = vperm.slane %v1390, 0
    %v1393 = vperm.slane %v1390, 1
    %v1398 = vrot.slane %v1353, 6
    %v1399 = vrot.slane %v1376, 6
    %v1402 = vsel %vm346, %v1350, %v1398
    %v1403 = vsel %vm347, %v1373, %v1399
    %1404 = vmatpush.msra.mxu0 0.0
    %1405 = vmatpush.msra.mxu0 0.0
    %1406 = vmatpush.msra.mxu0 0.0
    %1407 = vmatpush.msra.mxu0 0.0
    %1408 = vmatpush.msra.mxu0 0.0
    %1409 = vmatpush.msra.mxu0 0.0
    %1410 = vmatpush.msra.mxu0 0.0
    %1411 = vmatpush.msra.mxu0 0.0
    %1412 = vmatpush.msra.mxu0 0.0
    %1413 = vmatpush.msra.mxu0 0.0
    %1414 = vmatpush.msra.mxu0 %v1388
    %1415 = vmatpush.msra.mxu0 %v1386
    %1416 = vmatpush.msra.mxu0 %v1384
    %1417 = vmatpush.msra.mxu0 %v1382
    %1418 = vmatpush.msra.mxu0 %v1380
    %1419 = vmatpush.msra.mxu0 %v1378
    %1420 = vmatmul.f32.gmra.mxu0 %v437
    %v1421 = vpop.f32.mrf.mxu0
    %v1422 = vadd.f32 %v1392, %v1421
    %1423 = vdwg.mxu0
    %1424 = vmatpush.msra.mxu0 0.0
    %1425 = vmatpush.msra.mxu0 0.0
    %1426 = vmatpush.msra.mxu0 0.0
    %1427 = vmatpush.msra.mxu0 0.0
    %1428 = vmatpush.msra.mxu0 0.0
    %1429 = vmatpush.msra.mxu0 0.0
    %1430 = vmatpush.msra.mxu0 0.0
    %1431 = vmatpush.msra.mxu0 0.0
    %1432 = vmatpush.msra.mxu0 0.0
    %1433 = vmatpush.msra.mxu0 0.0
    %1434 = vmatpush.msra.mxu0 %v1389
    %1435 = vmatpush.msra.mxu0 %v1387
    %1436 = vmatpush.msra.mxu0 %v1385
    %1437 = vmatpush.msra.mxu0 %v1383
    %1438 = vmatpush.msra.mxu0 %v1381
    %1439 = vmatpush.msra.mxu0 %v1379
    %1440 = vmatmul.f32.gmra.mxu0 %v437
    %v1441 = vpop.f32.mrf.mxu0
    %v1442 = vadd.f32 %v1393, %v1441
    %1443 = vdwg.mxu0
    %v1444 = vadd.f32 %v1402, %v1422
    %v1445 = vxor.u32 %v1444, 2147483648
    %v1446 = vmul.f32 %v1445, 1.442695
    %v1447 = vpow.pop %v1446
    %v1448 = vadd.f32 %v1447, 1.0
    %v1449 = vrcp.pop %v1448
    %v1450 = vmul.f32 %v1448, %v1449
    %v1451 = vsub.f32 1.0, %v1450
    %v1452 = vmul.f32 %v1449, %v1451
    %v1453 = vadd.f32 %v1449, %v1452
    %vm1454 = vweird.f32 %v1448
    %vm1455 = vweird.f32 %v1449
    %vm1456 = vmor %vm1454, %vm1455
    %v1457 = vsel %vm1456, %v1449, %v1453
    %v1458 = vand.u32 2147483647, %v1448
    %vm1459 = vcmp.eq.f32.partialorder %v1458, 8.507059e+37
    %v1460 = vand.u32 %v1448, 2147483648
    %v1461 = vor.u32 1.1754944e-38, %v1460
    %v1462 = vsel %vm1459, %v1461, %v1457
    %v1463 = vmul.f32 1.0, %v1462
    %1466 = vrot.lane.b32.xlu0 %v1422, 32
    %v1467 = vpop.permute.xlu0 %1466
    %1468 = vrot.lane.b32.xlu0 %v1442, 32
    %v1469 = vpop.permute.xlu0 %1468
    %v1470 = vsel %vm505, %v1467, %v1469
    %v1472 = vmul.f32 %v1463, %v1470
    %1474 = vrot.lane.b32.xlu0 %v1472, 96
    %v1475 = vpop.permute.xlu0 %1474
    %v1477 = vadd.f32 %v1402, %v1475
    %v1478 = vadd.f32 %v1403, %v1475
    %v1479 = vtanh.pop %v1477
    %v1480 = vtanh.pop %v1478
    %v1481 = vsub.f32 1.0, %v1463
    %1484 = vrot.lane.b32.xlu0 %v1479, 80
    %v1485 = vpop.permute.xlu0 %1484
    %1486 = vrot.lane.b32.xlu0 %v1480, 80
    %v1487 = vpop.permute.xlu0 %1486
    %v1488 = vsel %vm524, %v1485, %v1487
    %v1490 = vmul.f32 %v1481, %v1488
    %v1491 = vmul.f32 %v1463, 0.0
    %v1492 = vadd.f32 %v1490, %v1491
    %v1493 = vrot.slane %v1353, 2
    %v1494 = vrot.slane %v1376, 2
    %v1497 = vsel %vm346, %v1350, %v1493
    %v1498 = vsel %vm347, %v1373, %v1494
    %1500 = vrot.lane.b32.xlu0 %v1492, 80
    %v1501 = vpop.permute.xlu0 %1500
    %v1502 = vsel %vm435, %v1501, 0
    %1504 = vmatpush.msra.mxu0 0.0
    %1505 = vmatpush.msra.mxu0 0.0
    %1506 = vmatpush.msra.mxu0 0.0
    %1507 = vmatpush.msra.mxu0 0.0
    %1508 = vmatpush.msra.mxu0 0.0
    %1509 = vmatpush.msra.mxu0 0.0
    %1510 = vmatpush.msra.mxu0 0.0
    %1511 = vmatpush.msra.mxu0 0.0
    %1512 = vmatpush.msra.mxu0 0.0
    %1513 = vmatpush.msra.mxu0 0.0
    %1514 = vmatpush.msra.mxu0 %v1388
    %1515 = vmatpush.msra.mxu0 %v1386
    %1516 = vmatpush.msra.mxu0 %v1384
    %1517 = vmatpush.msra.mxu0 %v1382
    %1518 = vmatpush.msra.mxu0 %v1380
    %1519 = vmatpush.msra.mxu0 %v1378
    %1520 = vmatmul.f32.gmra.mxu0 %v1502
    %v1521 = vpop.f32.mrf.mxu0
    %v1522 = vadd.f32 %v1392, %v1521
    %1523 = vdwg.mxu0
    %1524 = vmatpush.msra.mxu0 0.0
    %1525 = vmatpush.msra.mxu0 0.0
    %1526 = vmatpush.msra.mxu0 0.0
    %1527 = vmatpush.msra.mxu0 0.0
    %1528 = vmatpush.msra.mxu0 0.0
    %1529 = vmatpush.msra.mxu0 0.0
    %1530 = vmatpush.msra.mxu0 0.0
    %1531 = vmatpush.msra.mxu0 0.0
    %1532 = vmatpush.msra.mxu0 0.0
    %1533 = vmatpush.msra.mxu0 0.0
    %1534 = vmatpush.msra.mxu0 %v1389
    %1535 = vmatpush.msra.mxu0 %v1387
    %1536 = vmatpush.msra.mxu0 %v1385
    %1537 = vmatpush.msra.mxu0 %v1383
    %1538 = vmatpush.msra.mxu0 %v1381
    %1539 = vmatpush.msra.mxu0 %v1379
    %1540 = vmatmul.f32.gmra.mxu0 %v1502
    %v1541 = vpop.f32.mrf.mxu0
    %v1542 = vadd.f32 %v1393, %v1541
    %1543 = vdwg.mxu0
    %v1545 = vrot.slane %v1522, 6
    %v1547 = vadd.f32 %v1497, %v1545
    %v1548 = vxor.u32 %v1547, 2147483648
    %v1549 = vmul.f32 %v1548, 1.442695
    %v1550 = vpow.pop %v1549
    %v1551 = vadd.f32 %v1550, 1.0
    %v1552 = vrcp.pop %v1551
    %v1553 = vmul.f32 %v1551, %v1552
    %v1554 = vsub.f32 1.0, %v1553
    %v1555 = vmul.f32 %v1552, %v1554
    %v1556 = vadd.f32 %v1552, %v1555
    %vm1557 = vweird.f32 %v1551
    %vm1558 = vweird.f32 %v1552
    %vm1559 = vmor %vm1557, %vm1558
    %v1560 = vsel %vm1559, %v1552, %v1556
    %v1561 = vand.u32 2147483647, %v1551
    %vm1562 = vcmp.eq.f32.partialorder %v1561, 8.507059e+37
    %v1563 = vand.u32 %v1551, 2147483648
    %v1564 = vor.u32 1.1754944e-38, %v1563
    %v1565 = vsel %vm1562, %v1564, %v1560
    %v1566 = vmul.f32 1.0, %v1565
    %v1568 = vrot.slane %v1542, 6
    %1569 = vrot.lane.b32.xlu0 %v1545, 32
    %v1570 = vpop.permute.xlu0 %1569
    %1571 = vrot.lane.b32.xlu0 %v1568, 32
    %v1572 = vpop.permute.xlu0 %1571
    %v1573 = vsel %vm505, %v1570, %v1572
    %v1575 = vmul.f32 %v1566, %v1573
    %1577 = vrot.lane.b32.xlu0 %v1575, 96
    %v1578 = vpop.permute.xlu0 %1577
    %v1580 = vadd.f32 %v1497, %v1578
    %v1581 = vadd.f32 %v1498, %v1578
    %v1582 = vtanh.pop %v1580
    %v1583 = vtanh.pop %v1581
    %v1584 = vsub.f32 1.0, %v1566
    %1587 = vrot.lane.b32.xlu0 %v1582, 80
    %v1588 = vpop.permute.xlu0 %1587
    %1589 = vrot.lane.b32.xlu0 %v1583, 80
    %v1590 = vpop.permute.xlu0 %1589
    %v1591 = vsel %vm524, %v1588, %v1590
    %v1593 = vmul.f32 %v1584, %v1591
    %v1594 = vrot.slane %v1492, 6
    %v1596 = vmul.f32 %v1566, %v1594
    %v1597 = vadd.f32 %v1593, %v1596
    %v1599 = vrot.slane %v1597, 2
    %1600 = vrot.lane.b32.xlu0 %v1599, 80
    %v1601 = vpop.permute.xlu0 %1600
    %v1602 = vsel %vm435, %v1601, 0
    %1604 = vmatpush.msra.mxu0 0.0
    %1605 = vmatpush.msra.mxu0 0.0
    %1606 = vmatpush.msra.mxu0 0.0
    %1607 = vmatpush.msra.mxu0 0.0
    %1608 = vmatpush.msra.mxu0 0.0
    %1609 = vmatpush.msra.mxu0 0.0
    %1610 = vmatpush.msra.mxu0 0.0
    %1611 = vmatpush.msra.mxu0 0.0
    %1612 = vmatpush.msra.mxu0 0.0
    %1613 = vmatpush.msra.mxu0 0.0
    %1614 = vmatpush.msra.mxu0 %v1388
    %1615 = vmatpush.msra.mxu0 %v1386
    %1616 = vmatpush.msra.mxu0 %v1384
    %1617 = vmatpush.msra.mxu0 %v1382
    %1618 = vmatpush.msra.mxu0 %v1380
    %1619 = vmatpush.msra.mxu0 %v1378
    %1620 = vmatmul.f32.gmra.mxu0 %v1602
    %v1621 = vpop.f32.mrf.mxu0
    %v1622 = vadd.f32 %v1392, %v1621
    %1623 = vdwg.mxu0
    %1624 = vmatpush.msra.mxu0 0.0
    %1625 = vmatpush.msra.mxu0 0.0
    %1626 = vmatpush.msra.mxu0 0.0
    %1627 = vmatpush.msra.mxu0 0.0
    %1628 = vmatpush.msra.mxu0 0.0
    %1629 = vmatpush.msra.mxu0 0.0
    %1630 = vmatpush.msra.mxu0 0.0
    %1631 = vmatpush.msra.mxu0 0.0
    %1632 = vmatpush.msra.mxu0 0.0
    %1633 = vmatpush.msra.mxu0 0.0
    %1634 = vmatpush.msra.mxu0 %v1389
    %1635 = vmatpush.msra.mxu0 %v1387
    %1636 = vmatpush.msra.mxu0 %v1385
    %1637 = vmatpush.msra.mxu0 %v1383
    %1638 = vmatpush.msra.mxu0 %v1381
    %1639 = vmatpush.msra.mxu0 %v1379
    %1640 = vmatmul.f32.gmra.mxu0 %v1602
    %v1641 = vpop.f32.mrf.mxu0
    %v1642 = vadd.f32 %v1393, %v1641
    %1643 = vdwg.mxu0
    %v1645 = vrot.slane %v1622, 4
    %v1647 = vadd.f32 %v1402, %v1645
    %v1648 = vxor.u32 %v1647, 2147483648
    %v1649 = vmul.f32 %v1648, 1.442695
    %v1650 = vpow.pop %v1649
    %v1651 = vadd.f32 %v1650, 1.0
    %v1652 = vrcp.pop %v1651
    %v1653 = vmul.f32 %v1651, %v1652
    %v1654 = vsub.f32 1.0, %v1653
    %v1655 = vmul.f32 %v1652, %v1654
    %v1656 = vadd.f32 %v1652, %v1655
    %vm1657 = vweird.f32 %v1651
    %vm1658 = vweird.f32 %v1652
    %vm1659 = vmor %vm1657, %vm1658
    %v1660 = vsel %vm1659, %v1652, %v1656
    %v1661 = vand.u32 2147483647, %v1651
    %vm1662 = vcmp.eq.f32.partialorder %v1661, 8.507059e+37
    %v1663 = vand.u32 %v1651, 2147483648
    %v1664 = vor.u32 1.1754944e-38, %v1663
    %v1665 = vsel %vm1662, %v1664, %v1660
    %v1666 = vmul.f32 1.0, %v1665
    %v1668 = vrot.slane %v1642, 4
    %1669 = vrot.lane.b32.xlu0 %v1645, 32
    %v1670 = vpop.permute.xlu0 %1669
    %1671 = vrot.lane.b32.xlu0 %v1668, 32
    %v1672 = vpop.permute.xlu0 %1671
    %v1673 = vsel %vm505, %v1670, %v1672
    %v1675 = vmul.f32 %v1666, %v1673
    %1677 = vrot.lane.b32.xlu0 %v1675, 96
    %v1678 = vpop.permute.xlu0 %1677
    %v1680 = vadd.f32 %v1402, %v1678
    %v1681 = vadd.f32 %v1403, %v1678
    %v1682 = vtanh.pop %v1680
    %v1683 = vtanh.pop %v1681
    %v1684 = vsub.f32 1.0, %v1666
    %1687 = vrot.lane.b32.xlu0 %v1682, 80
    %v1688 = vpop.permute.xlu0 %1687
    %1689 = vrot.lane.b32.xlu0 %v1683, 80
    %v1690 = vpop.permute.xlu0 %1689
    %v1691 = vsel %vm524, %v1688, %v1690
    %v1693 = vmul.f32 %v1684, %v1691
    %v1694 = vrot.slane %v1597, 6
    %v1696 = vmul.f32 %v1666, %v1694
    %v1697 = vadd.f32 %v1693, %v1696
    %v1699 = vrot.slane %v1697, 4
    %1700 = vrot.lane.b32.xlu0 %v1699, 80
    %v1701 = vpop.permute.xlu0 %1700
    %v1702 = vsel %vm435, %v1701, 0
    %1704 = vmatpush.msra.mxu0 0.0
    %1705 = vmatpush.msra.mxu0 0.0
    %1706 = vmatpush.msra.mxu0 0.0
    %1707 = vmatpush.msra.mxu0 0.0
    %1708 = vmatpush.msra.mxu0 0.0
    %1709 = vmatpush.msra.mxu0 0.0
    %1710 = vmatpush.msra.mxu0 0.0
    %1711 = vmatpush.msra.mxu0 0.0
    %1712 = vmatpush.msra.mxu0 0.0
    %1713 = vmatpush.msra.mxu0 0.0
    %1714 = vmatpush.msra.mxu0 %v1388
    %1715 = vmatpush.msra.mxu0 %v1386
    %1716 = vmatpush.msra.mxu0 %v1384
    %1717 = vmatpush.msra.mxu0 %v1382
    %1718 = vmatpush.msra.mxu0 %v1380
    %1719 = vmatpush.msra.mxu0 %v1378
    %1720 = vmatmul.f32.gmra.mxu0 %v1702
    %v1721 = vpop.f32.mrf.mxu0
    %v1722 = vadd.f32 %v1392, %v1721
    %1723 = vdwg.mxu0
    %1724 = vmatpush.msra.mxu0 0.0
    %1725 = vmatpush.msra.mxu0 0.0
    %1726 = vmatpush.msra.mxu0 0.0
    %1727 = vmatpush.msra.mxu0 0.0
    %1728 = vmatpush.msra.mxu0 0.0
    %1729 = vmatpush.msra.mxu0 0.0
    %1730 = vmatpush.msra.mxu0 0.0
    %1731 = vmatpush.msra.mxu0 0.0
    %1732 = vmatpush.msra.mxu0 0.0
    %1733 = vmatpush.msra.mxu0 0.0
    %1734 = vmatpush.msra.mxu0 %v1389
    %1735 = vmatpush.msra.mxu0 %v1387
    %1736 = vmatpush.msra.mxu0 %v1385
    %1737 = vmatpush.msra.mxu0 %v1383
    %1738 = vmatpush.msra.mxu0 %v1381
    %1739 = vmatpush.msra.mxu0 %v1379
    %1740 = vmatmul.f32.gmra.mxu0 %v1702
    %v1741 = vpop.f32.mrf.mxu0
    %v1742 = vadd.f32 %v1393, %v1741
    %1743 = vdwg.mxu0
    %v1745 = vrot.slane %v1722, 2
    %v1747 = vadd.f32 %v1497, %v1745
    %v1748 = vxor.u32 %v1747, 2147483648
    %v1749 = vmul.f32 %v1748, 1.442695
    %v1750 = vpow.pop %v1749
    %v1751 = vadd.f32 %v1750, 1.0
    %v1752 = vrcp.pop %v1751
    %v1753 = vmul.f32 %v1751, %v1752
    %v1754 = vsub.f32 1.0, %v1753
    %v1755 = vmul.f32 %v1752, %v1754
    %v1756 = vadd.f32 %v1752, %v1755
    %vm1757 = vweird.f32 %v1751
    %vm1758 = vweird.f32 %v1752
    %vm1759 = vmor %vm1757, %vm1758
    %v1760 = vsel %vm1759, %v1752, %v1756
    %v1761 = vand.u32 2147483647, %v1751
    %vm1762 = vcmp.eq.f32.partialorder %v1761, 8.507059e+37
    %v1763 = vand.u32 %v1751, 2147483648
    %v1764 = vor.u32 1.1754944e-38, %v1763
    %v1765 = vsel %vm1762, %v1764, %v1760
    %v1766 = vmul.f32 1.0, %v1765
    %v1768 = vrot.slane %v1742, 2
    %1769 = vrot.lane.b32.xlu0 %v1745, 32
    %v1770 = vpop.permute.xlu0 %1769
    %1771 = vrot.lane.b32.xlu0 %v1768, 32
    %v1772 = vpop.permute.xlu0 %1771
    %v1773 = vsel %vm505, %v1770, %v1772
    %v1775 = vmul.f32 %v1766, %v1773
    %1777 = vrot.lane.b32.xlu0 %v1775, 96
    %v1778 = vpop.permute.xlu0 %1777
    %v1780 = vadd.f32 %v1497, %v1778
    %v1781 = vadd.f32 %v1498, %v1778
    %v1782 = vtanh.pop %v1780
    %v1783 = vtanh.pop %v1781
    %v1784 = vsub.f32 1.0, %v1766
    %1787 = vrot.lane.b32.xlu0 %v1782, 80
    %v1788 = vpop.permute.xlu0 %1787
    %1789 = vrot.lane.b32.xlu0 %v1783, 80
    %v1790 = vpop.permute.xlu0 %1789
    %v1791 = vsel %vm524, %v1788, %v1790
    %v1793 = vmul.f32 %v1784, %v1791
    %v1794 = vrot.slane %v1697, 6
    %v1796 = vmul.f32 %v1766, %v1794
    %v1797 = vadd.f32 %v1793, %v1796
    %v1800 = vrot.slane %v1350, 6
    %v1801 = vrot.slane %v1373, 6
    %v1804 = vsel %vm346, %v1353, %v1800
    %v1805 = vsel %vm347, %v1376, %v1801
    %v1807 = vrot.slane %v1797, 6
    %1808 = vrot.lane.b32.xlu0 %v1807, 80
    %v1809 = vpop.permute.xlu0 %1808
    %v1810 = vsel %vm435, %v1809, 0
    %1812 = vmatpush.msra.mxu0 0.0
    %1813 = vmatpush.msra.mxu0 0.0
    %1814 = vmatpush.msra.mxu0 0.0
    %1815 = vmatpush.msra.mxu0 0.0
    %1816 = vmatpush.msra.mxu0 0.0
    %1817 = vmatpush.msra.mxu0 0.0
    %1818 = vmatpush.msra.mxu0 0.0
    %1819 = vmatpush.msra.mxu0 0.0
    %1820 = vmatpush.msra.mxu0 0.0
    %1821 = vmatpush.msra.mxu0 0.0
    %1822 = vmatpush.msra.mxu0 %v1388
    %1823 = vmatpush.msra.mxu0 %v1386
    %1824 = vmatpush.msra.mxu0 %v1384
    %1825 = vmatpush.msra.mxu0 %v1382
    %1826 = vmatpush.msra.mxu0 %v1380
    %1827 = vmatpush.msra.mxu0 %v1378
    %1828 = vmatmul.f32.gmra.mxu0 %v1810
    %v1829 = vpop.f32.mrf.mxu0
    %v1830 = vadd.f32 %v1392, %v1829
    %1831 = vdwg.mxu0
    %1832 = vmatpush.msra.mxu0 0.0
    %1833 = vmatpush.msra.mxu0 0.0
    %1834 = vmatpush.msra.mxu0 0.0
    %1835 = vmatpush.msra.mxu0 0.0
    %1836 = vmatpush.msra.mxu0 0.0
    %1837 = vmatpush.msra.mxu0 0.0
    %1838 = vmatpush.msra.mxu0 0.0
    %1839 = vmatpush.msra.mxu0 0.0
    %1840 = vmatpush.msra.mxu0 0.0
    %1841 = vmatpush.msra.mxu0 0.0
    %1842 = vmatpush.msra.mxu0 %v1389
    %1843 = vmatpush.msra.mxu0 %v1387
    %1844 = vmatpush.msra.mxu0 %v1385
    %1845 = vmatpush.msra.mxu0 %v1383
    %1846 = vmatpush.msra.mxu0 %v1381
    %1847 = vmatpush.msra.mxu0 %v1379
    %1848 = vmatmul.f32.gmra.mxu0 %v1810
    %v1849 = vpop.f32.mrf.mxu0
    %v1850 = vadd.f32 %v1393, %v1849
    %1851 = vdwg.mxu0
    %v1852 = vadd.f32 %v1804, %v1830
    %v1853 = vxor.u32 %v1852, 2147483648
    %v1854 = vmul.f32 %v1853, 1.442695
    %v1855 = vpow.pop %v1854
    %v1856 = vadd.f32 %v1855, 1.0
    %v1857 = vrcp.pop %v1856
    %v1858 = vmul.f32 %v1856, %v1857
    %v1859 = vsub.f32 1.0, %v1858
    %v1860 = vmul.f32 %v1857, %v1859
    %v1861 = vadd.f32 %v1857, %v1860
    %vm1862 = vweird.f32 %v1856
    %vm1863 = vweird.f32 %v1857
    %vm1864 = vmor %vm1862, %vm1863
    %v1865 = vsel %vm1864, %v1857, %v1861
    %v1866 = vand.u32 2147483647, %v1856
    %vm1867 = vcmp.eq.f32.partialorder %v1866, 8.507059e+37
    %v1868 = vand.u32 %v1856, 2147483648
    %v1869 = vor.u32 1.1754944e-38, %v1868
    %v1870 = vsel %vm1867, %v1869, %v1865
    %v1871 = vmul.f32 1.0, %v1870
    %1874 = vrot.lane.b32.xlu0 %v1830, 32
    %v1875 = vpop.permute.xlu0 %1874
    %1876 = vrot.lane.b32.xlu0 %v1850, 32
    %v1877 = vpop.permute.xlu0 %1876
    %v1878 = vsel %vm505, %v1875, %v1877
    %v1880 = vmul.f32 %v1871, %v1878
    %1882 = vrot.lane.b32.xlu0 %v1880, 96
    %v1883 = vpop.permute.xlu0 %1882
    %v1885 = vadd.f32 %v1804, %v1883
    %v1886 = vadd.f32 %v1805, %v1883
    %v1887 = vtanh.pop %v1885
    %v1888 = vtanh.pop %v1886
    %v1889 = vsub.f32 1.0, %v1871
    %1892 = vrot.lane.b32.xlu0 %v1887, 80
    %v1893 = vpop.permute.xlu0 %1892
    %1894 = vrot.lane.b32.xlu0 %v1888, 80
    %v1895 = vpop.permute.xlu0 %1894
    %v1896 = vsel %vm524, %v1893, %v1895
    %v1898 = vmul.f32 %v1889, %v1896
    %v1900 = vmul.f32 %v1871, %v1807
    %v1901 = vadd.f32 %v1898, %v1900
    %v1902 = vrot.slane %v1350, 2
    %v1903 = vrot.slane %v1373, 2
    %v1906 = vsel %vm346, %v1353, %v1902
    %v1907 = vsel %vm347, %v1376, %v1903
    %1909 = vrot.lane.b32.xlu0 %v1901, 80
    %v1910 = vpop.permute.xlu0 %1909
    %v1911 = vsel %vm435, %v1910, 0
    %1913 = vmatpush.msra.mxu0 0.0
    %1914 = vmatpush.msra.mxu0 0.0
    %1915 = vmatpush.msra.mxu0 0.0
    %1916 = vmatpush.msra.mxu0 0.0
    %1917 = vmatpush.msra.mxu0 0.0
    %1918 = vmatpush.msra.mxu0 0.0
    %1919 = vmatpush.msra.mxu0 0.0
    %1920 = vmatpush.msra.mxu0 0.0
    %1921 = vmatpush.msra.mxu0 0.0
    %1922 = vmatpush.msra.mxu0 0.0
    %1923 = vmatpush.msra.mxu0 %v1388
    %1924 = vmatpush.msra.mxu0 %v1386
    %1925 = vmatpush.msra.mxu0 %v1384
    %1926 = vmatpush.msra.mxu0 %v1382
    %1927 = vmatpush.msra.mxu0 %v1380
    %1928 = vmatpush.msra.mxu0 %v1378
    %1929 = vmatmul.f32.gmra.mxu0 %v1911
    %v1930 = vpop.f32.mrf.mxu0
    %v1931 = vadd.f32 %v1392, %v1930
    %1932 = vdwg.mxu0
    %1933 = vmatpush.msra.mxu0 0.0
    %1934 = vmatpush.msra.mxu0 0.0
    %1935 = vmatpush.msra.mxu0 0.0
    %1936 = vmatpush.msra.mxu0 0.0
    %1937 = vmatpush.msra.mxu0 0.0
    %1938 = vmatpush.msra.mxu0 0.0
    %1939 = vmatpush.msra.mxu0 0.0
    %1940 = vmatpush.msra.mxu0 0.0
    %1941 = vmatpush.msra.mxu0 0.0
    %1942 = vmatpush.msra.mxu0 0.0
    %1943 = vmatpush.msra.mxu0 %v1389
    %1944 = vmatpush.msra.mxu0 %v1387
    %1945 = vmatpush.msra.mxu0 %v1385
    %1946 = vmatpush.msra.mxu0 %v1383
    %1947 = vmatpush.msra.mxu0 %v1381
    %1948 = vmatpush.msra.mxu0 %v1379
    %1949 = vmatmul.f32.gmra.mxu0 %v1911
    %v1950 = vpop.f32.mrf.mxu0
    %v1951 = vadd.f32 %v1393, %v1950
    %1952 = vdwg.mxu0
    %v1954 = vrot.slane %v1931, 6
    %v1956 = vadd.f32 %v1906, %v1954
    %v1957 = vxor.u32 %v1956, 2147483648
    %v1958 = vmul.f32 %v1957, 1.442695
    %v1959 = vpow.pop %v1958
    %v1960 = vadd.f32 %v1959, 1.0
    %v1961 = vrcp.pop %v1960
    %v1962 = vmul.f32 %v1960, %v1961
    %v1963 = vsub.f32 1.0, %v1962
    %v1964 = vmul.f32 %v1961, %v1963
    %v1965 = vadd.f32 %v1961, %v1964
    %vm1966 = vweird.f32 %v1960
    %vm1967 = vweird.f32 %v1961
    %vm1968 = vmor %vm1966, %vm1967
    %v1969 = vsel %vm1968, %v1961, %v1965
    %v1970 = vand.u32 2147483647, %v1960
    %vm1971 = vcmp.eq.f32.partialorder %v1970, 8.507059e+37
    %v1972 = vand.u32 %v1960, 2147483648
    %v1973 = vor.u32 1.1754944e-38, %v1972
    %v1974 = vsel %vm1971, %v1973, %v1969
    %v1975 = vmul.f32 1.0, %v1974
    %v1977 = vrot.slane %v1951, 6
    %1978 = vrot.lane.b32.xlu0 %v1954, 32
    %v1979 = vpop.permute.xlu0 %1978
    %1980 = vrot.lane.b32.xlu0 %v1977, 32
    %v1981 = vpop.permute.xlu0 %1980
    %v1982 = vsel %vm505, %v1979, %v1981
    %v1984 = vmul.f32 %v1975, %v1982
    %1986 = vrot.lane.b32.xlu0 %v1984, 96
    %v1987 = vpop.permute.xlu0 %1986
    %v1989 = vadd.f32 %v1906, %v1987
    %v1990 = vadd.f32 %v1907, %v1987
    %v1991 = vtanh.pop %v1989
    %v1992 = vtanh.pop %v1990
    %v1993 = vsub.f32 1.0, %v1975
    %1996 = vrot.lane.b32.xlu0 %v1991, 80
    %v1997 = vpop.permute.xlu0 %1996
    %1998 = vrot.lane.b32.xlu0 %v1992, 80
    %v1999 = vpop.permute.xlu0 %1998
    %v2000 = vsel %vm524, %v1997, %v1999
    %v2002 = vmul.f32 %v1993, %v2000
    %v2003 = vrot.slane %v1901, 6
    %v2005 = vmul.f32 %v1975, %v2003
    %v2006 = vadd.f32 %v2002, %v2005
    %v2008 = vrot.slane %v2006, 2
    %2009 = vrot.lane.b32.xlu0 %v2008, 80
    %v2010 = vpop.permute.xlu0 %2009
    %v2011 = vsel %vm435, %v2010, 0
    %2013 = vmatpush.msra.mxu0 0.0
    %2014 = vmatpush.msra.mxu0 0.0
    %2015 = vmatpush.msra.mxu0 0.0
    %2016 = vmatpush.msra.mxu0 0.0
    %2017 = vmatpush.msra.mxu0 0.0
    %2018 = vmatpush.msra.mxu0 0.0
    %2019 = vmatpush.msra.mxu0 0.0
    %2020 = vmatpush.msra.mxu0 0.0
    %2021 = vmatpush.msra.mxu0 0.0
    %2022 = vmatpush.msra.mxu0 0.0
    %2023 = vmatpush.msra.mxu0 %v1388
    %2024 = vmatpush.msra.mxu0 %v1386
    %2025 = vmatpush.msra.mxu0 %v1384
    %2026 = vmatpush.msra.mxu0 %v1382
    %2027 = vmatpush.msra.mxu0 %v1380
    %2028 = vmatpush.msra.mxu0 %v1378
    %2029 = vmatmul.f32.gmra.mxu0 %v2011
    %v2030 = vpop.f32.mrf.mxu0
    %v2031 = vadd.f32 %v1392, %v2030
    %2032 = vdwg.mxu0
    %2033 = vmatpush.msra.mxu0 0.0
    %2034 = vmatpush.msra.mxu0 0.0
    %2035 = vmatpush.msra.mxu0 0.0
    %2036 = vmatpush.msra.mxu0 0.0
    %2037 = vmatpush.msra.mxu0 0.0
    %2038 = vmatpush.msra.mxu0 0.0
    %2039 = vmatpush.msra.mxu0 0.0
    %2040 = vmatpush.msra.mxu0 0.0
    %2041 = vmatpush.msra.mxu0 0.0
    %2042 = vmatpush.msra.mxu0 0.0
    %2043 = vmatpush.msra.mxu0 %v1389
    %2044 = vmatpush.msra.mxu0 %v1387
    %2045 = vmatpush.msra.mxu0 %v1385
    %2046 = vmatpush.msra.mxu0 %v1383
    %2047 = vmatpush.msra.mxu0 %v1381
    %2048 = vmatpush.msra.mxu0 %v1379
    %2049 = vmatmul.f32.gmra.mxu0 %v2011
    %v2050 = vpop.f32.mrf.mxu0
    %v2051 = vadd.f32 %v1393, %v2050
    %2052 = vdwg.mxu0
    %v2054 = vrot.slane %v2031, 4
    %v2056 = vadd.f32 %v1804, %v2054
    %v2057 = vxor.u32 %v2056, 2147483648
    %v2058 = vmul.f32 %v2057, 1.442695
    %v2059 = vpow.pop %v2058
    %v2060 = vadd.f32 %v2059, 1.0
    %v2061 = vrcp.pop %v2060
    %v2062 = vmul.f32 %v2060, %v2061
    %v2063 = vsub.f32 1.0, %v2062
    %v2064 = vmul.f32 %v2061, %v2063
    %v2065 = vadd.f32 %v2061, %v2064
    %vm2066 = vweird.f32 %v2060
    %vm2067 = vweird.f32 %v2061
    %vm2068 = vmor %vm2066, %vm2067
    %v2069 = vsel %vm2068, %v2061, %v2065
    %v2070 = vand.u32 2147483647, %v2060
    %vm2071 = vcmp.eq.f32.partialorder %v2070, 8.507059e+37
    %v2072 = vand.u32 %v2060, 2147483648
    %v2073 = vor.u32 1.1754944e-38, %v2072
    %v2074 = vsel %vm2071, %v2073, %v2069
    %v2075 = vmul.f32 1.0, %v2074
    %v2077 = vrot.slane %v2051, 4
    %2078 = vrot.lane.b32.xlu0 %v2054, 32
    %v2079 = vpop.permute.xlu0 %2078
    %2080 = vrot.lane.b32.xlu0 %v2077, 32
    %v2081 = vpop.permute.xlu0 %2080
    %v2082 = vsel %vm505, %v2079, %v2081
    %v2084 = vmul.f32 %v2075, %v2082
    %2086 = vrot.lane.b32.xlu0 %v2084, 96
    %v2087 = vpop.permute.xlu0 %2086
    %v2089 = vadd.f32 %v1804, %v2087
    %v2090 = vadd.f32 %v1805, %v2087
    %v2091 = vtanh.pop %v2089
    %v2092 = vtanh.pop %v2090
    %v2093 = vsub.f32 1.0, %v2075
    %2096 = vrot.lane.b32.xlu0 %v2091, 80
    %v2097 = vpop.permute.xlu0 %2096
    %2098 = vrot.lane.b32.xlu0 %v2092, 80
    %v2099 = vpop.permute.xlu0 %2098
    %v2100 = vsel %vm524, %v2097, %v2099
    %v2102 = vmul.f32 %v2093, %v2100
    %v2103 = vrot.slane %v2006, 6
    %v2105 = vmul.f32 %v2075, %v2103
    %v2106 = vadd.f32 %v2102, %v2105
    %v2108 = vrot.slane %v2106, 4
    %2109 = vrot.lane.b32.xlu0 %v2108, 80
    %v2110 = vpop.permute.xlu0 %2109
    %v2111 = vsel %vm435, %v2110, 0
    %2113 = vmatpush.msra.mxu0 0.0
    %2114 = vmatpush.msra.mxu0 0.0
    %2115 = vmatpush.msra.mxu0 0.0
    %2116 = vmatpush.msra.mxu0 0.0
    %2117 = vmatpush.msra.mxu0 0.0
    %2118 = vmatpush.msra.mxu0 0.0
    %2119 = vmatpush.msra.mxu0 0.0
    %2120 = vmatpush.msra.mxu0 0.0
    %2121 = vmatpush.msra.mxu0 0.0
    %2122 = vmatpush.msra.mxu0 0.0
    %2123 = vmatpush.msra.mxu0 %v1388
    %2124 = vmatpush.msra.mxu0 %v1386
    %2125 = vmatpush.msra.mxu0 %v1384
    %2126 = vmatpush.msra.mxu0 %v1382
    %2127 = vmatpush.msra.mxu0 %v1380
    %2128 = vmatpush.msra.mxu0 %v1378
    %2129 = vmatmul.f32.gmra.mxu0 %v2111
    %v2130 = vpop.f32.mrf.mxu0
    %v2131 = vadd.f32 %v1392, %v2130
    %2132 = vdwg.mxu0
    %2133 = vmatpush.msra.mxu0 0.0
    %2134 = vmatpush.msra.mxu0 0.0
    %2135 = vmatpush.msra.mxu0 0.0
    %2136 = vmatpush.msra.mxu0 0.0
    %2137 = vmatpush.msra.mxu0 0.0
    %2138 = vmatpush.msra.mxu0 0.0
    %2139 = vmatpush.msra.mxu0 0.0
    %2140 = vmatpush.msra.mxu0 0.0
    %2141 = vmatpush.msra.mxu0 0.0
    %2142 = vmatpush.msra.mxu0 0.0
    %2143 = vmatpush.msra.mxu0 %v1389
    %2144 = vmatpush.msra.mxu0 %v1387
    %2145 = vmatpush.msra.mxu0 %v1385
    %2146 = vmatpush.msra.mxu0 %v1383
    %2147 = vmatpush.msra.mxu0 %v1381
    %2148 = vmatpush.msra.mxu0 %v1379
    %2149 = vmatmul.f32.gmra.mxu0 %v2111
    %v2150 = vpop.f32.mrf.mxu0
    %v2151 = vadd.f32 %v1393, %v2150
    %2152 = vdwg.mxu0
    %v2154 = vrot.slane %v2131, 2
    %v2156 = vadd.f32 %v1906, %v2154
    %v2157 = vxor.u32 %v2156, 2147483648
    %v2158 = vmul.f32 %v2157, 1.442695
    %v2159 = vpow.pop %v2158
    %v2160 = vadd.f32 %v2159, 1.0
    %v2161 = vrcp.pop %v2160
    %v2162 = vmul.f32 %v2160, %v2161
    %v2163 = vsub.f32 1.0, %v2162
    %v2164 = vmul.f32 %v2161, %v2163
    %v2165 = vadd.f32 %v2161, %v2164
    %vm2166 = vweird.f32 %v2160
    %vm2167 = vweird.f32 %v2161
    %vm2168 = vmor %vm2166, %vm2167
    %v2169 = vsel %vm2168, %v2161, %v2165
    %v2170 = vand.u32 2147483647, %v2160
    %vm2171 = vcmp.eq.f32.partialorder %v2170, 8.507059e+37
    %v2172 = vand.u32 %v2160, 2147483648
    %v2173 = vor.u32 1.1754944e-38, %v2172
    %v2174 = vsel %vm2171, %v2173, %v2169
    %v2175 = vmul.f32 1.0, %v2174
    %v2177 = vrot.slane %v2151, 2
    %2178 = vrot.lane.b32.xlu0 %v2154, 32
    %v2179 = vpop.permute.xlu0 %2178
    %2180 = vrot.lane.b32.xlu0 %v2177, 32
    %v2181 = vpop.permute.xlu0 %2180
    %v2182 = vsel %vm505, %v2179, %v2181
    %v2184 = vmul.f32 %v2175, %v2182
    %2186 = vrot.lane.b32.xlu0 %v2184, 96
    %v2187 = vpop.permute.xlu0 %2186
    %v2189 = vadd.f32 %v1906, %v2187
    %v2190 = vadd.f32 %v1907, %v2187
    %v2191 = vtanh.pop %v2189
    %v2192 = vtanh.pop %v2190
    %v2193 = vsub.f32 1.0, %v2175
    %2196 = vrot.lane.b32.xlu0 %v2191, 80
    %v2197 = vpop.permute.xlu0 %2196
    %2198 = vrot.lane.b32.xlu0 %v2192, 80
    %v2199 = vpop.permute.xlu0 %2198
    %v2200 = vsel %vm524, %v2197, %v2199
    %v2202 = vmul.f32 %v2193, %v2200
    %v2203 = vrot.slane %v2106, 6
    %v2205 = vmul.f32 %v2175, %v2203
    %v2206 = vadd.f32 %v2202, %v2205
    %v2209 = vrot.slane %v2206, 6
    %2210 = vrot.lane.b32.xlu0 %v2209, 80
    %v2211 = vpop.permute.xlu0 %2210
    %v2213 = vsel %vm1250, %v1501, %v2211
    %2214 = vrot.lane.b32.xlu0 %v1597, 80
    %v2215 = vpop.permute.xlu0 %2214
    %v2217 = vrot.slane %v2106, 2
    %2218 = vrot.lane.b32.xlu0 %v2217, 80
    %v2219 = vpop.permute.xlu0 %2218
    %v2221 = vsel %vm1250, %v2215, %v2219
    %2222 = vrot.lane.b32.xlu0 %v1697, 80
    %v2223 = vpop.permute.xlu0 %2222
    %2225 = vrot.lane.b32.xlu0 %v2103, 80
    %v2226 = vpop.permute.xlu0 %2225
    %v2228 = vsel %vm1250, %v2223, %v2226
    %2229 = vrot.lane.b32.xlu0 %v1797, 80
    %v2230 = vpop.permute.xlu0 %2229
    %v2232 = vrot.slane %v1901, 2
    %2233 = vrot.lane.b32.xlu0 %v2232, 80
    %v2234 = vpop.permute.xlu0 %2233
    %v2236 = vsel %vm1250, %v2230, %v2234
    %v2239 = vsel %vm1250, %v1910, %v1809
    %2240 = vrot.lane.b32.xlu0 %v2006, 80
    %v2241 = vpop.permute.xlu0 %2240
    %v2243 = vrot.slane %v1697, 2
    %2244 = vrot.lane.b32.xlu0 %v2243, 80
    %v2245 = vpop.permute.xlu0 %2244
    %v2247 = vsel %vm1250, %v2241, %v2245
    %2248 = vrot.lane.b32.xlu0 %v2106, 80
    %v2249 = vpop.permute.xlu0 %2248
    %2251 = vrot.lane.b32.xlu0 %v1694, 80
    %v2252 = vpop.permute.xlu0 %2251
    %v2254 = vsel %vm1250, %v2249, %v2252
    %2255 = vrot.lane.b32.xlu0 %v2206, 80
    %v2256 = vpop.permute.xlu0 %2255
    %v2258 = vrot.slane %v1492, 2
    %2259 = vrot.lane.b32.xlu0 %v2258, 80
    %v2260 = vpop.permute.xlu0 %2259
    %v2262 = vsel %vm1250, %v2256, %v2260
    %v2263 = vsel %vm1301, %v2213, %v2221
    %v2264 = vsel %vm205, %v2263, %v2228
    %v2265 = vsel %vm160, %v2264, %v2236
    %v2266 = vsel %vm1301, %v2239, %v2247
    %v2267 = vsel %vm205, %v2266, %v2254
    %v2268 = vsel %vm160, %v2267, %v2262
    %v2269 = vld [vmem:[#allocation7] sm:$0xff]
    %v2270 = vld [vmem:[#allocation7 + $0x8] sm:$0xff]
    %v2271 = vld [vmem:[#allocation7 + $0x10] sm:$0xff]
    %v2272 = vld [vmem:[#allocation7 + $0x18] sm:$0xff]
    %v2273 = vld [vmem:[#allocation7 + $0x20] sm:$0xff]
    %v2274 = vld [vmem:[#allocation7 + $0x28] sm:$0xff]
    %v2275 = vld [vmem:[#allocation7 + $0x30] sm:$0xff]
    %v2276 = vld [vmem:[#allocation7 + $0x38] sm:$0xff]
    %v2277 = vld [vmem:[#allocation7 + $0x40] sm:$0xff]
    %v2278 = vld [vmem:[#allocation7 + $0x48] sm:$0xff]
    %v2279 = vld [vmem:[#allocation7 + $0x50] sm:$0xff]
    %v2280 = vld [vmem:[#allocation7 + $0x58] sm:$0xff]
    %v2281 = vld [vmem:[%s19] sm:$0x3]
    %v2283 = vperm.slane %v2281, 0
    %v2284 = vperm.slane %v2281, 1
    %v2288 = vsel %vm435, %v2265, 0
    %v2291 = vsel %vm435, %v2268, 0
    %2293 = vmatpush.msra.mxu0 0.0
    %2294 = vmatpush.msra.mxu0 0.0
    %2295 = vmatpush.msra.mxu0 0.0
    %2296 = vmatpush.msra.mxu0 0.0
    %2297 = vmatpush.msra.mxu0 0.0
    %2298 = vmatpush.msra.mxu0 0.0
    %2299 = vmatpush.msra.mxu0 0.0
    %2300 = vmatpush.msra.mxu0 0.0
    %2301 = vmatpush.msra.mxu0 0.0
    %2302 = vmatpush.msra.mxu0 0.0
    %2303 = vmatpush.msra.mxu0 %v2279
    %2304 = vmatpush.msra.mxu0 %v2277
    %2305 = vmatpush.msra.mxu0 %v2275
    %2306 = vmatpush.msra.mxu0 %v2273
    %2307 = vmatpush.msra.mxu0 %v2271
    %2308 = vmatpush.msra.mxu0 %v2269
    %2309 = vmatmul.f32.gmra.mxu0 %v2288
    %v2310 = vpop.f32.mrf.mxu0
    %v2311 = vadd.f32 %v2283, %v2310
    %2312 = vmatmul.f32.gmra.mxu0 %v2291
    %v2313 = vpop.f32.mrf.mxu0
    %v2314 = vadd.f32 %v2283, %v2313
    %2315 = vdwg.mxu0
    %2316 = vmatpush.msra.mxu0 0.0
    %2317 = vmatpush.msra.mxu0 0.0
    %2318 = vmatpush.msra.mxu0 0.0
    %2319 = vmatpush.msra.mxu0 0.0
    %2320 = vmatpush.msra.mxu0 0.0
    %2321 = vmatpush.msra.mxu0 0.0
    %2322 = vmatpush.msra.mxu0 0.0
    %2323 = vmatpush.msra.mxu0 0.0
    %2324 = vmatpush.msra.mxu0 0.0
    %2325 = vmatpush.msra.mxu0 0.0
    %2326 = vmatpush.msra.mxu0 %v2280
    %2327 = vmatpush.msra.mxu0 %v2278
    %2328 = vmatpush.msra.mxu0 %v2276
    %2329 = vmatpush.msra.mxu0 %v2274
    %2330 = vmatpush.msra.mxu0 %v2272
    %2331 = vmatpush.msra.mxu0 %v2270
    %2332 = vmatmul.f32.gmra.mxu0 %v2288
    %v2333 = vpop.f32.mrf.mxu0
    %v2334 = vadd.f32 %v2284, %v2333
    %2335 = vmatmul.f32.gmra.mxu0 %v2291
    %v2336 = vpop.f32.mrf.mxu0
    %v2337 = vadd.f32 %v2284, %v2336
    %2338 = vdwg.mxu0
    %v2339 = vld [vmem:[#allocation8] sm:$0xff]
    %v2340 = vld [vmem:[#allocation8 + $0x8] sm:$0xff]
    %v2341 = vld [vmem:[#allocation8 + $0x10] sm:$0xff]
    %v2342 = vld [vmem:[#allocation8 + $0x18] sm:$0xff]
    %v2343 = vld [vmem:[#allocation8 + $0x20] sm:$0xff]
    %v2344 = vld [vmem:[#allocation8 + $0x28] sm:$0xff]
    %v2345 = vld [vmem:[#allocation8 + $0x30] sm:$0xff]
    %v2346 = vld [vmem:[#allocation8 + $0x38] sm:$0xff]
    %v2347 = vld [vmem:[#allocation8 + $0x40] sm:$0xff]
    %v2348 = vld [vmem:[#allocation8 + $0x48] sm:$0xff]
    %v2349 = vld [vmem:[#allocation8 + $0x50] sm:$0xff]
    %v2350 = vld [vmem:[#allocation8 + $0x58] sm:$0xff]
    %v2351 = vld [vmem:[%s21] sm:$0x3]
    %v2353 = vperm.slane %v2351, 0
    %v2354 = vperm.slane %v2351, 1
    %v2359 = vrot.slane %v2314, 6
    %v2360 = vrot.slane %v2337, 6
    %v2363 = vsel %vm346, %v2311, %v2359
    %v2364 = vsel %vm347, %v2334, %v2360
    %2365 = vmatpush.msra.mxu0 0.0
    %2366 = vmatpush.msra.mxu0 0.0
    %2367 = vmatpush.msra.mxu0 0.0
    %2368 = vmatpush.msra.mxu0 0.0
    %2369 = vmatpush.msra.mxu0 0.0
    %2370 = vmatpush.msra.mxu0 0.0
    %2371 = vmatpush.msra.mxu0 0.0
    %2372 = vmatpush.msra.mxu0 0.0
    %2373 = vmatpush.msra.mxu0 0.0
    %2374 = vmatpush.msra.mxu0 0.0
    %2375 = vmatpush.msra.mxu0 %v2349
    %2376 = vmatpush.msra.mxu0 %v2347
    %2377 = vmatpush.msra.mxu0 %v2345
    %2378 = vmatpush.msra.mxu0 %v2343
    %2379 = vmatpush.msra.mxu0 %v2341
    %2380 = vmatpush.msra.mxu0 %v2339
    %2381 = vmatmul.f32.gmra.mxu0 %v437
    %v2382 = vpop.f32.mrf.mxu0
    %v2383 = vadd.f32 %v2353, %v2382
    %2384 = vdwg.mxu0
    %2385 = vmatpush.msra.mxu0 0.0
    %2386 = vmatpush.msra.mxu0 0.0
    %2387 = vmatpush.msra.mxu0 0.0
    %2388 = vmatpush.msra.mxu0 0.0
    %2389 = vmatpush.msra.mxu0 0.0
    %2390 = vmatpush.msra.mxu0 0.0
    %2391 = vmatpush.msra.mxu0 0.0
    %2392 = vmatpush.msra.mxu0 0.0
    %2393 = vmatpush.msra.mxu0 0.0
    %2394 = vmatpush.msra.mxu0 0.0
    %2395 = vmatpush.msra.mxu0 %v2350
    %2396 = vmatpush.msra.mxu0 %v2348
    %2397 = vmatpush.msra.mxu0 %v2346
    %2398 = vmatpush.msra.mxu0 %v2344
    %2399 = vmatpush.msra.mxu0 %v2342
    %2400 = vmatpush.msra.mxu0 %v2340
    %2401 = vmatmul.f32.gmra.mxu0 %v437
    %v2402 = vpop.f32.mrf.mxu0
    %v2403 = vadd.f32 %v2354, %v2402
    %2404 = vdwg.mxu0
    %v2405 = vadd.f32 %v2363, %v2383
    %v2406 = vxor.u32 %v2405, 2147483648
    %v2407 = vmul.f32 %v2406, 1.442695
    %v2408 = vpow.pop %v2407
    %v2409 = vadd.f32 %v2408, 1.0
    %v2410 = vrcp.pop %v2409
    %v2411 = vmul.f32 %v2409, %v2410
    %v2412 = vsub.f32 1.0, %v2411
    %v2413 = vmul.f32 %v2410, %v2412
    %v2414 = vadd.f32 %v2410, %v2413
    %vm2415 = vweird.f32 %v2409
    %vm2416 = vweird.f32 %v2410
    %vm2417 = vmor %vm2415, %vm2416
    %v2418 = vsel %vm2417, %v2410, %v2414
    %v2419 = vand.u32 2147483647, %v2409
    %vm2420 = vcmp.eq.f32.partialorder %v2419, 8.507059e+37
    %v2421 = vand.u32 %v2409, 2147483648
    %v2422 = vor.u32 1.1754944e-38, %v2421
    %v2423 = vsel %vm2420, %v2422, %v2418
    %v2424 = vmul.f32 1.0, %v2423
    %2427 = vrot.lane.b32.xlu0 %v2383, 32
    %v2428 = vpop.permute.xlu0 %2427
    %2429 = vrot.lane.b32.xlu0 %v2403, 32
    %v2430 = vpop.permute.xlu0 %2429
    %v2431 = vsel %vm505, %v2428, %v2430
    %v2433 = vmul.f32 %v2424, %v2431
    %2435 = vrot.lane.b32.xlu0 %v2433, 96
    %v2436 = vpop.permute.xlu0 %2435
    %v2438 = vadd.f32 %v2363, %v2436
    %v2439 = vadd.f32 %v2364, %v2436
    %v2440 = vtanh.pop %v2438
    %v2441 = vtanh.pop %v2439
    %v2442 = vsub.f32 1.0, %v2424
    %2445 = vrot.lane.b32.xlu0 %v2440, 80
    %v2446 = vpop.permute.xlu0 %2445
    %2447 = vrot.lane.b32.xlu0 %v2441, 80
    %v2448 = vpop.permute.xlu0 %2447
    %v2449 = vsel %vm524, %v2446, %v2448
    %v2451 = vmul.f32 %v2442, %v2449
    %v2452 = vmul.f32 %v2424, 0.0
    %v2453 = vadd.f32 %v2451, %v2452
    %v2454 = vrot.slane %v2314, 2
    %v2455 = vrot.slane %v2337, 2
    %v2458 = vsel %vm346, %v2311, %v2454
    %v2459 = vsel %vm347, %v2334, %v2455
    %2461 = vrot.lane.b32.xlu0 %v2453, 80
    %v2462 = vpop.permute.xlu0 %2461
    %v2463 = vsel %vm435, %v2462, 0
    %2465 = vmatpush.msra.mxu0 0.0
    %2466 = vmatpush.msra.mxu0 0.0
    %2467 = vmatpush.msra.mxu0 0.0
    %2468 = vmatpush.msra.mxu0 0.0
    %2469 = vmatpush.msra.mxu0 0.0
    %2470 = vmatpush.msra.mxu0 0.0
    %2471 = vmatpush.msra.mxu0 0.0
    %2472 = vmatpush.msra.mxu0 0.0
    %2473 = vmatpush.msra.mxu0 0.0
    %2474 = vmatpush.msra.mxu0 0.0
    %2475 = vmatpush.msra.mxu0 %v2349
    %2476 = vmatpush.msra.mxu0 %v2347
    %2477 = vmatpush.msra.mxu0 %v2345
    %2478 = vmatpush.msra.mxu0 %v2343
    %2479 = vmatpush.msra.mxu0 %v2341
    %2480 = vmatpush.msra.mxu0 %v2339
    %2481 = vmatmul.f32.gmra.mxu0 %v2463
    %v2482 = vpop.f32.mrf.mxu0
    %v2483 = vadd.f32 %v2353, %v2482
    %2484 = vdwg.mxu0
    %2485 = vmatpush.msra.mxu0 0.0
    %2486 = vmatpush.msra.mxu0 0.0
    %2487 = vmatpush.msra.mxu0 0.0
    %2488 = vmatpush.msra.mxu0 0.0
    %2489 = vmatpush.msra.mxu0 0.0
    %2490 = vmatpush.msra.mxu0 0.0
    %2491 = vmatpush.msra.mxu0 0.0
    %2492 = vmatpush.msra.mxu0 0.0
    %2493 = vmatpush.msra.mxu0 0.0
    %2494 = vmatpush.msra.mxu0 0.0
    %2495 = vmatpush.msra.mxu0 %v2350
    %2496 = vmatpush.msra.mxu0 %v2348
    %2497 = vmatpush.msra.mxu0 %v2346
    %2498 = vmatpush.msra.mxu0 %v2344
    %2499 = vmatpush.msra.mxu0 %v2342
    %2500 = vmatpush.msra.mxu0 %v2340
    %2501 = vmatmul.f32.gmra.mxu0 %v2463
    %v2502 = vpop.f32.mrf.mxu0
    %v2503 = vadd.f32 %v2354, %v2502
    %2504 = vdwg.mxu0
    %v2506 = vrot.slane %v2483, 6
    %v2508 = vadd.f32 %v2458, %v2506
    %v2509 = vxor.u32 %v2508, 2147483648
    %v2510 = vmul.f32 %v2509, 1.442695
    %v2511 = vpow.pop %v2510
    %v2512 = vadd.f32 %v2511, 1.0
    %v2513 = vrcp.pop %v2512
    %v2514 = vmul.f32 %v2512, %v2513
    %v2515 = vsub.f32 1.0, %v2514
    %v2516 = vmul.f32 %v2513, %v2515
    %v2517 = vadd.f32 %v2513, %v2516
    %vm2518 = vweird.f32 %v2512
    %vm2519 = vweird.f32 %v2513
    %vm2520 = vmor %vm2518, %vm2519
    %v2521 = vsel %vm2520, %v2513, %v2517
    %v2522 = vand.u32 2147483647, %v2512
    %vm2523 = vcmp.eq.f32.partialorder %v2522, 8.507059e+37
    %v2524 = vand.u32 %v2512, 2147483648
    %v2525 = vor.u32 1.1754944e-38, %v2524
    %v2526 = vsel %vm2523, %v2525, %v2521
    %v2527 = vmul.f32 1.0, %v2526
    %v2529 = vrot.slane %v2503, 6
    %2530 = vrot.lane.b32.xlu0 %v2506, 32
    %v2531 = vpop.permute.xlu0 %2530
    %2532 = vrot.lane.b32.xlu0 %v2529, 32
    %v2533 = vpop.permute.xlu0 %2532
    %v2534 = vsel %vm505, %v2531, %v2533
    %v2536 = vmul.f32 %v2527, %v2534
    %2538 = vrot.lane.b32.xlu0 %v2536, 96
    %v2539 = vpop.permute.xlu0 %2538
    %v2541 = vadd.f32 %v2458, %v2539
    %v2542 = vadd.f32 %v2459, %v2539
    %v2543 = vtanh.pop %v2541
    %v2544 = vtanh.pop %v2542
    %v2545 = vsub.f32 1.0, %v2527
    %2548 = vrot.lane.b32.xlu0 %v2543, 80
    %v2549 = vpop.permute.xlu0 %2548
    %2550 = vrot.lane.b32.xlu0 %v2544, 80
    %v2551 = vpop.permute.xlu0 %2550
    %v2552 = vsel %vm524, %v2549, %v2551
    %v2554 = vmul.f32 %v2545, %v2552
    %v2555 = vrot.slane %v2453, 6
    %v2557 = vmul.f32 %v2527, %v2555
    %v2558 = vadd.f32 %v2554, %v2557
    %v2560 = vrot.slane %v2558, 2
    %2561 = vrot.lane.b32.xlu0 %v2560, 80
    %v2562 = vpop.permute.xlu0 %2561
    %v2563 = vsel %vm435, %v2562, 0
    %2565 = vmatpush.msra.mxu0 0.0
    %2566 = vmatpush.msra.mxu0 0.0
    %2567 = vmatpush.msra.mxu0 0.0
    %2568 = vmatpush.msra.mxu0 0.0
    %2569 = vmatpush.msra.mxu0 0.0
    %2570 = vmatpush.msra.mxu0 0.0
    %2571 = vmatpush.msra.mxu0 0.0
    %2572 = vmatpush.msra.mxu0 0.0
    %2573 = vmatpush.msra.mxu0 0.0
    %2574 = vmatpush.msra.mxu0 0.0
    %2575 = vmatpush.msra.mxu0 %v2349
    %2576 = vmatpush.msra.mxu0 %v2347
    %2577 = vmatpush.msra.mxu0 %v2345
    %2578 = vmatpush.msra.mxu0 %v2343
    %2579 = vmatpush.msra.mxu0 %v2341
    %2580 = vmatpush.msra.mxu0 %v2339
    %2581 = vmatmul.f32.gmra.mxu0 %v2563
    %v2582 = vpop.f32.mrf.mxu0
    %v2583 = vadd.f32 %v2353, %v2582
    %2584 = vdwg.mxu0
    %2585 = vmatpush.msra.mxu0 0.0
    %2586 = vmatpush.msra.mxu0 0.0
    %2587 = vmatpush.msra.mxu0 0.0
    %2588 = vmatpush.msra.mxu0 0.0
    %2589 = vmatpush.msra.mxu0 0.0
    %2590 = vmatpush.msra.mxu0 0.0
    %2591 = vmatpush.msra.mxu0 0.0
    %2592 = vmatpush.msra.mxu0 0.0
    %2593 = vmatpush.msra.mxu0 0.0
    %2594 = vmatpush.msra.mxu0 0.0
    %2595 = vmatpush.msra.mxu0 %v2350
    %2596 = vmatpush.msra.mxu0 %v2348
    %2597 = vmatpush.msra.mxu0 %v2346
    %2598 = vmatpush.msra.mxu0 %v2344
    %2599 = vmatpush.msra.mxu0 %v2342
    %2600 = vmatpush.msra.mxu0 %v2340
    %2601 = vmatmul.f32.gmra.mxu0 %v2563
    %v2602 = vpop.f32.mrf.mxu0
    %v2603 = vadd.f32 %v2354, %v2602
    %2604 = vdwg.mxu0
    %v2606 = vrot.slane %v2583, 4
    %v2608 = vadd.f32 %v2363, %v2606
    %v2609 = vxor.u32 %v2608, 2147483648
    %v2610 = vmul.f32 %v2609, 1.442695
    %v2611 = vpow.pop %v2610
    %v2612 = vadd.f32 %v2611, 1.0
    %v2613 = vrcp.pop %v2612
    %v2614 = vmul.f32 %v2612, %v2613
    %v2615 = vsub.f32 1.0, %v2614
    %v2616 = vmul.f32 %v2613, %v2615
    %v2617 = vadd.f32 %v2613, %v2616
    %vm2618 = vweird.f32 %v2612
    %vm2619 = vweird.f32 %v2613
    %vm2620 = vmor %vm2618, %vm2619
    %v2621 = vsel %vm2620, %v2613, %v2617
    %v2622 = vand.u32 2147483647, %v2612
    %vm2623 = vcmp.eq.f32.partialorder %v2622, 8.507059e+37
    %v2624 = vand.u32 %v2612, 2147483648
    %v2625 = vor.u32 1.1754944e-38, %v2624
    %v2626 = vsel %vm2623, %v2625, %v2621
    %v2627 = vmul.f32 1.0, %v2626
    %v2629 = vrot.slane %v2603, 4
    %2630 = vrot.lane.b32.xlu0 %v2606, 32
    %v2631 = vpop.permute.xlu0 %2630
    %2632 = vrot.lane.b32.xlu0 %v2629, 32
    %v2633 = vpop.permute.xlu0 %2632
    %v2634 = vsel %vm505, %v2631, %v2633
    %v2636 = vmul.f32 %v2627, %v2634
    %2638 = vrot.lane.b32.xlu0 %v2636, 96
    %v2639 = vpop.permute.xlu0 %2638
    %v2641 = vadd.f32 %v2363, %v2639
    %v2642 = vadd.f32 %v2364, %v2639
    %v2643 = vtanh.pop %v2641
    %v2644 = vtanh.pop %v2642
    %v2645 = vsub.f32 1.0, %v2627
    %2648 = vrot.lane.b32.xlu0 %v2643, 80
    %v2649 = vpop.permute.xlu0 %2648
    %2650 = vrot.lane.b32.xlu0 %v2644, 80
    %v2651 = vpop.permute.xlu0 %2650
    %v2652 = vsel %vm524, %v2649, %v2651
    %v2654 = vmul.f32 %v2645, %v2652
    %v2655 = vrot.slane %v2558, 6
    %v2657 = vmul.f32 %v2627, %v2655
    %v2658 = vadd.f32 %v2654, %v2657
    %v2660 = vrot.slane %v2658, 4
    %2661 = vrot.lane.b32.xlu0 %v2660, 80
    %v2662 = vpop.permute.xlu0 %2661
    %v2663 = vsel %vm435, %v2662, 0
    %2665 = vmatpush.msra.mxu0 0.0
    %2666 = vmatpush.msra.mxu0 0.0
    %2667 = vmatpush.msra.mxu0 0.0
    %2668 = vmatpush.msra.mxu0 0.0
    %2669 = vmatpush.msra.mxu0 0.0
    %2670 = vmatpush.msra.mxu0 0.0
    %2671 = vmatpush.msra.mxu0 0.0
    %2672 = vmatpush.msra.mxu0 0.0
    %2673 = vmatpush.msra.mxu0 0.0
    %2674 = vmatpush.msra.mxu0 0.0
    %2675 = vmatpush.msra.mxu0 %v2349
    %2676 = vmatpush.msra.mxu0 %v2347
    %2677 = vmatpush.msra.mxu0 %v2345
    %2678 = vmatpush.msra.mxu0 %v2343
    %2679 = vmatpush.msra.mxu0 %v2341
    %2680 = vmatpush.msra.mxu0 %v2339
    %2681 = vmatmul.f32.gmra.mxu0 %v2663
    %v2682 = vpop.f32.mrf.mxu0
    %v2683 = vadd.f32 %v2353, %v2682
    %2684 = vdwg.mxu0
    %2685 = vmatpush.msra.mxu0 0.0
    %2686 = vmatpush.msra.mxu0 0.0
    %2687 = vmatpush.msra.mxu0 0.0
    %2688 = vmatpush.msra.mxu0 0.0
    %2689 = vmatpush.msra.mxu0 0.0
    %2690 = vmatpush.msra.mxu0 0.0
    %2691 = vmatpush.msra.mxu0 0.0
    %2692 = vmatpush.msra.mxu0 0.0
    %2693 = vmatpush.msra.mxu0 0.0
    %2694 = vmatpush.msra.mxu0 0.0
    %2695 = vmatpush.msra.mxu0 %v2350
    %2696 = vmatpush.msra.mxu0 %v2348
    %2697 = vmatpush.msra.mxu0 %v2346
    %2698 = vmatpush.msra.mxu0 %v2344
    %2699 = vmatpush.msra.mxu0 %v2342
    %2700 = vmatpush.msra.mxu0 %v2340
    %2701 = vmatmul.f32.gmra.mxu0 %v2663
    %v2702 = vpop.f32.mrf.mxu0
    %v2703 = vadd.f32 %v2354, %v2702
    %2704 = vdwg.mxu0
    %v2706 = vrot.slane %v2683, 2
    %v2708 = vadd.f32 %v2458, %v2706
    %v2709 = vxor.u32 %v2708, 2147483648
    %v2710 = vmul.f32 %v2709, 1.442695
    %v2711 = vpow.pop %v2710
    %v2712 = vadd.f32 %v2711, 1.0
    %v2713 = vrcp.pop %v2712
    %v2714 = vmul.f32 %v2712, %v2713
    %v2715 = vsub.f32 1.0, %v2714
    %v2716 = vmul.f32 %v2713, %v2715
    %v2717 = vadd.f32 %v2713, %v2716
    %vm2718 = vweird.f32 %v2712
    %vm2719 = vweird.f32 %v2713
    %vm2720 = vmor %vm2718, %vm2719
    %v2721 = vsel %vm2720, %v2713, %v2717
    %v2722 = vand.u32 2147483647, %v2712
    %vm2723 = vcmp.eq.f32.partialorder %v2722, 8.507059e+37
    %v2724 = vand.u32 %v2712, 2147483648
    %v2725 = vor.u32 1.1754944e-38, %v2724
    %v2726 = vsel %vm2723, %v2725, %v2721
    %v2727 = vmul.f32 1.0, %v2726
    %v2729 = vrot.slane %v2703, 2
    %2730 = vrot.lane.b32.xlu0 %v2706, 32
    %v2731 = vpop.permute.xlu0 %2730
    %2732 = vrot.lane.b32.xlu0 %v2729, 32
    %v2733 = vpop.permute.xlu0 %2732
    %v2734 = vsel %vm505, %v2731, %v2733
    %v2736 = vmul.f32 %v2727, %v2734
    %2738 = vrot.lane.b32.xlu0 %v2736, 96
    %v2739 = vpop.permute.xlu0 %2738
    %v2741 = vadd.f32 %v2458, %v2739
    %v2742 = vadd.f32 %v2459, %v2739
    %v2743 = vtanh.pop %v2741
    %v2744 = vtanh.pop %v2742
    %v2745 = vsub.f32 1.0, %v2727
    %2748 = vrot.lane.b32.xlu0 %v2743, 80
    %v2749 = vpop.permute.xlu0 %2748
    %2750 = vrot.lane.b32.xlu0 %v2744, 80
    %v2751 = vpop.permute.xlu0 %2750
    %v2752 = vsel %vm524, %v2749, %v2751
    %v2754 = vmul.f32 %v2745, %v2752
    %v2755 = vrot.slane %v2658, 6
    %v2757 = vmul.f32 %v2727, %v2755
    %v2758 = vadd.f32 %v2754, %v2757
    %v2761 = vrot.slane %v2311, 6
    %v2762 = vrot.slane %v2334, 6
    %v2765 = vsel %vm346, %v2314, %v2761
    %v2766 = vsel %vm347, %v2337, %v2762
    %v2768 = vrot.slane %v2758, 6
    %2769 = vrot.lane.b32.xlu0 %v2768, 80
    %v2770 = vpop.permute.xlu0 %2769
    %v2771 = vsel %vm435, %v2770, 0
    %2773 = vmatpush.msra.mxu0 0.0
    %2774 = vmatpush.msra.mxu0 0.0
    %2775 = vmatpush.msra.mxu0 0.0
    %2776 = vmatpush.msra.mxu0 0.0
    %2777 = vmatpush.msra.mxu0 0.0
    %2778 = vmatpush.msra.mxu0 0.0
    %2779 = vmatpush.msra.mxu0 0.0
    %2780 = vmatpush.msra.mxu0 0.0
    %2781 = vmatpush.msra.mxu0 0.0
    %2782 = vmatpush.msra.mxu0 0.0
    %2783 = vmatpush.msra.mxu0 %v2349
    %2784 = vmatpush.msra.mxu0 %v2347
    %2785 = vmatpush.msra.mxu0 %v2345
    %2786 = vmatpush.msra.mxu0 %v2343
    %2787 = vmatpush.msra.mxu0 %v2341
    %2788 = vmatpush.msra.mxu0 %v2339
    %2789 = vmatmul.f32.gmra.mxu0 %v2771
    %v2790 = vpop.f32.mrf.mxu0
    %v2791 = vadd.f32 %v2353, %v2790
    %2792 = vdwg.mxu0
    %2793 = vmatpush.msra.mxu0 0.0
    %2794 = vmatpush.msra.mxu0 0.0
    %2795 = vmatpush.msra.mxu0 0.0
    %2796 = vmatpush.msra.mxu0 0.0
    %2797 = vmatpush.msra.mxu0 0.0
    %2798 = vmatpush.msra.mxu0 0.0
    %2799 = vmatpush.msra.mxu0 0.0
    %2800 = vmatpush.msra.mxu0 0.0
    %2801 = vmatpush.msra.mxu0 0.0
    %2802 = vmatpush.msra.mxu0 0.0
    %2803 = vmatpush.msra.mxu0 %v2350
    %2804 = vmatpush.msra.mxu0 %v2348
    %2805 = vmatpush.msra.mxu0 %v2346
    %2806 = vmatpush.msra.mxu0 %v2344
    %2807 = vmatpush.msra.mxu0 %v2342
    %2808 = vmatpush.msra.mxu0 %v2340
    %2809 = vmatmul.f32.gmra.mxu0 %v2771
    %v2810 = vpop.f32.mrf.mxu0
    %v2811 = vadd.f32 %v2354, %v2810
    %2812 = vdwg.mxu0
    %v2813 = vadd.f32 %v2765, %v2791
    %v2814 = vxor.u32 %v2813, 2147483648
    %v2815 = vmul.f32 %v2814, 1.442695
    %v2816 = vpow.pop %v2815
    %v2817 = vadd.f32 %v2816, 1.0
    %v2818 = vrcp.pop %v2817
    %v2819 = vmul.f32 %v2817, %v2818
    %v2820 = vsub.f32 1.0, %v2819
    %v2821 = vmul.f32 %v2818, %v2820
    %v2822 = vadd.f32 %v2818, %v2821
    %vm2823 = vweird.f32 %v2817
    %vm2824 = vweird.f32 %v2818
    %vm2825 = vmor %vm2823, %vm2824
    %v2826 = vsel %vm2825, %v2818, %v2822
    %v2827 = vand.u32 2147483647, %v2817
    %vm2828 = vcmp.eq.f32.partialorder %v2827, 8.507059e+37
    %v2829 = vand.u32 %v2817, 2147483648
    %v2830 = vor.u32 1.1754944e-38, %v2829
    %v2831 = vsel %vm2828, %v2830, %v2826
    %v2832 = vmul.f32 1.0, %v2831
    %2835 = vrot.lane.b32.xlu0 %v2791, 32
    %v2836 = vpop.permute.xlu0 %2835
    %2837 = vrot.lane.b32.xlu0 %v2811, 32
    %v2838 = vpop.permute.xlu0 %2837
    %v2839 = vsel %vm505, %v2836, %v2838
    %v2841 = vmul.f32 %v2832, %v2839
    %2843 = vrot.lane.b32.xlu0 %v2841, 96
    %v2844 = vpop.permute.xlu0 %2843
    %v2846 = vadd.f32 %v2765, %v2844
    %v2847 = vadd.f32 %v2766, %v2844
    %v2848 = vtanh.pop %v2846
    %v2849 = vtanh.pop %v2847
    %v2850 = vsub.f32 1.0, %v2832
    %2853 = vrot.lane.b32.xlu0 %v2848, 80
    %v2854 = vpop.permute.xlu0 %2853
    %2855 = vrot.lane.b32.xlu0 %v2849, 80
    %v2856 = vpop.permute.xlu0 %2855
    %v2857 = vsel %vm524, %v2854, %v2856
    %v2859 = vmul.f32 %v2850, %v2857
    %v2861 = vmul.f32 %v2832, %v2768
    %v2862 = vadd.f32 %v2859, %v2861
    %v2863 = vrot.slane %v2311, 2
    %v2864 = vrot.slane %v2334, 2
    %v2867 = vsel %vm346, %v2314, %v2863
    %v2868 = vsel %vm347, %v2337, %v2864
    %2870 = vrot.lane.b32.xlu0 %v2862, 80
    %v2871 = vpop.permute.xlu0 %2870
    %v2872 = vsel %vm435, %v2871, 0
    %2874 = vmatpush.msra.mxu0 0.0
    %2875 = vmatpush.msra.mxu0 0.0
    %2876 = vmatpush.msra.mxu0 0.0
    %2877 = vmatpush.msra.mxu0 0.0
    %2878 = vmatpush.msra.mxu0 0.0
    %2879 = vmatpush.msra.mxu0 0.0
    %2880 = vmatpush.msra.mxu0 0.0
    %2881 = vmatpush.msra.mxu0 0.0
    %2882 = vmatpush.msra.mxu0 0.0
    %2883 = vmatpush.msra.mxu0 0.0
    %2884 = vmatpush.msra.mxu0 %v2349
    %2885 = vmatpush.msra.mxu0 %v2347
    %2886 = vmatpush.msra.mxu0 %v2345
    %2887 = vmatpush.msra.mxu0 %v2343
    %2888 = vmatpush.msra.mxu0 %v2341
    %2889 = vmatpush.msra.mxu0 %v2339
    %2890 = vmatmul.f32.gmra.mxu0 %v2872
    %v2891 = vpop.f32.mrf.mxu0
    %v2892 = vadd.f32 %v2353, %v2891
    %2893 = vdwg.mxu0
    %2894 = vmatpush.msra.mxu0 0.0
    %2895 = vmatpush.msra.mxu0 0.0
    %2896 = vmatpush.msra.mxu0 0.0
    %2897 = vmatpush.msra.mxu0 0.0
    %2898 = vmatpush.msra.mxu0 0.0
    %2899 = vmatpush.msra.mxu0 0.0
    %2900 = vmatpush.msra.mxu0 0.0
    %2901 = vmatpush.msra.mxu0 0.0
    %2902 = vmatpush.msra.mxu0 0.0
    %2903 = vmatpush.msra.mxu0 0.0
    %2904 = vmatpush.msra.mxu0 %v2350
    %2905 = vmatpush.msra.mxu0 %v2348
    %2906 = vmatpush.msra.mxu0 %v2346
    %2907 = vmatpush.msra.mxu0 %v2344
    %2908 = vmatpush.msra.mxu0 %v2342
    %2909 = vmatpush.msra.mxu0 %v2340
    %2910 = vmatmul.f32.gmra.mxu0 %v2872
    %v2911 = vpop.f32.mrf.mxu0
    %v2912 = vadd.f32 %v2354, %v2911
    %2913 = vdwg.mxu0
    %v2915 = vrot.slane %v2892, 6
    %v2917 = vadd.f32 %v2867, %v2915
    %v2918 = vxor.u32 %v2917, 2147483648
    %v2919 = vmul.f32 %v2918, 1.442695
    %v2920 = vpow.pop %v2919
    %v2921 = vadd.f32 %v2920, 1.0
    %v2922 = vrcp.pop %v2921
    %v2923 = vmul.f32 %v2921, %v2922
    %v2924 = vsub.f32 1.0, %v2923
    %v2925 = vmul.f32 %v2922, %v2924
    %v2926 = vadd.f32 %v2922, %v2925
    %vm2927 = vweird.f32 %v2921
    %vm2928 = vweird.f32 %v2922
    %vm2929 = vmor %vm2927, %vm2928
    %v2930 = vsel %vm2929, %v2922, %v2926
    %v2931 = vand.u32 2147483647, %v2921
    %vm2932 = vcmp.eq.f32.partialorder %v2931, 8.507059e+37
    %v2933 = vand.u32 %v2921, 2147483648
    %v2934 = vor.u32 1.1754944e-38, %v2933
    %v2935 = vsel %vm2932, %v2934, %v2930
    %v2936 = vmul.f32 1.0, %v2935
    %v2938 = vrot.slane %v2912, 6
    %2939 = vrot.lane.b32.xlu0 %v2915, 32
    %v2940 = vpop.permute.xlu0 %2939
    %2941 = vrot.lane.b32.xlu0 %v2938, 32
    %v2942 = vpop.permute.xlu0 %2941
    %v2943 = vsel %vm505, %v2940, %v2942
    %v2945 = vmul.f32 %v2936, %v2943
    %2947 = vrot.lane.b32.xlu0 %v2945, 96
    %v2948 = vpop.permute.xlu0 %2947
    %v2950 = vadd.f32 %v2867, %v2948
    %v2951 = vadd.f32 %v2868, %v2948
    %v2952 = vtanh.pop %v2950
    %v2953 = vtanh.pop %v2951
    %v2954 = vsub.f32 1.0, %v2936
    %2957 = vrot.lane.b32.xlu0 %v2952, 80
    %v2958 = vpop.permute.xlu0 %2957
    %2959 = vrot.lane.b32.xlu0 %v2953, 80
    %v2960 = vpop.permute.xlu0 %2959
    %v2961 = vsel %vm524, %v2958, %v2960
    %v2963 = vmul.f32 %v2954, %v2961
    %v2964 = vrot.slane %v2862, 6
    %v2966 = vmul.f32 %v2936, %v2964
    %v2967 = vadd.f32 %v2963, %v2966
    %v2969 = vrot.slane %v2967, 2
    %2970 = vrot.lane.b32.xlu0 %v2969, 80
    %v2971 = vpop.permute.xlu0 %2970
    %v2972 = vsel %vm435, %v2971, 0
    %2974 = vmatpush.msra.mxu0 0.0
    %2975 = vmatpush.msra.mxu0 0.0
    %2976 = vmatpush.msra.mxu0 0.0
    %2977 = vmatpush.msra.mxu0 0.0
    %2978 = vmatpush.msra.mxu0 0.0
    %2979 = vmatpush.msra.mxu0 0.0
    %2980 = vmatpush.msra.mxu0 0.0
    %2981 = vmatpush.msra.mxu0 0.0
    %2982 = vmatpush.msra.mxu0 0.0
    %2983 = vmatpush.msra.mxu0 0.0
    %2984 = vmatpush.msra.mxu0 %v2349
    %2985 = vmatpush.msra.mxu0 %v2347
    %2986 = vmatpush.msra.mxu0 %v2345
    %2987 = vmatpush.msra.mxu0 %v2343
    %2988 = vmatpush.msra.mxu0 %v2341
    %2989 = vmatpush.msra.mxu0 %v2339
    %2990 = vmatmul.f32.gmra.mxu0 %v2972
    %v2991 = vpop.f32.mrf.mxu0
    %v2992 = vadd.f32 %v2353, %v2991
    %2993 = vdwg.mxu0
    %2994 = vmatpush.msra.mxu0 0.0
    %2995 = vmatpush.msra.mxu0 0.0
    %2996 = vmatpush.msra.mxu0 0.0
    %2997 = vmatpush.msra.mxu0 0.0
    %2998 = vmatpush.msra.mxu0 0.0
    %2999 = vmatpush.msra.mxu0 0.0
    %3000 = vmatpush.msra.mxu0 0.0
    %3001 = vmatpush.msra.mxu0 0.0
    %3002 = vmatpush.msra.mxu0 0.0
    %3003 = vmatpush.msra.mxu0 0.0
    %3004 = vmatpush.msra.mxu0 %v2350
    %3005 = vmatpush.msra.mxu0 %v2348
    %3006 = vmatpush.msra.mxu0 %v2346
    %3007 = vmatpush.msra.mxu0 %v2344
    %3008 = vmatpush.msra.mxu0 %v2342
    %3009 = vmatpush.msra.mxu0 %v2340
    %3010 = vmatmul.f32.gmra.mxu0 %v2972
    %v3011 = vpop.f32.mrf.mxu0
    %v3012 = vadd.f32 %v2354, %v3011
    %3013 = vdwg.mxu0
    %v3015 = vrot.slane %v2992, 4
    %v3017 = vadd.f32 %v2765, %v3015
    %v3018 = vxor.u32 %v3017, 2147483648
    %v3019 = vmul.f32 %v3018, 1.442695
    %v3020 = vpow.pop %v3019
    %v3021 = vadd.f32 %v3020, 1.0
    %v3022 = vrcp.pop %v3021
    %v3023 = vmul.f32 %v3021, %v3022
    %v3024 = vsub.f32 1.0, %v3023
    %v3025 = vmul.f32 %v3022, %v3024
    %v3026 = vadd.f32 %v3022, %v3025
    %vm3027 = vweird.f32 %v3021
    %vm3028 = vweird.f32 %v3022
    %vm3029 = vmor %vm3027, %vm3028
    %v3030 = vsel %vm3029, %v3022, %v3026
    %v3031 = vand.u32 2147483647, %v3021
    %vm3032 = vcmp.eq.f32.partialorder %v3031, 8.507059e+37
    %v3033 = vand.u32 %v3021, 2147483648
    %v3034 = vor.u32 1.1754944e-38, %v3033
    %v3035 = vsel %vm3032, %v3034, %v3030
    %v3036 = vmul.f32 1.0, %v3035
    %v3038 = vrot.slane %v3012, 4
    %3039 = vrot.lane.b32.xlu0 %v3015, 32
    %v3040 = vpop.permute.xlu0 %3039
    %3041 = vrot.lane.b32.xlu0 %v3038, 32
    %v3042 = vpop.permute.xlu0 %3041
    %v3043 = vsel %vm505, %v3040, %v3042
    %v3045 = vmul.f32 %v3036, %v3043
    %3047 = vrot.lane.b32.xlu0 %v3045, 96
    %v3048 = vpop.permute.xlu0 %3047
    %v3050 = vadd.f32 %v2765, %v3048
    %v3051 = vadd.f32 %v2766, %v3048
    %v3052 = vtanh.pop %v3050
    %v3053 = vtanh.pop %v3051
    %v3054 = vsub.f32 1.0, %v3036
    %3057 = vrot.lane.b32.xlu0 %v3052, 80
    %v3058 = vpop.permute.xlu0 %3057
    %3059 = vrot.lane.b32.xlu0 %v3053, 80
    %v3060 = vpop.permute.xlu0 %3059
    %v3061 = vsel %vm524, %v3058, %v3060
    %v3063 = vmul.f32 %v3054, %v3061
    %v3064 = vrot.slane %v2967, 6
    %v3066 = vmul.f32 %v3036, %v3064
    %v3067 = vadd.f32 %v3063, %v3066
    %v3069 = vrot.slane %v3067, 4
    %3070 = vrot.lane.b32.xlu0 %v3069, 80
    %v3071 = vpop.permute.xlu0 %3070
    %v3072 = vsel %vm435, %v3071, 0
    %3074 = vmatpush.msra.mxu0 0.0
    %3075 = vmatpush.msra.mxu0 0.0
    %3076 = vmatpush.msra.mxu0 0.0
    %3077 = vmatpush.msra.mxu0 0.0
    %3078 = vmatpush.msra.mxu0 0.0
    %3079 = vmatpush.msra.mxu0 0.0
    %3080 = vmatpush.msra.mxu0 0.0
    %3081 = vmatpush.msra.mxu0 0.0
    %3082 = vmatpush.msra.mxu0 0.0
    %3083 = vmatpush.msra.mxu0 0.0
    %3084 = vmatpush.msra.mxu0 %v2349
    %3085 = vmatpush.msra.mxu0 %v2347
    %3086 = vmatpush.msra.mxu0 %v2345
    %3087 = vmatpush.msra.mxu0 %v2343
    %3088 = vmatpush.msra.mxu0 %v2341
    %3089 = vmatpush.msra.mxu0 %v2339
    %3090 = vmatmul.f32.gmra.mxu0 %v3072
    %v3091 = vpop.f32.mrf.mxu0
    %v3092 = vadd.f32 %v2353, %v3091
    %3093 = vdwg.mxu0
    %3094 = vmatpush.msra.mxu0 0.0
    %3095 = vmatpush.msra.mxu0 0.0
    %3096 = vmatpush.msra.mxu0 0.0
    %3097 = vmatpush.msra.mxu0 0.0
    %3098 = vmatpush.msra.mxu0 0.0
    %3099 = vmatpush.msra.mxu0 0.0
    %3100 = vmatpush.msra.mxu0 0.0
    %3101 = vmatpush.msra.mxu0 0.0
    %3102 = vmatpush.msra.mxu0 0.0
    %3103 = vmatpush.msra.mxu0 0.0
    %3104 = vmatpush.msra.mxu0 %v2350
    %3105 = vmatpush.msra.mxu0 %v2348
    %3106 = vmatpush.msra.mxu0 %v2346
    %3107 = vmatpush.msra.mxu0 %v2344
    %3108 = vmatpush.msra.mxu0 %v2342
    %3109 = vmatpush.msra.mxu0 %v2340
    %3110 = vmatmul.f32.gmra.mxu0 %v3072
    %v3111 = vpop.f32.mrf.mxu0
    %v3112 = vadd.f32 %v2354, %v3111
    %3113 = vdwg.mxu0
    %v3115 = vrot.slane %v3092, 2
    %v3117 = vadd.f32 %v2867, %v3115
    %v3118 = vxor.u32 %v3117, 2147483648
    %v3119 = vmul.f32 %v3118, 1.442695
    %v3120 = vpow.pop %v3119
    %v3121 = vadd.f32 %v3120, 1.0
    %v3122 = vrcp.pop %v3121
    %v3123 = vmul.f32 %v3121, %v3122
    %v3124 = vsub.f32 1.0, %v3123
    %v3125 = vmul.f32 %v3122, %v3124
    %v3126 = vadd.f32 %v3122, %v3125
    %vm3127 = vweird.f32 %v3121
    %vm3128 = vweird.f32 %v3122
    %vm3129 = vmor %vm3127, %vm3128
    %v3130 = vsel %vm3129, %v3122, %v3126
    %v3131 = vand.u32 2147483647, %v3121
    %vm3132 = vcmp.eq.f32.partialorder %v3131, 8.507059e+37
    %v3133 = vand.u32 %v3121, 2147483648
    %v3134 = vor.u32 1.1754944e-38, %v3133
    %v3135 = vsel %vm3132, %v3134, %v3130
    %v3136 = vmul.f32 1.0, %v3135
    %v3138 = vrot.slane %v3112, 2
    %3139 = vrot.lane.b32.xlu0 %v3115, 32
    %v3140 = vpop.permute.xlu0 %3139
    %3141 = vrot.lane.b32.xlu0 %v3138, 32
    %v3142 = vpop.permute.xlu0 %3141
    %v3143 = vsel %vm505, %v3140, %v3142
    %v3145 = vmul.f32 %v3136, %v3143
    %3147 = vrot.lane.b32.xlu0 %v3145, 96
    %v3148 = vpop.permute.xlu0 %3147
    %v3150 = vadd.f32 %v2867, %v3148
    %v3151 = vadd.f32 %v2868, %v3148
    %v3152 = vtanh.pop %v3150
    %v3153 = vtanh.pop %v3151
    %v3154 = vsub.f32 1.0, %v3136
    %3157 = vrot.lane.b32.xlu0 %v3152, 80
    %v3158 = vpop.permute.xlu0 %3157
    %3159 = vrot.lane.b32.xlu0 %v3153, 80
    %v3160 = vpop.permute.xlu0 %3159
    %v3161 = vsel %vm524, %v3158, %v3160
    %v3163 = vmul.f32 %v3154, %v3161
    %v3164 = vrot.slane %v3067, 6
    %v3166 = vmul.f32 %v3136, %v3164
    %v3167 = vadd.f32 %v3163, %v3166
    %v3170 = vrot.slane %v3167, 6
    %3171 = vrot.lane.b32.xlu0 %v3170, 80
    %v3172 = vpop.permute.xlu0 %3171
    %v3174 = vsel %vm1250, %v2462, %v3172
    %3175 = vrot.lane.b32.xlu0 %v2558, 80
    %v3176 = vpop.permute.xlu0 %3175
    %v3178 = vrot.slane %v3067, 2
    %3179 = vrot.lane.b32.xlu0 %v3178, 80
    %v3180 = vpop.permute.xlu0 %3179
    %v3182 = vsel %vm1250, %v3176, %v3180
    %3183 = vrot.lane.b32.xlu0 %v2658, 80
    %v3184 = vpop.permute.xlu0 %3183
    %3186 = vrot.lane.b32.xlu0 %v3064, 80
    %v3187 = vpop.permute.xlu0 %3186
    %v3189 = vsel %vm1250, %v3184, %v3187
    %3190 = vrot.lane.b32.xlu0 %v2758, 80
    %v3191 = vpop.permute.xlu0 %3190
    %v3193 = vrot.slane %v2862, 2
    %3194 = vrot.lane.b32.xlu0 %v3193, 80
    %v3195 = vpop.permute.xlu0 %3194
    %v3197 = vsel %vm1250, %v3191, %v3195
    %v3200 = vsel %vm1250, %v2871, %v2770
    %3201 = vrot.lane.b32.xlu0 %v2967, 80
    %v3202 = vpop.permute.xlu0 %3201
    %v3204 = vrot.slane %v2658, 2
    %3205 = vrot.lane.b32.xlu0 %v3204, 80
    %v3206 = vpop.permute.xlu0 %3205
    %v3208 = vsel %vm1250, %v3202, %v3206
    %3209 = vrot.lane.b32.xlu0 %v3067, 80
    %v3210 = vpop.permute.xlu0 %3209
    %3212 = vrot.lane.b32.xlu0 %v2655, 80
    %v3213 = vpop.permute.xlu0 %3212
    %v3215 = vsel %vm1250, %v3210, %v3213
    %3216 = vrot.lane.b32.xlu0 %v3167, 80
    %v3217 = vpop.permute.xlu0 %3216
    %v3219 = vrot.slane %v2453, 2
    %3220 = vrot.lane.b32.xlu0 %v3219, 80
    %v3221 = vpop.permute.xlu0 %3220
    %v3223 = vsel %vm1250, %v3217, %v3221
    %v3224 = vsel %vm1301, %v3174, %v3182
    %v3225 = vsel %vm205, %v3224, %v3189
    %v3226 = vsel %vm160, %v3225, %v3197
    %v3227 = vsel %vm1301, %v3200, %v3208
    %v3228 = vsel %vm205, %v3227, %v3215
    %v3229 = vsel %vm160, %v3228, %v3223
    %v3230 = vld [vmem:[%s22] sm:$0xff]
    %v3231 = vld [vmem:[%s22 + $0x8] sm:$0xff]
    %v3232 = vld [vmem:[%s22 + $0x10] sm:$0xff]
    %v3233 = vld [vmem:[%s22 + $0x18] sm:$0xff]
    %v3234 = vld [vmem:[%s22 + $0x20] sm:$0xff]
    %v3235 = vld [vmem:[%s22 + $0x28] sm:$0xff]
    %v3236 = vld [vmem:[%s23] sm:$0x1]
    %v3238 = vperm.slane %v3236, 0
    %v3241 = vsel %vm435, %v3226, 0
    %v3244 = vsel %vm435, %v3229, 0
    %3246 = vmatpush.msra.mxu0 0.0
    %3247 = vmatpush.msra.mxu0 0.0
    %3248 = vmatpush.msra.mxu0 0.0
    %3249 = vmatpush.msra.mxu0 0.0
    %3250 = vmatpush.msra.mxu0 0.0
    %3251 = vmatpush.msra.mxu0 0.0
    %3252 = vmatpush.msra.mxu0 0.0
    %3253 = vmatpush.msra.mxu0 0.0
    %3254 = vmatpush.msra.mxu0 0.0
    %3255 = vmatpush.msra.mxu0 0.0
    %3256 = vmatpush.msra.mxu0 %v3235
    %3257 = vmatpush.msra.mxu0 %v3234
    %3258 = vmatpush.msra.mxu0 %v3233
    %3259 = vmatpush.msra.mxu0 %v3232
    %3260 = vmatpush.msra.mxu0 %v3231
    %3261 = vmatpush.msra.mxu0 %v3230
    %3262 = vmatmul.f32.gmra.mxu0 %v3241
    %v3263 = vpop.f32.mrf.mxu0
    %v3264 = vadd.f32 %v3238, %v3263
    %3265 = vmatmul.f32.gmra.mxu0 %v3244
    %v3266 = vpop.f32.mrf.mxu0
    %v3267 = vadd.f32 %v3238, %v3266
    %3268 = vdwg.mxu0
    %v3269 = vadd.f32 %v3264, 1e-05
    %v3270 = vadd.f32 %v3267, 1e-05
    %3271 = vst.msk [vmem:[%s24] sm:$0xff] %vm153, %v3269
    %3272 = vst.msk [vmem:[%s24 + $0x8] sm:$0xff] %vm153, %v3270
    %v3273 = vld [vmem:[%s3] sm:$0xff]
    %v3274 = vld [vmem:[%s3 + $0x8] sm:$0xff]
    %v3275 = vld [vmem:[%s1] sm:$0xff]
    %v3276 = vld [vmem:[%s1 + $0x8] sm:$0xff]
    %v3277 = vsub.f32 %v3269, %v3275
    %v3278 = vsub.f32 %v3270, %v3276
    %v3279 = vld [vmem:[%s2] sm:$0xff]
    %v3280 = vld [vmem:[%s2 + $0x8] sm:$0xff]
    %3283 = vrot.lane.b32.xlu0 %v3279, 3
    %v3284 = vpop.permute.xlu0 %3283
    %3285 = vrot.lane.b32.xlu0 %v3280, 3
    %v3286 = vpop.permute.xlu0 %3285
    %v3289 = vsub.f32 %v3269, %v3284
    %v3290 = vsub.f32 %v3270, %v3286
    %3292 = vset.pattern.permute.xlu0 0
    %3293 = vperm.xlu0 %3292, %v3273
    %v3294 = vpop.permute.xlu0 %3293
    %3297 = vset.pattern.permute.xlu0 0
    %3298 = vperm.xlu0 %3297, %v3274
    %v3299 = vpop.permute.xlu0 %3298
    %v3301 = vmul.f32 %v3294, %v3277
    %v3302 = vmul.f32 %v3299, %v3278
    %v3303 = vmul.f32 %v3301, %v3277
    %v3304 = vmul.f32 %v3302, %v3278
    %vm3305 = vcmask 23552
    %v3306 = vsel %vm3305, %v3303, 0.0
    %3307 = vadd.xlane.f32.xlu0 %v3306
    %v3308 = vpop.xlane.xlu0 %3307
    %v3309 = vsel %vm3305, %v3304, 0.0
    %3310 = vadd.xlane.f32.xlu0 %v3309
    %v3311 = vpop.xlane.xlu0 %3310
    %v3312 = vadd.f32 %v3308, %v3311
    %v3313 = vrot.slane %v3312, 4
    %v3314 = vadd.f32 %v3312, %v3313
    %v3315 = vrot.slane %v3314, 2
    %v3316 = vadd.f32 %v3314, %v3315
    %v3317 = vrot.slane %v3316, 1
    %v3318 = vadd.f32 %v3316, %v3317
    %v3319 = vrcp.pop 48.0
    %v3320 = vmul.f32 48.0, %v3319
    %v3321 = vsub.f32 1.0, %v3320
    %v3322 = vmul.f32 %v3319, %v3321
    %v3323 = vadd.f32 %v3319, %v3322
    %vm3324 = vweird.f32 %v3319
    %v3325 = vsel %vm3324, %v3319, %v3323
    %v3326 = vmul.f32 %v3318, %v3325
    %v3327 = vmul.f32 %v3294, %v3289
    %v3328 = vmul.f32 %v3299, %v3290
    %v3329 = vmul.f32 %v3327, %v3289
    %v3330 = vmul.f32 %v3328, %v3290
    %3333 = vrot.lane.b32.xlu0 %v3329, 125
    %v3334 = vpop.permute.xlu0 %3333
    %3335 = vrot.lane.b32.xlu0 %v3330, 125
    %v3336 = vpop.permute.xlu0 %3335
    %v3339 = vsel %vm3305, %v3334, 0.0
    %3340 = vadd.xlane.f32.xlu0 %v3339
    %v3341 = vpop.xlane.xlu0 %3340
    %v3342 = vsel %vm3305, %v3336, 0.0
    %3343 = vadd.xlane.f32.xlu0 %v3342
    %v3344 = vpop.xlane.xlu0 %3343
    %v3345 = vadd.f32 %v3341, %v3344
    %v3346 = vrot.slane %v3345, 4
    %v3347 = vadd.f32 %v3345, %v3346
    %v3348 = vrot.slane %v3347, 2
    %v3349 = vadd.f32 %v3347, %v3348
    %v3350 = vrot.slane %v3349, 1
    %v3351 = vadd.f32 %v3349, %v3350
    %v3352 = vmul.f32 %v3351, %v3325
    %vm3353 = vcmask 0
    %3354 = vst.msk [vmem:[#allocation11] sm:$0x1] %vm3353, %v3326
    %3355 = vst.msk [vmem:[#allocation13] sm:$0x1] %vm3353, %v3352
    %v3356 = vadd.f32 %v3326, %v3352
    %3357 = vst.msk [vmem:[#allocation10] sm:$0x1] %vm3353, %v3356
    // Predicated region
    $region114: #{model7_forward.1} parent=1 // pred_check
      _
    $region115: #{model7_forward.1} parent=1 // pred_check_branch
      %3359 = sbr.rel (0) target = $region117
    $region116: #{model7_forward.1} parent=1 // pred_region
      _
    $region117: #{model7_forward.1} parent=1 // pred_fallthru
      _
    // Predicated region
    $region118: #{model7_forward.1} parent=1 // pred_check
      _
    $region119: #{model7_forward.1} parent=1 // pred_check_branch
      %3361 = sbr.rel (0) target = $region121
    $region120: #{model7_forward.1} parent=1 // pred_region
      %3363 = vsyncadd [#allocation4], 0
      %s3365 = sshll.u32 [#allocation10], 4
      %s3366 = int_to_ptr.vmem [resolvable:$true] %s3365
      %s3367 = sshll.u32 %s25, 4
      %s3368 = int_to_ptr.hbm [resolvable:$true] %s3367
      %3370 = dma.vmem_to_hbm [thread:$0]  %s3366, 16, %s3368, [#allocation4]
    $region121: #{model7_forward.1} parent=1 // pred_fallthru
      _
    // Predicated region
    $region122: #{model7_forward.1} parent=1 // pred_check
      _
    $region123: #{model7_forward.1} parent=1 // pred_check_branch
      %3372 = sbr.rel (0) target = $region125
    $region124: #{model7_forward.1} parent=1 // pred_region
      %3374 = vsyncadd [#allocation12], 0
      %s3376 = sshll.u32 [#allocation11], 4
      %s3377 = int_to_ptr.vmem [resolvable:$true] %s3376
      %s3378 = sshll.u32 %s26, 4
      %s3379 = int_to_ptr.hbm [resolvable:$true] %s3378
      %3381 = dma.vmem_to_hbm [thread:$0]  %s3377, 16, %s3379, [#allocation12]
    $region125: #{model7_forward.1} parent=1 // pred_fallthru
      _
    // Predicated region
    $region126: #{model7_forward.1} parent=1 // pred_check
      _
    $region127: #{model7_forward.1} parent=1 // pred_check_branch
      %3383 = sbr.rel (0) target = $region129
    $region128: #{model7_forward.1} parent=1 // pred_region
      %3385 = vsyncadd [#allocation12], 0
      %s3387 = sshll.u32 [#allocation13], 4
      %s3388 = int_to_ptr.vmem [resolvable:$true] %s3387
      %s3389 = sshll.u32 %s27, 4
      %s3390 = int_to_ptr.hbm [resolvable:$true] %s3389
      %3392 = dma.vmem_to_hbm [thread:$0]  %s3388, 16, %s3390, [#allocation12]
    $region129: #{model7_forward.1} parent=1 // pred_fallthru
      _
    // Predicated region
    $region130: #{model7_forward.1} parent=1 // pred_check
      _
    $region131: #{model7_forward.1} parent=1 // pred_check_branch
      %3394 = sbr.rel (0) target = $region133
    $region132: #{model7_forward.1} parent=1 // pred_region
      _
    $region133: #{model7_forward.1} parent=1 // pred_fallthru
      _
    // Predicated region
    $region134: #{model7_forward.1} parent=1 // pred_check
      _
    $region135: #{model7_forward.1} parent=1 // pred_check_branch
      %3396 = sbr.rel (0) target = $region137
    $region136: #{model7_forward.1} parent=1 // pred_region
      %3398 = dma.done [#allocation4], 16
    $region137: #{model7_forward.1} parent=1 // pred_fallthru
      _
    // Predicated region
    $region138: #{model7_forward.1} parent=1 // pred_check
      _
    $region139: #{model7_forward.1} parent=1 // pred_check_branch
      %3400 = sbr.rel (0) target = $region141
    $region140: #{model7_forward.1} parent=1 // pred_region
      %3402 = dma.done [#allocation12], 16
    $region141: #{model7_forward.1} parent=1 // pred_fallthru
      _
    // Predicated region
    $region142: #{model7_forward.1} parent=1 // pred_check
      _
    $region143: #{model7_forward.1} parent=1 // pred_check_branch
      %3404 = sbr.rel (0) target = $region145
    $region144: #{model7_forward.1} parent=1 // pred_region
      %3406 = dma.done [#allocation12], 16
    $region145: #{model7_forward.1} parent=1 // pred_fallthru
      _
    %3407 = vsyncpa [#allocation3], 1
    %3408 = vsyncpa [#allocation6], 1
    %3409 = vsyncpa [#allocation9], 1
    %3410 = vsyncpa [#allocation4], 1
    %3411 = vsyncpa [#allocation12], 1

</llo_original>
